<compile_context>
chip_gen: v7x
topology: tpu7x:2x2x1
jax: 0.10.0
libtpu: 0.0.40
codegen_flags: <defaults>
</compile_context>

<pallas_src>
import numpy as np
import jax
import jax.numpy as jnp
from jax import lax
from jax.experimental import pallas as pl
from jax.experimental.pallas import tpu as pltpu

# ---------------- config (small, consistent with the module) ----------------
B = 8          # batch
L = 8          # sequence length (spline knots at t = 0..L-1)
C = 4          # input_channels
H = 32         # hidden_channels
W = 128        # width of the vector-field MLP (original Neural-CDE paper uses 128)
DT = 1.0       # rk4 step size = min grid spacing = 1.0
NUM_STEPS = L - 1


# ---------------------------- Pallas kernel ---------------------------------
def neural_cde_kernel(x0_ref, dxt_ref, wi_ref, bi_ref, w1_ref, b1_ref,
                      w2_ref, b2_ref, gsum_ref, out_ref):
    """Initial linear map + fully-unrolled RK4(3/8) CDE integration, all in VMEM.

    x0_ref  : (B, C)              f32   spline value at t=0
    dxt_ref : (L-1, 4, B, H*C)    f32   dX/dt at the 4 RK stage offsets, pre-tiled to
                                        the row-major (H, C) layout
    wi_ref  : (C, H)  f32 ; bi_ref: (B, H)   f32   initial linear layer (bias pre-bcast)
    w1_ref  : (H, W)  bf16; b1_ref: (B, W)   f32   vector-field layer 1
    w2_ref  : (W,H*C) bf16; b2_ref: (B, H*C) f32   vector-field layer 2
    gsum_ref: (H*C, H) bf16   constant 0/1 matrix summing over the C axis of (H, C)
    out_ref : (B, H)  f32     z at the final time
    """
    wi = wi_ref[...]
    bi = bi_ref[...]
    w1 = w1_ref[...]
    b1 = b1_ref[...]
    w2 = w2_ref[...]
    b2 = b2_ref[...]
    gsum = gsum_ref[...]

    # z0 = initial(X0)  (single matmul; keep f32)
    z = jnp.dot(x0_ref[...], wi, preferred_element_type=jnp.float32) + bi

    def vector_field(z_in, dx_tiled):
        # OriginalVectorField: tanh(relu(z @ W1 + b1) @ W2 + b2).view(B, H, C) @ dX/dt
        # bf16 operands on the MXU, f32 accumulation; activations / RK math stay f32.
        h1 = jnp.maximum(
            jnp.dot(z_in.astype(jnp.bfloat16), w1,
                    preferred_element_type=jnp.float32) + b1, 0.0)
        f = jnp.tanh(
            jnp.dot(h1.astype(jnp.bfloat16), w2,
                    preferred_element_type=jnp.float32) + b2)           # (B, H*C)
        g = (f * dx_tiled).astype(jnp.bfloat16)                         # (B, H*C)
        # sum over the C axis of the row-major (H, C) view, as one small MXU matmul
        return jnp.dot(g, gsum, preferred_element_type=jnp.float32)     # (B, H)

    # Fully unrolled fixed-grid RK4 (torchdiffeq 'rk4' = 3/8-rule step), 7 steps.
    for i in range(NUM_STEPS):
        dx = dxt_ref[i]                                 # (4, B, H*C), static slice
        k1 = vector_field(z, dx[0])
        k2 = vector_field(z + (DT / 3.0) * k1, dx[1])
        k3 = vector_field(z + DT * (k2 - k1 / 3.0), dx[2])
        k4 = vector_field(z + DT * (k1 - k2 + k3), dx[3])
        z = z + DT * (k1 + 3.0 * (k2 + k3) + k4) * 0.125

    out_ref[...] = z


# ------------------------------ JAX glue -------------------------------------
def hermite_backward_diff_coeffs(X, t):
    """torchcde.hermite_cubic_coefficients_with_backward_differences (NaN-free case).

    Returns per-interval derivative coefficients so that
      dX/dt(t_i + s) = b_i + two_c_i * s + three_d_i * s^2 .
    Shapes returned as (L-1, B, C).
    """
    dt = (t[1:] - t[:-1])[None, :, None]                    # (1, L-1, 1)
    x_diff = X[:, 1:, :] - X[:, :-1, :]                     # (B, L-1, C)
    derivs = x_diff / dt                                    # backward diff at point i+1
    derivs_prev = jnp.concatenate([derivs[:, :1, :], derivs[:, :-1, :]], axis=1)
    derivs_next = derivs
    b = derivs_prev
    c = (3.0 * x_diff / dt - 2.0 * derivs_prev - derivs_next) / dt
    d = (derivs_prev + derivs_next - 2.0 * x_diff / dt) / (dt * dt)
    to_k = lambda a: jnp.transpose(a, (1, 0, 2)).astype(jnp.float32)    # (L-1, B, C)
    return to_k(b), to_k(2.0 * c), to_k(3.0 * d)


def neural_cde_forward(X, params):
    wi, bi, w1, b1, w2, b2 = params
    t = jnp.arange(L, dtype=jnp.float32)
    b, two_c, three_d = hermite_backward_diff_coeffs(X, t)              # (L-1, B, C)
    x0 = X[:, 0, :].astype(jnp.float32)

    # dX/dt at the 4 RK4(3/8) stage offsets, per interval: (L-1, 4, B, C)
    # NOTE: at knot boundaries the s=1 stage uses the left interval's derivative
    # (same convention as the reference below).
    s = jnp.array([0.0, 1.0 / 3.0, 2.0 / 3.0, 1.0], jnp.float32)
    dx = (b[:, None] + two_c[:, None] * s[None, :, None, None]
          + three_d[:, None] * (s * s)[None, :, None, None])
    # Pre-tile into the row-major (H, C) layout: element h*C + c <- dx[..., c]
    dxt = jnp.tile(dx, (1, 1, 1, H)).astype(jnp.float32)                # (L-1, 4, B, H*C)

    # constant 0/1 matrix summing over C for each h of the row-major (H, C) view
    gsum = jnp.repeat(jnp.eye(H, dtype=jnp.float32), C, axis=0).astype(jnp.bfloat16)

    # hoist bias broadcasts out of the (unrolled) loop
    bi_b = jnp.broadcast_to(bi, (B, H)).astype(jnp.float32)
    b1_b = jnp.broadcast_to(b1, (B, W)).astype(jnp.float32)
    b2_b = jnp.broadcast_to(b2, (B, H * C)).astype(jnp.float32)

    inputs = (x0, dxt,
              wi.astype(jnp.float32), bi_b,
              w1.astype(jnp.bfloat16), b1_b,
              w2.astype(jnp.bfloat16), b2_b,
              gsum)

    vspec = pl.BlockSpec(memory_space=pltpu.MemorySpace.VMEM)
    return pl.pallas_call(
        neural_cde_kernel,
        out_shape=jax.ShapeDtypeStruct((B, H), jnp.float32),
        in_specs=[vspec] * len(inputs),
        out_specs=vspec,
    )(*inputs)


# ------------------------- pure-JAX reference (f32, PyTorch semantics) -------
def neural_cde_reference(X, params):
    wi, bi, w1, b1, w2, b2 = params
    t = jnp.arange(L, dtype=jnp.float32)
    b, two_c, three_d = hermite_backward_diff_coeffs(X, t)
    z = X[:, 0, :].astype(jnp.float32) @ wi + bi

    def dxdt(i, s):
        return b[i] + two_c[i] * s + three_d[i] * (s * s)

    def vf(z, dx):
        h1 = jax.nn.relu(z @ w1 + b1)
        f = jnp.tanh(h1 @ w2 + b2).reshape(B, H, C)
        return jnp.sum(f * dx[:, None, :], axis=-1)

    for i in range(L - 1):
        k1 = vf(z, dxdt(i, 0.0))
        k2 = vf(z + DT * k1 / 3.0, dxdt(i, 1.0 / 3.0))
        k3 = vf(z + DT * (k2 - k1 / 3.0), dxdt(i, 2.0 / 3.0))
        k4 = vf(z + DT * (k1 - k2 + k3), dxdt(i, 1.0))
        z = z + DT * (k1 + 3.0 * (k2 + k3) + k4) * 0.125
    return z


# --------------------------------- main --------------------------------------
def make_params(key):
    def linear(k, fan_in, fan_out):
        k1, k2 = jax.random.split(k)
        bound = 1.0 / np.sqrt(fan_in)
        wm = jax.random.uniform(k1, (fan_in, fan_out), jnp.float32, -bound, bound)
        bm = jax.random.uniform(k2, (1, fan_out), jnp.float32, -bound, bound)
        return wm, bm

    k0, k1, k2 = jax.random.split(key, 3)
    wi, bi = linear(k0, C, H)          # initial: Linear(input_channels, hidden_channels)
    w1, b1 = linear(k1, H, W)          # func.linear1: Linear(hidden, 128)
    w2, b2 = linear(k2, W, H * C)      # func.linear2: Linear(128, hidden * input)
    return wi, bi, w1, b1, w2, b2


if __name__ == "__main__":
    key = jax.random.PRNGKey(0)
    kx, kp = jax.random.split(key)
    # a smooth-ish path: cumulative sum of noise over the time axis
    X = jnp.cumsum(0.1 * jax.random.normal(kx, (B, L, C), jnp.float32), axis=1)
    params = make_params(kp)

    z_T = jax.jit(neural_cde_forward)(X, params)
    z_T = jax.block_until_ready(z_T)

    z_ref = neural_cde_reference(X, params)
    # tolerance loosened vs f32 reference to account for bf16 MXU operands in the kernel
    np.testing.assert_allclose(np.asarray(z_T), np.asarray(z_ref), rtol=1e-2, atol=1e-2)

    print("KERNEL_OK")
</pallas_src>

<mosaic_0001>
module attributes {stable_mosaic.version = 11 : i64} {
  func.func @neural_cde_kernel(%arg0: memref<8x4xf32, #tpu.memory_space<vmem>>, %arg1: memref<7x4x8x128xf32, #tpu.memory_space<vmem>>, %arg2: memref<4x32xf32, #tpu.memory_space<vmem>>, %arg3: memref<8x32xf32, #tpu.memory_space<vmem>>, %arg4: memref<32x128xbf16, #tpu.memory_space<vmem>>, %arg5: memref<8x128xf32, #tpu.memory_space<vmem>>, %arg6: memref<128x128xbf16, #tpu.memory_space<vmem>>, %arg7: memref<8x128xf32, #tpu.memory_space<vmem>>, %arg8: memref<128x32xbf16, #tpu.memory_space<vmem>>, %arg9: memref<8x32xf32, #tpu.memory_space<vmem>>) attributes {dimension_semantics = [], scalar_prefetch = 0 : i64, scratch_operands = 0 : i64, tpu.core_type = #tpu.core_type<tc>} {
    %c0 = arith.constant 0 : index
    %c0_0 = arith.constant 0 : index
    %0 = vector.load %arg2[%c0, %c0_0] : memref<4x32xf32, #tpu.memory_space<vmem>>, vector<4x32xf32>
    %c0_1 = arith.constant 0 : index
    %c0_2 = arith.constant 0 : index
    %1 = vector.load %arg3[%c0_1, %c0_2] : memref<8x32xf32, #tpu.memory_space<vmem>>, vector<8x32xf32>
    %c0_3 = arith.constant 0 : index
    %c0_4 = arith.constant 0 : index
    %2 = vector.load %arg4[%c0_3, %c0_4] : memref<32x128xbf16, #tpu.memory_space<vmem>>, vector<32x128xbf16>
    %c0_5 = arith.constant 0 : index
    %c0_6 = arith.constant 0 : index
    %3 = vector.load %arg5[%c0_5, %c0_6] : memref<8x128xf32, #tpu.memory_space<vmem>>, vector<8x128xf32>
    %c0_7 = arith.constant 0 : index
    %c0_8 = arith.constant 0 : index
    %4 = vector.load %arg6[%c0_7, %c0_8] : memref<128x128xbf16, #tpu.memory_space<vmem>>, vector<128x128xbf16>
    %c0_9 = arith.constant 0 : index
    %c0_10 = arith.constant 0 : index
    %5 = vector.load %arg7[%c0_9, %c0_10] : memref<8x128xf32, #tpu.memory_space<vmem>>, vector<8x128xf32>
    %c0_11 = arith.constant 0 : index
    %c0_12 = arith.constant 0 : index
    %6 = vector.load %arg8[%c0_11, %c0_12] : memref<128x32xbf16, #tpu.memory_space<vmem>>, vector<128x32xbf16>
    %c0_13 = arith.constant 0 : index
    %c0_14 = arith.constant 0 : index
    %7 = vector.load %arg0[%c0_13, %c0_14] : memref<8x4xf32, #tpu.memory_space<vmem>>, vector<8x4xf32>
    %cst = arith.constant dense<0.000000e+00> : vector<8x32xf32>
    %8 = tpu.matmul %7, %0, %cst {dimension_numbers = #tpu.dot_dimension_numbers<[1], [0], [0], [1], [0, 0, 1, 1], [], []>} : vector<8x4xf32>, vector<4x32xf32>, vector<8x32xf32> -> vector<8x32xf32>
    %9 = arith.addf %8, %1 : vector<8x32xf32>
    %c0_15 = arith.constant 0 : index
    %c0_16 = arith.constant 0 : index
    %c0_17 = arith.constant 0 : index
    %c0_18 = arith.constant 0 : index
    %10 = vector.load %arg1[%c0_15, %c0_16, %c0_17, %c0_18] : memref<7x4x8x128xf32, #tpu.memory_space<vmem>>, vector<1x4x8x128xf32>
    %11 = vector.shape_cast %10 : vector<1x4x8x128xf32> to vector<4x8x128xf32>
    %12 = vector.extract_strided_slice %11 {offsets = [0, 0, 0], sizes = [1, 8, 128], strides = [1, 1, 1]} : vector<4x8x128xf32> to vector<1x8x128xf32>
    %13 = vector.shape_cast %12 : vector<1x8x128xf32> to vector<8x128xf32>
    %14 = arith.truncf %9 : vector<8x32xf32> to vector<8x32xbf16>
    %cst_19 = arith.constant dense<0.000000e+00> : vector<8x128xf32>
    %15 = tpu.matmul %14, %2, %cst_19 {dimension_numbers = #tpu.dot_dimension_numbers<[1], [0], [0], [1], [0, 0, 1, 1], [], []>} : vector<8x32xbf16>, vector<32x128xbf16>, vector<8x128xf32> -> vector<8x128xf32>
    %16 = arith.addf %15, %3 : vector<8x128xf32>
    %cst_20 = arith.constant 0.000000e+00 : f32
    %17 = vector.broadcast %cst_20 : f32 to vector<8x128xf32>
    %18 = arith.maximumf %16, %17 : vector<8x128xf32>
    %19 = arith.truncf %18 : vector<8x128xf32> to vector<8x128xbf16>
    %cst_21 = arith.constant dense<0.000000e+00> : vector<8x128xf32>
    %20 = tpu.matmul %19, %4, %cst_21 {dimension_numbers = #tpu.dot_dimension_numbers<[1], [0], [0], [1], [0, 0, 1, 1], [], []>} : vector<8x128xbf16>, vector<128x128xbf16>, vector<8x128xf32> -> vector<8x128xf32>
    %21 = arith.addf %20, %5 : vector<8x128xf32>
    %22 = math.tanh %21 : vector<8x128xf32>
    %23 = arith.mulf %22, %13 : vector<8x128xf32>
    %24 = arith.truncf %23 : vector<8x128xf32> to vector<8x128xbf16>
    %cst_22 = arith.constant dense<0.000000e+00> : vector<8x32xf32>
    %25 = tpu.matmul %24, %6, %cst_22 {dimension_numbers = #tpu.dot_dimension_numbers<[1], [0], [0], [1], [0, 0, 1, 1], [], []>} : vector<8x128xbf16>, vector<128x32xbf16>, vector<8x32xf32> -> vector<8x32xf32>
    %cst_23 = arith.constant 0.333333343 : f32
    %26 = vector.broadcast %cst_23 : f32 to vector<8x32xf32>
    %27 = arith.mulf %26, %25 : vector<8x32xf32>
    %28 = arith.addf %9, %27 : vector<8x32xf32>
    %29 = vector.extract_strided_slice %11 {offsets = [1, 0, 0], sizes = [1, 8, 128], strides = [1, 1, 1]} : vector<4x8x128xf32> to vector<1x8x128xf32>
    %30 = vector.shape_cast %29 : vector<1x8x128xf32> to vector<8x128xf32>
    %31 = arith.truncf %28 : vector<8x32xf32> to vector<8x32xbf16>
    %cst_24 = arith.constant dense<0.000000e+00> : vector<8x128xf32>
    %32 = tpu.matmul %31, %2, %cst_24 {dimension_numbers = #tpu.dot_dimension_numbers<[1], [0], [0], [1], [0, 0, 1, 1], [], []>} : vector<8x32xbf16>, vector<32x128xbf16>, vector<8x128xf32> -> vector<8x128xf32>
    %33 = arith.addf %32, %3 : vector<8x128xf32>
    %cst_25 = arith.constant 0.000000e+00 : f32
    %34 = vector.broadcast %cst_25 : f32 to vector<8x128xf32>
    %35 = arith.maximumf %33, %34 : vector<8x128xf32>
    %36 = arith.truncf %35 : vector<8x128xf32> to vector<8x128xbf16>
    %cst_26 = arith.constant dense<0.000000e+00> : vector<8x128xf32>
    %37 = tpu.matmul %36, %4, %cst_26 {dimension_numbers = #tpu.dot_dimension_numbers<[1], [0], [0], [1], [0, 0, 1, 1], [], []>} : vector<8x128xbf16>, vector<128x128xbf16>, vector<8x128xf32> -> vector<8x128xf32>
    %38 = arith.addf %37, %5 : vector<8x128xf32>
    %39 = math.tanh %38 : vector<8x128xf32>
    %40 = arith.mulf %39, %30 : vector<8x128xf32>
    %41 = arith.truncf %40 : vector<8x128xf32> to vector<8x128xbf16>
    %cst_27 = arith.constant dense<0.000000e+00> : vector<8x32xf32>
    %42 = tpu.matmul %41, %6, %cst_27 {dimension_numbers = #tpu.dot_dimension_numbers<[1], [0], [0], [1], [0, 0, 1, 1], [], []>} : vector<8x128xbf16>, vector<128x32xbf16>, vector<8x32xf32> -> vector<8x32xf32>
    %cst_28 = arith.constant 3.000000e+00 : f32
    %43 = vector.broadcast %cst_28 : f32 to vector<8x32xf32>
    %44 = arith.divf %25, %43 : vector<8x32xf32>
    %45 = arith.subf %42, %44 : vector<8x32xf32>
    %cst_29 = arith.constant 1.000000e+00 : f32
    %46 = vector.broadcast %cst_29 : f32 to vector<8x32xf32>
    %47 = arith.mulf %46, %45 : vector<8x32xf32>
    %48 = arith.addf %9, %47 : vector<8x32xf32>
    %49 = vector.extract_strided_slice %11 {offsets = [2, 0, 0], sizes = [1, 8, 128], strides = [1, 1, 1]} : vector<4x8x128xf32> to vector<1x8x128xf32>
    %50 = vector.shape_cast %49 : vector<1x8x128xf32> to vector<8x128xf32>
    %51 = arith.truncf %48 : vector<8x32xf32> to vector<8x32xbf16>
    %cst_30 = arith.constant dense<0.000000e+00> : vector<8x128xf32>
    %52 = tpu.matmul %51, %2, %cst_30 {dimension_numbers = #tpu.dot_dimension_numbers<[1], [0], [0], [1], [0, 0, 1, 1], [], []>} : vector<8x32xbf16>, vector<32x128xbf16>, vector<8x128xf32> -> vector<8x128xf32>
    %53 = arith.addf %52, %3 : vector<8x128xf32>
    %cst_31 = arith.constant 0.000000e+00 : f32
    %54 = vector.broadcast %cst_31 : f32 to vector<8x128xf32>
    %55 = arith.maximumf %53, %54 : vector<8x128xf32>
    %56 = arith.truncf %55 : vector<8x128xf32> to vector<8x128xbf16>
    %cst_32 = arith.constant dense<0.000000e+00> : vector<8x128xf32>
    %57 = tpu.matmul %56, %4, %cst_32 {dimension_numbers = #tpu.dot_dimension_numbers<[1], [0], [0], [1], [0, 0, 1, 1], [], []>} : vector<8x128xbf16>, vector<128x128xbf16>, vector<8x128xf32> -> vector<8x128xf32>
    %58 = arith.addf %57, %5 : vector<8x128xf32>
    %59 = math.tanh %58 : vector<8x128xf32>
    %60 = arith.mulf %59, %50 : vector<8x128xf32>
    %61 = arith.truncf %60 : vector<8x128xf32> to vector<8x128xbf16>
    %cst_33 = arith.constant dense<0.000000e+00> : vector<8x32xf32>
    %62 = tpu.matmul %61, %6, %cst_33 {dimension_numbers = #tpu.dot_dimension_numbers<[1], [0], [0], [1], [0, 0, 1, 1], [], []>} : vector<8x128xbf16>, vector<128x32xbf16>, vector<8x32xf32> -> vector<8x32xf32>
    %63 = arith.subf %25, %42 : vector<8x32xf32>
    %64 = arith.addf %63, %62 : vector<8x32xf32>
    %cst_34 = arith.constant 1.000000e+00 : f32
    %65 = vector.broadcast %cst_34 : f32 to vector<8x32xf32>
    %66 = arith.mulf %65, %64 : vector<8x32xf32>
    %67 = arith.addf %9, %66 : vector<8x32xf32>
    %68 = vector.extract_strided_slice %11 {offsets = [3, 0, 0], sizes = [1, 8, 128], strides = [1, 1, 1]} : vector<4x8x128xf32> to vector<1x8x128xf32>
    %69 = vector.shape_cast %68 : vector<1x8x128xf32> to vector<8x128xf32>
    %70 = arith.truncf %67 : vector<8x32xf32> to vector<8x32xbf16>
    %cst_35 = arith.constant dense<0.000000e+00> : vector<8x128xf32>
    %71 = tpu.matmul %70, %2, %cst_35 {dimension_numbers = #tpu.dot_dimension_numbers<[1], [0], [0], [1], [0, 0, 1, 1], [], []>} : vector<8x32xbf16>, vector<32x128xbf16>, vector<8x128xf32> -> vector<8x128xf32>
    %72 = arith.addf %71, %3 : vector<8x128xf32>
    %cst_36 = arith.constant 0.000000e+00 : f32
    %73 = vector.broadcast %cst_36 : f32 to vector<8x128xf32>
    %74 = arith.maximumf %72, %73 : vector<8x128xf32>
    %75 = arith.truncf %74 : vector<8x128xf32> to vector<8x128xbf16>
    %cst_37 = arith.constant dense<0.000000e+00> : vector<8x128xf32>
    %76 = tpu.matmul %75, %4, %cst_37 {dimension_numbers = #tpu.dot_dimension_numbers<[1], [0], [0], [1], [0, 0, 1, 1], [], []>} : vector<8x128xbf16>, vector<128x128xbf16>, vector<8x128xf32> -> vector<8x128xf32>
    %77 = arith.addf %76, %5 : vector<8x128xf32>
    %78 = math.tanh %77 : vector<8x128xf32>
    %79 = arith.mulf %78, %69 : vector<8x128xf32>
    %80 = arith.truncf %79 : vector<8x128xf32> to vector<8x128xbf16>
    %cst_38 = arith.constant dense<0.000000e+00> : vector<8x32xf32>
    %81 = tpu.matmul %80, %6, %cst_38 {dimension_numbers = #tpu.dot_dimension_numbers<[1], [0], [0], [1], [0, 0, 1, 1], [], []>} : vector<8x128xbf16>, vector<128x32xbf16>, vector<8x32xf32> -> vector<8x32xf32>
    %82 = arith.addf %42, %62 : vector<8x32xf32>
    %cst_39 = arith.constant 3.000000e+00 : f32
    %83 = vector.broadcast %cst_39 : f32 to vector<8x32xf32>
    %84 = arith.mulf %83, %82 : vector<8x32xf32>
    %85 = arith.addf %25, %84 : vector<8x32xf32>
    %86 = arith.addf %85, %81 : vector<8x32xf32>
    %cst_40 = arith.constant 1.000000e+00 : f32
    %87 = vector.broadcast %cst_40 : f32 to vector<8x32xf32>
    %88 = arith.mulf %87, %86 : vector<8x32xf32>
    %cst_41 = arith.constant 1.250000e-01 : f32
    %89 = vector.broadcast %cst_41 : f32 to vector<8x32xf32>
    %90 = arith.mulf %88, %89 : vector<8x32xf32>
    %91 = arith.addf %9, %90 : vector<8x32xf32>
    %c1 = arith.constant 1 : index
    %c0_42 = arith.constant 0 : index
    %c0_43 = arith.constant 0 : index
    %c0_44 = arith.constant 0 : index
    %92 = vector.load %arg1[%c1, %c0_42, %c0_43, %c0_44] : memref<7x4x8x128xf32, #tpu.memory_space<vmem>>, vector<1x4x8x128xf32>
    %93 = vector.shape_cast %92 : vector<1x4x8x128xf32> to vector<4x8x128xf32>
    %94 = vector.extract_strided_slice %93 {offsets = [0, 0, 0], sizes = [1, 8, 128], strides = [1, 1, 1]} : vector<4x8x128xf32> to vector<1x8x128xf32>
    %95 = vector.shape_cast %94 : vector<1x8x128xf32> to vector<8x128xf32>
    %96 = arith.truncf %91 : vector<8x32xf32> to vector<8x32xbf16>
    %cst_45 = arith.constant dense<0.000000e+00> : vector<8x128xf32>
    %97 = tpu.matmul %96, %2, %cst_45 {dimension_numbers = #tpu.dot_dimension_numbers<[1], [0], [0], [1], [0, 0, 1, 1], [], []>} : vector<8x32xbf16>, vector<32x128xbf16>, vector<8x128xf32> -> vector<8x128xf32>
    %98 = arith.addf %97, %3 : vector<8x128xf32>
    %cst_46 = arith.constant 0.000000e+00 : f32
    %99 = vector.broadcast %cst_46 : f32 to vector<8x128xf32>
    %100 = arith.maximumf %98, %99 : vector<8x128xf32>
    %101 = arith.truncf %100 : vector<8x128xf32> to vector<8x128xbf16>
    %cst_47 = arith.constant dense<0.000000e+00> : vector<8x128xf32>
    %102 = tpu.matmul %101, %4, %cst_47 {dimension_numbers = #tpu.dot_dimension_numbers<[1], [0], [0], [1], [0, 0, 1, 1], [], []>} : vector<8x128xbf16>, vector<128x128xbf16>, vector<8x128xf32> -> vector<8x128xf32>
    %103 = arith.addf %102, %5 : vector<8x128xf32>
    %104 = math.tanh %103 : vector<8x128xf32>
    %105 = arith.mulf %104, %95 : vector<8x128xf32>
    %106 = arith.truncf %105 : vector<8x128xf32> to vector<8x128xbf16>
    %cst_48 = arith.constant dense<0.000000e+00> : vector<8x32xf32>
    %107 = tpu.matmul %106, %6, %cst_48 {dimension_numbers = #tpu.dot_dimension_numbers<[1], [0], [0], [1], [0, 0, 1, 1], [], []>} : vector<8x128xbf16>, vector<128x32xbf16>, vector<8x32xf32> -> vector<8x32xf32>
    %cst_49 = arith.constant 0.333333343 : f32
    %108 = vector.broadcast %cst_49 : f32 to vector<8x32xf32>
    %109 = arith.mulf %108, %107 : vector<8x32xf32>
    %110 = arith.addf %91, %109 : vector<8x32xf32>
    %111 = vector.extract_strided_slice %93 {offsets = [1, 0, 0], sizes = [1, 8, 128], strides = [1, 1, 1]} : vector<4x8x128xf32> to vector<1x8x128xf32>
    %112 = vector.shape_cast %111 : vector<1x8x128xf32> to vector<8x128xf32>
    %113 = arith.truncf %110 : vector<8x32xf32> to vector<8x32xbf16>
    %cst_50 = arith.constant dense<0.000000e+00> : vector<8x128xf32>
    %114 = tpu.matmul %113, %2, %cst_50 {dimension_numbers = #tpu.dot_dimension_numbers<[1], [0], [0], [1], [0, 0, 1, 1], [], []>} : vector<8x32xbf16>, vector<32x128xbf16>, vector<8x128xf32> -> vector<8x128xf32>
    %115 = arith.addf %114, %3 : vector<8x128xf32>
    %cst_51 = arith.constant 0.000000e+00 : f32
    %116 = vector.broadcast %cst_51 : f32 to vector<8x128xf32>
    %117 = arith.maximumf %115, %116 : vector<8x128xf32>
    %118 = arith.truncf %117 : vector<8x128xf32> to vector<8x128xbf16>
    %cst_52 = arith.constant dense<0.000000e+00> : vector<8x128xf32>
    %119 = tpu.matmul %118, %4, %cst_52 {dimension_numbers = #tpu.dot_dimension_numbers<[1], [0], [0], [1], [0, 0, 1, 1], [], []>} : vector<8x128xbf16>, vector<128x128xbf16>, vector<8x128xf32> -> vector<8x128xf32>
    %120 = arith.addf %119, %5 : vector<8x128xf32>
    %121 = math.tanh %120 : vector<8x128xf32>
    %122 = arith.mulf %121, %112 : vector<8x128xf32>
    %123 = arith.truncf %122 : vector<8x128xf32> to vector<8x128xbf16>
    %cst_53 = arith.constant dense<0.000000e+00> : vector<8x32xf32>
    %124 = tpu.matmul %123, %6, %cst_53 {dimension_numbers = #tpu.dot_dimension_numbers<[1], [0], [0], [1], [0, 0, 1, 1], [], []>} : vector<8x128xbf16>, vector<128x32xbf16>, vector<8x32xf32> -> vector<8x32xf32>
    %cst_54 = arith.constant 3.000000e+00 : f32
    %125 = vector.broadcast %cst_54 : f32 to vector<8x32xf32>
    %126 = arith.divf %107, %125 : vector<8x32xf32>
    %127 = arith.subf %124, %126 : vector<8x32xf32>
    %cst_55 = arith.constant 1.000000e+00 : f32
    %128 = vector.broadcast %cst_55 : f32 to vector<8x32xf32>
    %129 = arith.mulf %128, %127 : vector<8x32xf32>
    %130 = arith.addf %91, %129 : vector<8x32xf32>
    %131 = vector.extract_strided_slice %93 {offsets = [2, 0, 0], sizes = [1, 8, 128], strides = [1, 1, 1]} : vector<4x8x128xf32> to vector<1x8x128xf32>
    %132 = vector.shape_cast %131 : vector<1x8x128xf32> to vector<8x128xf32>
    %133 = arith.truncf %130 : vector<8x32xf32> to vector<8x32xbf16>
    %cst_56 = arith.constant dense<0.000000e+00> : vector<8x128xf32>
    %134 = tpu.matmul %133, %2, %cst_56 {dimension_numbers = #tpu.dot_dimension_numbers<[1], [0], [0], [1], [0, 0, 1, 1], [], []>} : vector<8x32xbf16>, vector<32x128xbf16>, vector<8x128xf32> -> vector<8x128xf32>
    %135 = arith.addf %134, %3 : vector<8x128xf32>
    %cst_57 = arith.constant 0.000000e+00 : f32
    %136 = vector.broadcast %cst_57 : f32 to vector<8x128xf32>
    %137 = arith.maximumf %135, %136 : vector<8x128xf32>
    %138 = arith.truncf %137 : vector<8x128xf32> to vector<8x128xbf16>
    %cst_58 = arith.constant dense<0.000000e+00> : vector<8x128xf32>
    %139 = tpu.matmul %138, %4, %cst_58 {dimension_numbers = #tpu.dot_dimension_numbers<[1], [0], [0], [1], [0, 0, 1, 1], [], []>} : vector<8x128xbf16>, vector<128x128xbf16>, vector<8x128xf32> -> vector<8x128xf32>
    %140 = arith.addf %139, %5 : vector<8x128xf32>
    %141 = math.tanh %140 : vector<8x128xf32>
    %142 = arith.mulf %141, %132 : vector<8x128xf32>
    %143 = arith.truncf %142 : vector<8x128xf32> to vector<8x128xbf16>
    %cst_59 = arith.constant dense<0.000000e+00> : vector<8x32xf32>
    %144 = tpu.matmul %143, %6, %cst_59 {dimension_numbers = #tpu.dot_dimension_numbers<[1], [0], [0], [1], [0, 0, 1, 1], [], []>} : vector<8x128xbf16>, vector<128x32xbf16>, vector<8x32xf32> -> vector<8x32xf32>
    %145 = arith.subf %107, %124 : vector<8x32xf32>
    %146 = arith.addf %145, %144 : vector<8x32xf32>
    %cst_60 = arith.constant 1.000000e+00 : f32
    %147 = vector.broadcast %cst_60 : f32 to vector<8x32xf32>
    %148 = arith.mulf %147, %146 : vector<8x32xf32>
    %149 = arith.addf %91, %148 : vector<8x32xf32>
    %150 = vector.extract_strided_slice %93 {offsets = [3, 0, 0], sizes = [1, 8, 128], strides = [1, 1, 1]} : vector<4x8x128xf32> to vector<1x8x128xf32>
    %151 = vector.shape_cast %150 : vector<1x8x128xf32> to vector<8x128xf32>
    %152 = arith.truncf %149 : vector<8x32xf32> to vector<8x32xbf16>
    %cst_61 = arith.constant dense<0.000000e+00> : vector<8x128xf32>
    %153 = tpu.matmul %152, %2, %cst_61 {dimension_numbers = #tpu.dot_dimension_numbers<[1], [0], [0], [1], [0, 0, 1, 1], [], []>} : vector<8x32xbf16>, vector<32x128xbf16>, vector<8x128xf32> -> vector<8x128xf32>
    %154 = arith.addf %153, %3 : vector<8x128xf32>
    %cst_62 = arith.constant 0.000000e+00 : f32
    %155 = vector.broadcast %cst_62 : f32 to vector<8x128xf32>
    %156 = arith.maximumf %154, %155 : vector<8x128xf32>
    %157 = arith.truncf %156 : vector<8x128xf32> to vector<8x128xbf16>
    %cst_63 = arith.constant dense<0.000000e+00> : vector<8x128xf32>
    %158 = tpu.matmul %157, %4, %cst_63 {dimension_numbers = #tpu.dot_dimension_numbers<[1], [0], [0], [1], [0, 0, 1, 1], [], []>} : vector<8x128xbf16>, vector<128x128xbf16>, vector<8x128xf32> -> vector<8x128xf32>
    %159 = arith.addf %158, %5 : vector<8x128xf32>
    %160 = math.tanh %159 : vector<8x128xf32>
    %161 = arith.mulf %160, %151 : vector<8x128xf32>
    %162 = arith.truncf %161 : vector<8x128xf32> to vector<8x128xbf16>
    %cst_64 = arith.constant dense<0.000000e+00> : vector<8x32xf32>
    %163 = tpu.matmul %162, %6, %cst_64 {dimension_numbers = #tpu.dot_dimension_numbers<[1], [0], [0], [1], [0, 0, 1, 1], [], []>} : vector<8x128xbf16>, vector<128x32xbf16>, vector<8x32xf32> -> vector<8x32xf32>
    %164 = arith.addf %124, %144 : vector<8x32xf32>
    %cst_65 = arith.constant 3.000000e+00 : f32
    %165 = vector.broadcast %cst_65 : f32 to vector<8x32xf32>
    %166 = arith.mulf %165, %164 : vector<8x32xf32>
    %167 = arith.addf %107, %166 : vector<8x32xf32>
    %168 = arith.addf %167, %163 : vector<8x32xf32>
    %cst_66 = arith.constant 1.000000e+00 : f32
    %169 = vector.broadcast %cst_66 : f32 to vector<8x32xf32>
    %170 = arith.mulf %169, %168 : vector<8x32xf32>
    %cst_67 = arith.constant 1.250000e-01 : f32
    %171 = vector.broadcast %cst_67 : f32 to vector<8x32xf32>
    %172 = arith.mulf %170, %171 : vector<8x32xf32>
    %173 = arith.addf %91, %172 : vector<8x32xf32>
    %c2 = arith.constant 2 : index
    %c0_68 = arith.constant 0 : index
    %c0_69 = arith.constant 0 : index
    %c0_70 = arith.constant 0 : index
    %174 = vector.load %arg1[%c2, %c0_68, %c0_69, %c0_70] : memref<7x4x8x128xf32, #tpu.memory_space<vmem>>, vector<1x4x8x128xf32>
    %175 = vector.shape_cast %174 : vector<1x4x8x128xf32> to vector<4x8x128xf32>
    %176 = vector.extract_strided_slice %175 {offsets = [0, 0, 0], sizes = [1, 8, 128], strides = [1, 1, 1]} : vector<4x8x128xf32> to vector<1x8x128xf32>
    %177 = vector.shape_cast %176 : vector<1x8x128xf32> to vector<8x128xf32>
    %178 = arith.truncf %173 : vector<8x32xf32> to vector<8x32xbf16>
    %cst_71 = arith.constant dense<0.000000e+00> : vector<8x128xf32>
    %179 = tpu.matmul %178, %2, %cst_71 {dimension_numbers = #tpu.dot_dimension_numbers<[1], [0], [0], [1], [0, 0, 1, 1], [], []>} : vector<8x32xbf16>, vector<32x128xbf16>, vector<8x128xf32> -> vector<8x128xf32>
    %180 = arith.addf %179, %3 : vector<8x128xf32>
    %cst_72 = arith.constant 0.000000e+00 : f32
    %181 = vector.broadcast %cst_72 : f32 to vector<8x128xf32>
    %182 = arith.maximumf %180, %181 : vector<8x128xf32>
    %183 = arith.truncf %182 : vector<8x128xf32> to vector<8x128xbf16>
    %cst_73 = arith.constant dense<0.000000e+00> : vector<8x128xf32>
    %184 = tpu.matmul %183, %4, %cst_73 {dimension_numbers = #tpu.dot_dimension_numbers<[1], [0], [0], [1], [0, 0, 1, 1], [], []>} : vector<8x128xbf16>, vector<128x128xbf16>, vector<8x128xf32> -> vector<8x128xf32>
    %185 = arith.addf %184, %5 : vector<8x128xf32>
    %186 = math.tanh %185 : vector<8x128xf32>
    %187 = arith.mulf %186, %177 : vector<8x128xf32>
    %188 = arith.truncf %187 : vector<8x128xf32> to vector<8x128xbf16>
    %cst_74 = arith.constant dense<0.000000e+00> : vector<8x32xf32>
    %189 = tpu.matmul %188, %6, %cst_74 {dimension_numbers = #tpu.dot_dimension_numbers<[1], [0], [0], [1], [0, 0, 1, 1], [], []>} : vector<8x128xbf16>, vector<128x32xbf16>, vector<8x32xf32> -> vector<8x32xf32>
    %cst_75 = arith.constant 0.333333343 : f32
    %190 = vector.broadcast %cst_75 : f32 to vector<8x32xf32>
    %191 = arith.mulf %190, %189 : vector<8x32xf32>
    %192 = arith.addf %173, %191 : vector<8x32xf32>
    %193 = vector.extract_strided_slice %175 {offsets = [1, 0, 0], sizes = [1, 8, 128], strides = [1, 1, 1]} : vector<4x8x128xf32> to vector<1x8x128xf32>
    %194 = vector.shape_cast %193 : vector<1x8x128xf32> to vector<8x128xf32>
    %195 = arith.truncf %192 : vector<8x32xf32> to vector<8x32xbf16>
    %cst_76 = arith.constant dense<0.000000e+00> : vector<8x128xf32>
    %196 = tpu.matmul %195, %2, %cst_76 {dimension_numbers = #tpu.dot_dimension_numbers<[1], [0], [0], [1], [0, 0, 1, 1], [], []>} : vector<8x32xbf16>, vector<32x128xbf16>, vector<8x128xf32> -> vector<8x128xf32>
    %197 = arith.addf %196, %3 : vector<8x128xf32>
    %cst_77 = arith.constant 0.000000e+00 : f32
    %198 = vector.broadcast %cst_77 : f32 to vector<8x128xf32>
    %199 = arith.maximumf %197, %198 : vector<8x128xf32>
    %200 = arith.truncf %199 : vector<8x128xf32> to vector<8x128xbf16>
    %cst_78 = arith.constant dense<0.000000e+00> : vector<8x128xf32>
    %201 = tpu.matmul %200, %4, %cst_78 {dimension_numbers = #tpu.dot_dimension_numbers<[1], [0], [0], [1], [0, 0, 1, 1], [], []>} : vector<8x128xbf16>, vector<128x128xbf16>, vector<8x128xf32> -> vector<8x128xf32>
    %202 = arith.addf %201, %5 : vector<8x128xf32>
    %203 = math.tanh %202 : vector<8x128xf32>
    %204 = arith.mulf %203, %194 : vector<8x128xf32>
    %205 = arith.truncf %204 : vector<8x128xf32> to vector<8x128xbf16>
    %cst_79 = arith.constant dense<0.000000e+00> : vector<8x32xf32>
    %206 = tpu.matmul %205, %6, %cst_79 {dimension_numbers = #tpu.dot_dimension_numbers<[1], [0], [0], [1], [0, 0, 1, 1], [], []>} : vector<8x128xbf16>, vector<128x32xbf16>, vector<8x32xf32> -> vector<8x32xf32>
    %cst_80 = arith.constant 3.000000e+00 : f32
    %207 = vector.broadcast %cst_80 : f32 to vector<8x32xf32>
    %208 = arith.divf %189, %207 : vector<8x32xf32>
    %209 = arith.subf %206, %208 : vector<8x32xf32>
    %cst_81 = arith.constant 1.000000e+00 : f32
    %210 = vector.broadcast %cst_81 : f32 to vector<8x32xf32>
    %211 = arith.mulf %210, %209 : vector<8x32xf32>
    %212 = arith.addf %173, %211 : vector<8x32xf32>
    %213 = vector.extract_strided_slice %175 {offsets = [2, 0, 0], sizes = [1, 8, 128], strides = [1, 1, 1]} : vector<4x8x128xf32> to vector<1x8x128xf32>
    %214 = vector.shape_cast %213 : vector<1x8x128xf32> to vector<8x128xf32>
    %215 = arith.truncf %212 : vector<8x32xf32> to vector<8x32xbf16>
    %cst_82 = arith.constant dense<0.000000e+00> : vector<8x128xf32>
    %216 = tpu.matmul %215, %2, %cst_82 {dimension_numbers = #tpu.dot_dimension_numbers<[1], [0], [0], [1], [0, 0, 1, 1], [], []>} : vector<8x32xbf16>, vector<32x128xbf16>, vector<8x128xf32> -> vector<8x128xf32>
    %217 = arith.addf %216, %3 : vector<8x128xf32>
    %cst_83 = arith.constant 0.000000e+00 : f32
    %218 = vector.broadcast %cst_83 : f32 to vector<8x128xf32>
    %219 = arith.maximumf %217, %218 : vector<8x128xf32>
    %220 = arith.truncf %219 : vector<8x128xf32> to vector<8x128xbf16>
    %cst_84 = arith.constant dense<0.000000e+00> : vector<8x128xf32>
    %221 = tpu.matmul %220, %4, %cst_84 {dimension_numbers = #tpu.dot_dimension_numbers<[1], [0], [0], [1], [0, 0, 1, 1], [], []>} : vector<8x128xbf16>, vector<128x128xbf16>, vector<8x128xf32> -> vector<8x128xf32>
    %222 = arith.addf %221, %5 : vector<8x128xf32>
    %223 = math.tanh %222 : vector<8x128xf32>
    %224 = arith.mulf %223, %214 : vector<8x128xf32>
    %225 = arith.truncf %224 : vector<8x128xf32> to vector<8x128xbf16>
    %cst_85 = arith.constant dense<0.000000e+00> : vector<8x32xf32>
    %226 = tpu.matmul %225, %6, %cst_85 {dimension_numbers = #tpu.dot_dimension_numbers<[1], [0], [0], [1], [0, 0, 1, 1], [], []>} : vector<8x128xbf16>, vector<128x32xbf16>, vector<8x32xf32> -> vector<8x32xf32>
    %227 = arith.subf %189, %206 : vector<8x32xf32>
    %228 = arith.addf %227, %226 : vector<8x32xf32>
    %cst_86 = arith.constant 1.000000e+00 : f32
    %229 = vector.broadcast %cst_86 : f32 to vector<8x32xf32>
    %230 = arith.mulf %229, %228 : vector<8x32xf32>
    %231 = arith.addf %173, %230 : vector<8x32xf32>
    %232 = vector.extract_strided_slice %175 {offsets = [3, 0, 0], sizes = [1, 8, 128], strides = [1, 1, 1]} : vector<4x8x128xf32> to vector<1x8x128xf32>
    %233 = vector.shape_cast %232 : vector<1x8x128xf32> to vector<8x128xf32>
    %234 = arith.truncf %231 : vector<8x32xf32> to vector<8x32xbf16>
    %cst_87 = arith.constant dense<0.000000e+00> : vector<8x128xf32>
    %235 = tpu.matmul %234, %2, %cst_87 {dimension_numbers = #tpu.dot_dimension_numbers<[1], [0], [0], [1], [0, 0, 1, 1], [], []>} : vector<8x32xbf16>, vector<32x128xbf16>, vector<8x128xf32> -> vector<8x128xf32>
    %236 = arith.addf %235, %3 : vector<8x128xf32>
    %cst_88 = arith.constant 0.000000e+00 : f32
    %237 = vector.broadcast %cst_88 : f32 to vector<8x128xf32>
    %238 = arith.maximumf %236, %237 : vector<8x128xf32>
    %239 = arith.truncf %238 : vector<8x128xf32> to vector<8x128xbf16>
    %cst_89 = arith.constant dense<0.000000e+00> : vector<8x128xf32>
    %240 = tpu.matmul %239, %4, %cst_89 {dimension_numbers = #tpu.dot_dimension_numbers<[1], [0], [0], [1], [0, 0, 1, 1], [], []>} : vector<8x128xbf16>, vector<128x128xbf16>, vector<8x128xf32> -> vector<8x128xf32>
    %241 = arith.addf %240, %5 : vector<8x128xf32>
    %242 = math.tanh %241 : vector<8x128xf32>
    %243 = arith.mulf %242, %233 : vector<8x128xf32>
    %244 = arith.truncf %243 : vector<8x128xf32> to vector<8x128xbf16>
    %cst_90 = arith.constant dense<0.000000e+00> : vector<8x32xf32>
    %245 = tpu.matmul %244, %6, %cst_90 {dimension_numbers = #tpu.dot_dimension_numbers<[1], [0], [0], [1], [0, 0, 1, 1], [], []>} : vector<8x128xbf16>, vector<128x32xbf16>, vector<8x32xf32> -> vector<8x32xf32>
    %246 = arith.addf %206, %226 : vector<8x32xf32>
    %cst_91 = arith.constant 3.000000e+00 : f32
    %247 = vector.broadcast %cst_91 : f32 to vector<8x32xf32>
    %248 = arith.mulf %247, %246 : vector<8x32xf32>
    %249 = arith.addf %189, %248 : vector<8x32xf32>
    %250 = arith.addf %249, %245 : vector<8x32xf32>
    %cst_92 = arith.constant 1.000000e+00 : f32
    %251 = vector.broadcast %cst_92 : f32 to vector<8x32xf32>
    %252 = arith.mulf %251, %250 : vector<8x32xf32>
    %cst_93 = arith.constant 1.250000e-01 : f32
    %253 = vector.broadcast %cst_93 : f32 to vector<8x32xf32>
    %254 = arith.mulf %252, %253 : vector<8x32xf32>
    %255 = arith.addf %173, %254 : vector<8x32xf32>
    %c3 = arith.constant 3 : index
    %c0_94 = arith.constant 0 : index
    %c0_95 = arith.constant 0 : index
    %c0_96 = arith.constant 0 : index
    %256 = vector.load %arg1[%c3, %c0_94, %c0_95, %c0_96] : memref<7x4x8x128xf32, #tpu.memory_space<vmem>>, vector<1x4x8x128xf32>
    %257 = vector.shape_cast %256 : vector<1x4x8x128xf32> to vector<4x8x128xf32>
    %258 = vector.extract_strided_slice %257 {offsets = [0, 0, 0], sizes = [1, 8, 128], strides = [1, 1, 1]} : vector<4x8x128xf32> to vector<1x8x128xf32>
    %259 = vector.shape_cast %258 : vector<1x8x128xf32> to vector<8x128xf32>
    %260 = arith.truncf %255 : vector<8x32xf32> to vector<8x32xbf16>
    %cst_97 = arith.constant dense<0.000000e+00> : vector<8x128xf32>
    %261 = tpu.matmul %260, %2, %cst_97 {dimension_numbers = #tpu.dot_dimension_numbers<[1], [0], [0], [1], [0, 0, 1, 1], [], []>} : vector<8x32xbf16>, vector<32x128xbf16>, vector<8x128xf32> -> vector<8x128xf32>
    %262 = arith.addf %261, %3 : vector<8x128xf32>
    %cst_98 = arith.constant 0.000000e+00 : f32
    %263 = vector.broadcast %cst_98 : f32 to vector<8x128xf32>
    %264 = arith.maximumf %262, %263 : vector<8x128xf32>
    %265 = arith.truncf %264 : vector<8x128xf32> to vector<8x128xbf16>
    %cst_99 = arith.constant dense<0.000000e+00> : vector<8x128xf32>
    %266 = tpu.matmul %265, %4, %cst_99 {dimension_numbers = #tpu.dot_dimension_numbers<[1], [0], [0], [1], [0, 0, 1, 1], [], []>} : vector<8x128xbf16>, vector<128x128xbf16>, vector<8x128xf32> -> vector<8x128xf32>
    %267 = arith.addf %266, %5 : vector<8x128xf32>
    %268 = math.tanh %267 : vector<8x128xf32>
    %269 = arith.mulf %268, %259 : vector<8x128xf32>
    %270 = arith.truncf %269 : vector<8x128xf32> to vector<8x128xbf16>
    %cst_100 = arith.constant dense<0.000000e+00> : vector<8x32xf32>
    %271 = tpu.matmul %270, %6, %cst_100 {dimension_numbers = #tpu.dot_dimension_numbers<[1], [0], [0], [1], [0, 0, 1, 1], [], []>} : vector<8x128xbf16>, vector<128x32xbf16>, vector<8x32xf32> -> vector<8x32xf32>
    %cst_101 = arith.constant 0.333333343 : f32
    %272 = vector.broadcast %cst_101 : f32 to vector<8x32xf32>
    %273 = arith.mulf %272, %271 : vector<8x32xf32>
    %274 = arith.addf %255, %273 : vector<8x32xf32>
    %275 = vector.extract_strided_slice %257 {offsets = [1, 0, 0], sizes = [1, 8, 128], strides = [1, 1, 1]} : vector<4x8x128xf32> to vector<1x8x128xf32>
    %276 = vector.shape_cast %275 : vector<1x8x128xf32> to vector<8x128xf32>
    %277 = arith.truncf %274 : vector<8x32xf32> to vector<8x32xbf16>
    %cst_102 = arith.constant dense<0.000000e+00> : vector<8x128xf32>
    %278 = tpu.matmul %277, %2, %cst_102 {dimension_numbers = #tpu.dot_dimension_numbers<[1], [0], [0], [1], [0, 0, 1, 1], [], []>} : vector<8x32xbf16>, vector<32x128xbf16>, vector<8x128xf32> -> vector<8x128xf32>
    %279 = arith.addf %278, %3 : vector<8x128xf32>
    %cst_103 = arith.constant 0.000000e+00 : f32
    %280 = vector.broadcast %cst_103 : f32 to vector<8x128xf32>
    %281 = arith.maximumf %279, %280 : vector<8x128xf32>
    %282 = arith.truncf %281 : vector<8x128xf32> to vector<8x128xbf16>
    %cst_104 = arith.constant dense<0.000000e+00> : vector<8x128xf32>
    %283 = tpu.matmul %282, %4, %cst_104 {dimension_numbers = #tpu.dot_dimension_numbers<[1], [0], [0], [1], [0, 0, 1, 1], [], []>} : vector<8x128xbf16>, vector<128x128xbf16>, vector<8x128xf32> -> vector<8x128xf32>
    %284 = arith.addf %283, %5 : vector<8x128xf32>
    %285 = math.tanh %284 : vector<8x128xf32>
    %286 = arith.mulf %285, %276 : vector<8x128xf32>
    %287 = arith.truncf %286 : vector<8x128xf32> to vector<8x128xbf16>
    %cst_105 = arith.constant dense<0.000000e+00> : vector<8x32xf32>
    %288 = tpu.matmul %287, %6, %cst_105 {dimension_numbers = #tpu.dot_dimension_numbers<[1], [0], [0], [1], [0, 0, 1, 1], [], []>} : vector<8x128xbf16>, vector<128x32xbf16>, vector<8x32xf32> -> vector<8x32xf32>
    %cst_106 = arith.constant 3.000000e+00 : f32
    %289 = vector.broadcast %cst_106 : f32 to vector<8x32xf32>
    %290 = arith.divf %271, %289 : vector<8x32xf32>
    %291 = arith.subf %288, %290 : vector<8x32xf32>
    %cst_107 = arith.constant 1.000000e+00 : f32
    %292 = vector.broadcast %cst_107 : f32 to vector<8x32xf32>
    %293 = arith.mulf %292, %291 : vector<8x32xf32>
    %294 = arith.addf %255, %293 : vector<8x32xf32>
    %295 = vector.extract_strided_slice %257 {offsets = [2, 0, 0], sizes = [1, 8, 128], strides = [1, 1, 1]} : vector<4x8x128xf32> to vector<1x8x128xf32>
    %296 = vector.shape_cast %295 : vector<1x8x128xf32> to vector<8x128xf32>
    %297 = arith.truncf %294 : vector<8x32xf32> to vector<8x32xbf16>
    %cst_108 = arith.constant dense<0.000000e+00> : vector<8x128xf32>
    %298 = tpu.matmul %297, %2, %cst_108 {dimension_numbers = #tpu.dot_dimension_numbers<[1], [0], [0], [1], [0, 0, 1, 1], [], []>} : vector<8x32xbf16>, vector<32x128xbf16>, vector<8x128xf32> -> vector<8x128xf32>
    %299 = arith.addf %298, %3 : vector<8x128xf32>
    %cst_109 = arith.constant 0.000000e+00 : f32
    %300 = vector.broadcast %cst_109 : f32 to vector<8x128xf32>
    %301 = arith.maximumf %299, %300 : vector<8x128xf32>
    %302 = arith.truncf %301 : vector<8x128xf32> to vector<8x128xbf16>
    %cst_110 = arith.constant dense<0.000000e+00> : vector<8x128xf32>
    %303 = tpu.matmul %302, %4, %cst_110 {dimension_numbers = #tpu.dot_dimension_numbers<[1], [0], [0], [1], [0, 0, 1, 1], [], []>} : vector<8x128xbf16>, vector<128x128xbf16>, vector<8x128xf32> -> vector<8x128xf32>
    %304 = arith.addf %303, %5 : vector<8x128xf32>
    %305 = math.tanh %304 : vector<8x128xf32>
    %306 = arith.mulf %305, %296 : vector<8x128xf32>
    %307 = arith.truncf %306 : vector<8x128xf32> to vector<8x128xbf16>
    %cst_111 = arith.constant dense<0.000000e+00> : vector<8x32xf32>
    %308 = tpu.matmul %307, %6, %cst_111 {dimension_numbers = #tpu.dot_dimension_numbers<[1], [0], [0], [1], [0, 0, 1, 1], [], []>} : vector<8x128xbf16>, vector<128x32xbf16>, vector<8x32xf32> -> vector<8x32xf32>
    %309 = arith.subf %271, %288 : vector<8x32xf32>
    %310 = arith.addf %309, %308 : vector<8x32xf32>
    %cst_112 = arith.constant 1.000000e+00 : f32
    %311 = vector.broadcast %cst_112 : f32 to vector<8x32xf32>
    %312 = arith.mulf %311, %310 : vector<8x32xf32>
    %313 = arith.addf %255, %312 : vector<8x32xf32>
    %314 = vector.extract_strided_slice %257 {offsets = [3, 0, 0], sizes = [1, 8, 128], strides = [1, 1, 1]} : vector<4x8x128xf32> to vector<1x8x128xf32>
    %315 = vector.shape_cast %314 : vector<1x8x128xf32> to vector<8x128xf32>
    %316 = arith.truncf %313 : vector<8x32xf32> to vector<8x32xbf16>
    %cst_113 = arith.constant dense<0.000000e+00> : vector<8x128xf32>
    %317 = tpu.matmul %316, %2, %cst_113 {dimension_numbers = #tpu.dot_dimension_numbers<[1], [0], [0], [1], [0, 0, 1, 1], [], []>} : vector<8x32xbf16>, vector<32x128xbf16>, vector<8x128xf32> -> vector<8x128xf32>
    %318 = arith.addf %317, %3 : vector<8x128xf32>
    %cst_114 = arith.constant 0.000000e+00 : f32
    %319 = vector.broadcast %cst_114 : f32 to vector<8x128xf32>
    %320 = arith.maximumf %318, %319 : vector<8x128xf32>
    %321 = arith.truncf %320 : vector<8x128xf32> to vector<8x128xbf16>
    %cst_115 = arith.constant dense<0.000000e+00> : vector<8x128xf32>
    %322 = tpu.matmul %321, %4, %cst_115 {dimension_numbers = #tpu.dot_dimension_numbers<[1], [0], [0], [1], [0, 0, 1, 1], [], []>} : vector<8x128xbf16>, vector<128x128xbf16>, vector<8x128xf32> -> vector<8x128xf32>
    %323 = arith.addf %322, %5 : vector<8x128xf32>
    %324 = math.tanh %323 : vector<8x128xf32>
    %325 = arith.mulf %324, %315 : vector<8x128xf32>
    %326 = arith.truncf %325 : vector<8x128xf32> to vector<8x128xbf16>
    %cst_116 = arith.constant dense<0.000000e+00> : vector<8x32xf32>
    %327 = tpu.matmul %326, %6, %cst_116 {dimension_numbers = #tpu.dot_dimension_numbers<[1], [0], [0], [1], [0, 0, 1, 1], [], []>} : vector<8x128xbf16>, vector<128x32xbf16>, vector<8x32xf32> -> vector<8x32xf32>
    %328 = arith.addf %288, %308 : vector<8x32xf32>
    %cst_117 = arith.constant 3.000000e+00 : f32
    %329 = vector.broadcast %cst_117 : f32 to vector<8x32xf32>
    %330 = arith.mulf %329, %328 : vector<8x32xf32>
    %331 = arith.addf %271, %330 : vector<8x32xf32>
    %332 = arith.addf %331, %327 : vector<8x32xf32>
    %cst_118 = arith.constant 1.000000e+00 : f32
    %333 = vector.broadcast %cst_118 : f32 to vector<8x32xf32>
    %334 = arith.mulf %333, %332 : vector<8x32xf32>
    %cst_119 = arith.constant 1.250000e-01 : f32
    %335 = vector.broadcast %cst_119 : f32 to vector<8x32xf32>
    %336 = arith.mulf %334, %335 : vector<8x32xf32>
    %337 = arith.addf %255, %336 : vector<8x32xf32>
    %c4 = arith.constant 4 : index
    %c0_120 = arith.constant 0 : index
    %c0_121 = arith.constant 0 : index
    %c0_122 = arith.constant 0 : index
    %338 = vector.load %arg1[%c4, %c0_120, %c0_121, %c0_122] : memref<7x4x8x128xf32, #tpu.memory_space<vmem>>, vector<1x4x8x128xf32>
    %339 = vector.shape_cast %338 : vector<1x4x8x128xf32> to vector<4x8x128xf32>
    %340 = vector.extract_strided_slice %339 {offsets = [0, 0, 0], sizes = [1, 8, 128], strides = [1, 1, 1]} : vector<4x8x128xf32> to vector<1x8x128xf32>
    %341 = vector.shape_cast %340 : vector<1x8x128xf32> to vector<8x128xf32>
    %342 = arith.truncf %337 : vector<8x32xf32> to vector<8x32xbf16>
    %cst_123 = arith.constant dense<0.000000e+00> : vector<8x128xf32>
    %343 = tpu.matmul %342, %2, %cst_123 {dimension_numbers = #tpu.dot_dimension_numbers<[1], [0], [0], [1], [0, 0, 1, 1], [], []>} : vector<8x32xbf16>, vector<32x128xbf16>, vector<8x128xf32> -> vector<8x128xf32>
    %344 = arith.addf %343, %3 : vector<8x128xf32>
    %cst_124 = arith.constant 0.000000e+00 : f32
    %345 = vector.broadcast %cst_124 : f32 to vector<8x128xf32>
    %346 = arith.maximumf %344, %345 : vector<8x128xf32>
    %347 = arith.truncf %346 : vector<8x128xf32> to vector<8x128xbf16>
    %cst_125 = arith.constant dense<0.000000e+00> : vector<8x128xf32>
    %348 = tpu.matmul %347, %4, %cst_125 {dimension_numbers = #tpu.dot_dimension_numbers<[1], [0], [0], [1], [0, 0, 1, 1], [], []>} : vector<8x128xbf16>, vector<128x128xbf16>, vector<8x128xf32> -> vector<8x128xf32>
    %349 = arith.addf %348, %5 : vector<8x128xf32>
    %350 = math.tanh %349 : vector<8x128xf32>
    %351 = arith.mulf %350, %341 : vector<8x128xf32>
    %352 = arith.truncf %351 : vector<8x128xf32> to vector<8x128xbf16>
    %cst_126 = arith.constant dense<0.000000e+00> : vector<8x32xf32>
    %353 = tpu.matmul %352, %6, %cst_126 {dimension_numbers = #tpu.dot_dimension_numbers<[1], [0], [0], [1], [0, 0, 1, 1], [], []>} : vector<8x128xbf16>, vector<128x32xbf16>, vector<8x32xf32> -> vector<8x32xf32>
    %cst_127 = arith.constant 0.333333343 : f32
    %354 = vector.broadcast %cst_127 : f32 to vector<8x32xf32>
    %355 = arith.mulf %354, %353 : vector<8x32xf32>
    %356 = arith.addf %337, %355 : vector<8x32xf32>
    %357 = vector.extract_strided_slice %339 {offsets = [1, 0, 0], sizes = [1, 8, 128], strides = [1, 1, 1]} : vector<4x8x128xf32> to vector<1x8x128xf32>
    %358 = vector.shape_cast %357 : vector<1x8x128xf32> to vector<8x128xf32>
    %359 = arith.truncf %356 : vector<8x32xf32> to vector<8x32xbf16>
    %cst_128 = arith.constant dense<0.000000e+00> : vector<8x128xf32>
    %360 = tpu.matmul %359, %2, %cst_128 {dimension_numbers = #tpu.dot_dimension_numbers<[1], [0], [0], [1], [0, 0, 1, 1], [], []>} : vector<8x32xbf16>, vector<32x128xbf16>, vector<8x128xf32> -> vector<8x128xf32>
    %361 = arith.addf %360, %3 : vector<8x128xf32>
    %cst_129 = arith.constant 0.000000e+00 : f32
    %362 = vector.broadcast %cst_129 : f32 to vector<8x128xf32>
    %363 = arith.maximumf %361, %362 : vector<8x128xf32>
    %364 = arith.truncf %363 : vector<8x128xf32> to vector<8x128xbf16>
    %cst_130 = arith.constant dense<0.000000e+00> : vector<8x128xf32>
    %365 = tpu.matmul %364, %4, %cst_130 {dimension_numbers = #tpu.dot_dimension_numbers<[1], [0], [0], [1], [0, 0, 1, 1], [], []>} : vector<8x128xbf16>, vector<128x128xbf16>, vector<8x128xf32> -> vector<8x128xf32>
    %366 = arith.addf %365, %5 : vector<8x128xf32>
    %367 = math.tanh %366 : vector<8x128xf32>
    %368 = arith.mulf %367, %358 : vector<8x128xf32>
    %369 = arith.truncf %368 : vector<8x128xf32> to vector<8x128xbf16>
    %cst_131 = arith.constant dense<0.000000e+00> : vector<8x32xf32>
    %370 = tpu.matmul %369, %6, %cst_131 {dimension_numbers = #tpu.dot_dimension_numbers<[1], [0], [0], [1], [0, 0, 1, 1], [], []>} : vector<8x128xbf16>, vector<128x32xbf16>, vector<8x32xf32> -> vector<8x32xf32>
    %cst_132 = arith.constant 3.000000e+00 : f32
    %371 = vector.broadcast %cst_132 : f32 to vector<8x32xf32>
    %372 = arith.divf %353, %371 : vector<8x32xf32>
    %373 = arith.subf %370, %372 : vector<8x32xf32>
    %cst_133 = arith.constant 1.000000e+00 : f32
    %374 = vector.broadcast %cst_133 : f32 to vector<8x32xf32>
    %375 = arith.mulf %374, %373 : vector<8x32xf32>
    %376 = arith.addf %337, %375 : vector<8x32xf32>
    %377 = vector.extract_strided_slice %339 {offsets = [2, 0, 0], sizes = [1, 8, 128], strides = [1, 1, 1]} : vector<4x8x128xf32> to vector<1x8x128xf32>
    %378 = vector.shape_cast %377 : vector<1x8x128xf32> to vector<8x128xf32>
    %379 = arith.truncf %376 : vector<8x32xf32> to vector<8x32xbf16>
    %cst_134 = arith.constant dense<0.000000e+00> : vector<8x128xf32>
    %380 = tpu.matmul %379, %2, %cst_134 {dimension_numbers = #tpu.dot_dimension_numbers<[1], [0], [0], [1], [0, 0, 1, 1], [], []>} : vector<8x32xbf16>, vector<32x128xbf16>, vector<8x128xf32> -> vector<8x128xf32>
    %381 = arith.addf %380, %3 : vector<8x128xf32>
    %cst_135 = arith.constant 0.000000e+00 : f32
    %382 = vector.broadcast %cst_135 : f32 to vector<8x128xf32>
    %383 = arith.maximumf %381, %382 : vector<8x128xf32>
    %384 = arith.truncf %383 : vector<8x128xf32> to vector<8x128xbf16>
    %cst_136 = arith.constant dense<0.000000e+00> : vector<8x128xf32>
    %385 = tpu.matmul %384, %4, %cst_136 {dimension_numbers = #tpu.dot_dimension_numbers<[1], [0], [0], [1], [0, 0, 1, 1], [], []>} : vector<8x128xbf16>, vector<128x128xbf16>, vector<8x128xf32> -> vector<8x128xf32>
    %386 = arith.addf %385, %5 : vector<8x128xf32>
    %387 = math.tanh %386 : vector<8x128xf32>
    %388 = arith.mulf %387, %378 : vector<8x128xf32>
    %389 = arith.truncf %388 : vector<8x128xf32> to vector<8x128xbf16>
    %cst_137 = arith.constant dense<0.000000e+00> : vector<8x32xf32>
    %390 = tpu.matmul %389, %6, %cst_137 {dimension_numbers = #tpu.dot_dimension_numbers<[1], [0], [0], [1], [0, 0, 1, 1], [], []>} : vector<8x128xbf16>, vector<128x32xbf16>, vector<8x32xf32> -> vector<8x32xf32>
    %391 = arith.subf %353, %370 : vector<8x32xf32>
    %392 = arith.addf %391, %390 : vector<8x32xf32>
    %cst_138 = arith.constant 1.000000e+00 : f32
    %393 = vector.broadcast %cst_138 : f32 to vector<8x32xf32>
    %394 = arith.mulf %393, %392 : vector<8x32xf32>
    %395 = arith.addf %337, %394 : vector<8x32xf32>
    %396 = vector.extract_strided_slice %339 {offsets = [3, 0, 0], sizes = [1, 8, 128], strides = [1, 1, 1]} : vector<4x8x128xf32> to vector<1x8x128xf32>
    %397 = vector.shape_cast %396 : vector<1x8x128xf32> to vector<8x128xf32>
    %398 = arith.truncf %395 : vector<8x32xf32> to vector<8x32xbf16>
    %cst_139 = arith.constant dense<0.000000e+00> : vector<8x128xf32>
    %399 = tpu.matmul %398, %2, %cst_139 {dimension_numbers = #tpu.dot_dimension_numbers<[1], [0], [0], [1], [0, 0, 1, 1], [], []>} : vector<8x32xbf16>, vector<32x128xbf16>, vector<8x128xf32> -> vector<8x128xf32>
    %400 = arith.addf %399, %3 : vector<8x128xf32>
    %cst_140 = arith.constant 0.000000e+00 : f32
    %401 = vector.broadcast %cst_140 : f32 to vector<8x128xf32>
    %402 = arith.maximumf %400, %401 : vector<8x128xf32>
    %403 = arith.truncf %402 : vector<8x128xf32> to vector<8x128xbf16>
    %cst_141 = arith.constant dense<0.000000e+00> : vector<8x128xf32>
    %404 = tpu.matmul %403, %4, %cst_141 {dimension_numbers = #tpu.dot_dimension_numbers<[1], [0], [0], [1], [0, 0, 1, 1], [], []>} : vector<8x128xbf16>, vector<128x128xbf16>, vector<8x128xf32> -> vector<8x128xf32>
    %405 = arith.addf %404, %5 : vector<8x128xf32>
    %406 = math.tanh %405 : vector<8x128xf32>
    %407 = arith.mulf %406, %397 : vector<8x128xf32>
    %408 = arith.truncf %407 : vector<8x128xf32> to vector<8x128xbf16>
    %cst_142 = arith.constant dense<0.000000e+00> : vector<8x32xf32>
    %409 = tpu.matmul %408, %6, %cst_142 {dimension_numbers = #tpu.dot_dimension_numbers<[1], [0], [0], [1], [0, 0, 1, 1], [], []>} : vector<8x128xbf16>, vector<128x32xbf16>, vector<8x32xf32> -> vector<8x32xf32>
    %410 = arith.addf %370, %390 : vector<8x32xf32>
    %cst_143 = arith.constant 3.000000e+00 : f32
    %411 = vector.broadcast %cst_143 : f32 to vector<8x32xf32>
    %412 = arith.mulf %411, %410 : vector<8x32xf32>
    %413 = arith.addf %353, %412 : vector<8x32xf32>
    %414 = arith.addf %413, %409 : vector<8x32xf32>
    %cst_144 = arith.constant 1.000000e+00 : f32
    %415 = vector.broadcast %cst_144 : f32 to vector<8x32xf32>
    %416 = arith.mulf %415, %414 : vector<8x32xf32>
    %cst_145 = arith.constant 1.250000e-01 : f32
    %417 = vector.broadcast %cst_145 : f32 to vector<8x32xf32>
    %418 = arith.mulf %416, %417 : vector<8x32xf32>
    %419 = arith.addf %337, %418 : vector<8x32xf32>
    %c5 = arith.constant 5 : index
    %c0_146 = arith.constant 0 : index
    %c0_147 = arith.constant 0 : index
    %c0_148 = arith.constant 0 : index
    %420 = vector.load %arg1[%c5, %c0_146, %c0_147, %c0_148] : memref<7x4x8x128xf32, #tpu.memory_space<vmem>>, vector<1x4x8x128xf32>
    %421 = vector.shape_cast %420 : vector<1x4x8x128xf32> to vector<4x8x128xf32>
    %422 = vector.extract_strided_slice %421 {offsets = [0, 0, 0], sizes = [1, 8, 128], strides = [1, 1, 1]} : vector<4x8x128xf32> to vector<1x8x128xf32>
    %423 = vector.shape_cast %422 : vector<1x8x128xf32> to vector<8x128xf32>
    %424 = arith.truncf %419 : vector<8x32xf32> to vector<8x32xbf16>
    %cst_149 = arith.constant dense<0.000000e+00> : vector<8x128xf32>
    %425 = tpu.matmul %424, %2, %cst_149 {dimension_numbers = #tpu.dot_dimension_numbers<[1], [0], [0], [1], [0, 0, 1, 1], [], []>} : vector<8x32xbf16>, vector<32x128xbf16>, vector<8x128xf32> -> vector<8x128xf32>
    %426 = arith.addf %425, %3 : vector<8x128xf32>
    %cst_150 = arith.constant 0.000000e+00 : f32
    %427 = vector.broadcast %cst_150 : f32 to vector<8x128xf32>
    %428 = arith.maximumf %426, %427 : vector<8x128xf32>
    %429 = arith.truncf %428 : vector<8x128xf32> to vector<8x128xbf16>
    %cst_151 = arith.constant dense<0.000000e+00> : vector<8x128xf32>
    %430 = tpu.matmul %429, %4, %cst_151 {dimension_numbers = #tpu.dot_dimension_numbers<[1], [0], [0], [1], [0, 0, 1, 1], [], []>} : vector<8x128xbf16>, vector<128x128xbf16>, vector<8x128xf32> -> vector<8x128xf32>
    %431 = arith.addf %430, %5 : vector<8x128xf32>
    %432 = math.tanh %431 : vector<8x128xf32>
    %433 = arith.mulf %432, %423 : vector<8x128xf32>
    %434 = arith.truncf %433 : vector<8x128xf32> to vector<8x128xbf16>
    %cst_152 = arith.constant dense<0.000000e+00> : vector<8x32xf32>
    %435 = tpu.matmul %434, %6, %cst_152 {dimension_numbers = #tpu.dot_dimension_numbers<[1], [0], [0], [1], [0, 0, 1, 1], [], []>} : vector<8x128xbf16>, vector<128x32xbf16>, vector<8x32xf32> -> vector<8x32xf32>
    %cst_153 = arith.constant 0.333333343 : f32
    %436 = vector.broadcast %cst_153 : f32 to vector<8x32xf32>
    %437 = arith.mulf %436, %435 : vector<8x32xf32>
    %438 = arith.addf %419, %437 : vector<8x32xf32>
    %439 = vector.extract_strided_slice %421 {offsets = [1, 0, 0], sizes = [1, 8, 128], strides = [1, 1, 1]} : vector<4x8x128xf32> to vector<1x8x128xf32>
    %440 = vector.shape_cast %439 : vector<1x8x128xf32> to vector<8x128xf32>
    %441 = arith.truncf %438 : vector<8x32xf32> to vector<8x32xbf16>
    %cst_154 = arith.constant dense<0.000000e+00> : vector<8x128xf32>
    %442 = tpu.matmul %441, %2, %cst_154 {dimension_numbers = #tpu.dot_dimension_numbers<[1], [0], [0], [1], [0, 0, 1, 1], [], []>} : vector<8x32xbf16>, vector<32x128xbf16>, vector<8x128xf32> -> vector<8x128xf32>
    %443 = arith.addf %442, %3 : vector<8x128xf32>
    %cst_155 = arith.constant 0.000000e+00 : f32
    %444 = vector.broadcast %cst_155 : f32 to vector<8x128xf32>
    %445 = arith.maximumf %443, %444 : vector<8x128xf32>
    %446 = arith.truncf %445 : vector<8x128xf32> to vector<8x128xbf16>
    %cst_156 = arith.constant dense<0.000000e+00> : vector<8x128xf32>
    %447 = tpu.matmul %446, %4, %cst_156 {dimension_numbers = #tpu.dot_dimension_numbers<[1], [0], [0], [1], [0, 0, 1, 1], [], []>} : vector<8x128xbf16>, vector<128x128xbf16>, vector<8x128xf32> -> vector<8x128xf32>
    %448 = arith.addf %447, %5 : vector<8x128xf32>
    %449 = math.tanh %448 : vector<8x128xf32>
    %450 = arith.mulf %449, %440 : vector<8x128xf32>
    %451 = arith.truncf %450 : vector<8x128xf32> to vector<8x128xbf16>
    %cst_157 = arith.constant dense<0.000000e+00> : vector<8x32xf32>
    %452 = tpu.matmul %451, %6, %cst_157 {dimension_numbers = #tpu.dot_dimension_numbers<[1], [0], [0], [1], [0, 0, 1, 1], [], []>} : vector<8x128xbf16>, vector<128x32xbf16>, vector<8x32xf32> -> vector<8x32xf32>
    %cst_158 = arith.constant 3.000000e+00 : f32
    %453 = vector.broadcast %cst_158 : f32 to vector<8x32xf32>
    %454 = arith.divf %435, %453 : vector<8x32xf32>
    %455 = arith.subf %452, %454 : vector<8x32xf32>
    %cst_159 = arith.constant 1.000000e+00 : f32
    %456 = vector.broadcast %cst_159 : f32 to vector<8x32xf32>
    %457 = arith.mulf %456, %455 : vector<8x32xf32>
    %458 = arith.addf %419, %457 : vector<8x32xf32>
    %459 = vector.extract_strided_slice %421 {offsets = [2, 0, 0], sizes = [1, 8, 128], strides = [1, 1, 1]} : vector<4x8x128xf32> to vector<1x8x128xf32>
    %460 = vector.shape_cast %459 : vector<1x8x128xf32> to vector<8x128xf32>
    %461 = arith.truncf %458 : vector<8x32xf32> to vector<8x32xbf16>
    %cst_160 = arith.constant dense<0.000000e+00> : vector<8x128xf32>
    %462 = tpu.matmul %461, %2, %cst_160 {dimension_numbers = #tpu.dot_dimension_numbers<[1], [0], [0], [1], [0, 0, 1, 1], [], []>} : vector<8x32xbf16>, vector<32x128xbf16>, vector<8x128xf32> -> vector<8x128xf32>
    %463 = arith.addf %462, %3 : vector<8x128xf32>
    %cst_161 = arith.constant 0.000000e+00 : f32
    %464 = vector.broadcast %cst_161 : f32 to vector<8x128xf32>
    %465 = arith.maximumf %463, %464 : vector<8x128xf32>
    %466 = arith.truncf %465 : vector<8x128xf32> to vector<8x128xbf16>
    %cst_162 = arith.constant dense<0.000000e+00> : vector<8x128xf32>
    %467 = tpu.matmul %466, %4, %cst_162 {dimension_numbers = #tpu.dot_dimension_numbers<[1], [0], [0], [1], [0, 0, 1, 1], [], []>} : vector<8x128xbf16>, vector<128x128xbf16>, vector<8x128xf32> -> vector<8x128xf32>
    %468 = arith.addf %467, %5 : vector<8x128xf32>
    %469 = math.tanh %468 : vector<8x128xf32>
    %470 = arith.mulf %469, %460 : vector<8x128xf32>
    %471 = arith.truncf %470 : vector<8x128xf32> to vector<8x128xbf16>
    %cst_163 = arith.constant dense<0.000000e+00> : vector<8x32xf32>
    %472 = tpu.matmul %471, %6, %cst_163 {dimension_numbers = #tpu.dot_dimension_numbers<[1], [0], [0], [1], [0, 0, 1, 1], [], []>} : vector<8x128xbf16>, vector<128x32xbf16>, vector<8x32xf32> -> vector<8x32xf32>
    %473 = arith.subf %435, %452 : vector<8x32xf32>
    %474 = arith.addf %473, %472 : vector<8x32xf32>
    %cst_164 = arith.constant 1.000000e+00 : f32
    %475 = vector.broadcast %cst_164 : f32 to vector<8x32xf32>
    %476 = arith.mulf %475, %474 : vector<8x32xf32>
    %477 = arith.addf %419, %476 : vector<8x32xf32>
    %478 = vector.extract_strided_slice %421 {offsets = [3, 0, 0], sizes = [1, 8, 128], strides = [1, 1, 1]} : vector<4x8x128xf32> to vector<1x8x128xf32>
    %479 = vector.shape_cast %478 : vector<1x8x128xf32> to vector<8x128xf32>
    %480 = arith.truncf %477 : vector<8x32xf32> to vector<8x32xbf16>
    %cst_165 = arith.constant dense<0.000000e+00> : vector<8x128xf32>
    %481 = tpu.matmul %480, %2, %cst_165 {dimension_numbers = #tpu.dot_dimension_numbers<[1], [0], [0], [1], [0, 0, 1, 1], [], []>} : vector<8x32xbf16>, vector<32x128xbf16>, vector<8x128xf32> -> vector<8x128xf32>
    %482 = arith.addf %481, %3 : vector<8x128xf32>
    %cst_166 = arith.constant 0.000000e+00 : f32
    %483 = vector.broadcast %cst_166 : f32 to vector<8x128xf32>
    %484 = arith.maximumf %482, %483 : vector<8x128xf32>
    %485 = arith.truncf %484 : vector<8x128xf32> to vector<8x128xbf16>
    %cst_167 = arith.constant dense<0.000000e+00> : vector<8x128xf32>
    %486 = tpu.matmul %485, %4, %cst_167 {dimension_numbers = #tpu.dot_dimension_numbers<[1], [0], [0], [1], [0, 0, 1, 1], [], []>} : vector<8x128xbf16>, vector<128x128xbf16>, vector<8x128xf32> -> vector<8x128xf32>
    %487 = arith.addf %486, %5 : vector<8x128xf32>
    %488 = math.tanh %487 : vector<8x128xf32>
    %489 = arith.mulf %488, %479 : vector<8x128xf32>
    %490 = arith.truncf %489 : vector<8x128xf32> to vector<8x128xbf16>
    %cst_168 = arith.constant dense<0.000000e+00> : vector<8x32xf32>
    %491 = tpu.matmul %490, %6, %cst_168 {dimension_numbers = #tpu.dot_dimension_numbers<[1], [0], [0], [1], [0, 0, 1, 1], [], []>} : vector<8x128xbf16>, vector<128x32xbf16>, vector<8x32xf32> -> vector<8x32xf32>
    %492 = arith.addf %452, %472 : vector<8x32xf32>
    %cst_169 = arith.constant 3.000000e+00 : f32
    %493 = vector.broadcast %cst_169 : f32 to vector<8x32xf32>
    %494 = arith.mulf %493, %492 : vector<8x32xf32>
    %495 = arith.addf %435, %494 : vector<8x32xf32>
    %496 = arith.addf %495, %491 : vector<8x32xf32>
    %cst_170 = arith.constant 1.000000e+00 : f32
    %497 = vector.broadcast %cst_170 : f32 to vector<8x32xf32>
    %498 = arith.mulf %497, %496 : vector<8x32xf32>
    %cst_171 = arith.constant 1.250000e-01 : f32
    %499 = vector.broadcast %cst_171 : f32 to vector<8x32xf32>
    %500 = arith.mulf %498, %499 : vector<8x32xf32>
    %501 = arith.addf %419, %500 : vector<8x32xf32>
    %c6 = arith.constant 6 : index
    %c0_172 = arith.constant 0 : index
    %c0_173 = arith.constant 0 : index
    %c0_174 = arith.constant 0 : index
    %502 = vector.load %arg1[%c6, %c0_172, %c0_173, %c0_174] : memref<7x4x8x128xf32, #tpu.memory_space<vmem>>, vector<1x4x8x128xf32>
    %503 = vector.shape_cast %502 : vector<1x4x8x128xf32> to vector<4x8x128xf32>
    %504 = vector.extract_strided_slice %503 {offsets = [0, 0, 0], sizes = [1, 8, 128], strides = [1, 1, 1]} : vector<4x8x128xf32> to vector<1x8x128xf32>
    %505 = vector.shape_cast %504 : vector<1x8x128xf32> to vector<8x128xf32>
    %506 = arith.truncf %501 : vector<8x32xf32> to vector<8x32xbf16>
    %cst_175 = arith.constant dense<0.000000e+00> : vector<8x128xf32>
    %507 = tpu.matmul %506, %2, %cst_175 {dimension_numbers = #tpu.dot_dimension_numbers<[1], [0], [0], [1], [0, 0, 1, 1], [], []>} : vector<8x32xbf16>, vector<32x128xbf16>, vector<8x128xf32> -> vector<8x128xf32>
    %508 = arith.addf %507, %3 : vector<8x128xf32>
    %cst_176 = arith.constant 0.000000e+00 : f32
    %509 = vector.broadcast %cst_176 : f32 to vector<8x128xf32>
    %510 = arith.maximumf %508, %509 : vector<8x128xf32>
    %511 = arith.truncf %510 : vector<8x128xf32> to vector<8x128xbf16>
    %cst_177 = arith.constant dense<0.000000e+00> : vector<8x128xf32>
    %512 = tpu.matmul %511, %4, %cst_177 {dimension_numbers = #tpu.dot_dimension_numbers<[1], [0], [0], [1], [0, 0, 1, 1], [], []>} : vector<8x128xbf16>, vector<128x128xbf16>, vector<8x128xf32> -> vector<8x128xf32>
    %513 = arith.addf %512, %5 : vector<8x128xf32>
    %514 = math.tanh %513 : vector<8x128xf32>
    %515 = arith.mulf %514, %505 : vector<8x128xf32>
    %516 = arith.truncf %515 : vector<8x128xf32> to vector<8x128xbf16>
    %cst_178 = arith.constant dense<0.000000e+00> : vector<8x32xf32>
    %517 = tpu.matmul %516, %6, %cst_178 {dimension_numbers = #tpu.dot_dimension_numbers<[1], [0], [0], [1], [0, 0, 1, 1], [], []>} : vector<8x128xbf16>, vector<128x32xbf16>, vector<8x32xf32> -> vector<8x32xf32>
    %cst_179 = arith.constant 0.333333343 : f32
    %518 = vector.broadcast %cst_179 : f32 to vector<8x32xf32>
    %519 = arith.mulf %518, %517 : vector<8x32xf32>
    %520 = arith.addf %501, %519 : vector<8x32xf32>
    %521 = vector.extract_strided_slice %503 {offsets = [1, 0, 0], sizes = [1, 8, 128], strides = [1, 1, 1]} : vector<4x8x128xf32> to vector<1x8x128xf32>
    %522 = vector.shape_cast %521 : vector<1x8x128xf32> to vector<8x128xf32>
    %523 = arith.truncf %520 : vector<8x32xf32> to vector<8x32xbf16>
    %cst_180 = arith.constant dense<0.000000e+00> : vector<8x128xf32>
    %524 = tpu.matmul %523, %2, %cst_180 {dimension_numbers = #tpu.dot_dimension_numbers<[1], [0], [0], [1], [0, 0, 1, 1], [], []>} : vector<8x32xbf16>, vector<32x128xbf16>, vector<8x128xf32> -> vector<8x128xf32>
    %525 = arith.addf %524, %3 : vector<8x128xf32>
    %cst_181 = arith.constant 0.000000e+00 : f32
    %526 = vector.broadcast %cst_181 : f32 to vector<8x128xf32>
    %527 = arith.maximumf %525, %526 : vector<8x128xf32>
    %528 = arith.truncf %527 : vector<8x128xf32> to vector<8x128xbf16>
    %cst_182 = arith.constant dense<0.000000e+00> : vector<8x128xf32>
    %529 = tpu.matmul %528, %4, %cst_182 {dimension_numbers = #tpu.dot_dimension_numbers<[1], [0], [0], [1], [0, 0, 1, 1], [], []>} : vector<8x128xbf16>, vector<128x128xbf16>, vector<8x128xf32> -> vector<8x128xf32>
    %530 = arith.addf %529, %5 : vector<8x128xf32>
    %531 = math.tanh %530 : vector<8x128xf32>
    %532 = arith.mulf %531, %522 : vector<8x128xf32>
    %533 = arith.truncf %532 : vector<8x128xf32> to vector<8x128xbf16>
    %cst_183 = arith.constant dense<0.000000e+00> : vector<8x32xf32>
    %534 = tpu.matmul %533, %6, %cst_183 {dimension_numbers = #tpu.dot_dimension_numbers<[1], [0], [0], [1], [0, 0, 1, 1], [], []>} : vector<8x128xbf16>, vector<128x32xbf16>, vector<8x32xf32> -> vector<8x32xf32>
    %cst_184 = arith.constant 3.000000e+00 : f32
    %535 = vector.broadcast %cst_184 : f32 to vector<8x32xf32>
    %536 = arith.divf %517, %535 : vector<8x32xf32>
    %537 = arith.subf %534, %536 : vector<8x32xf32>
    %cst_185 = arith.constant 1.000000e+00 : f32
    %538 = vector.broadcast %cst_185 : f32 to vector<8x32xf32>
    %539 = arith.mulf %538, %537 : vector<8x32xf32>
    %540 = arith.addf %501, %539 : vector<8x32xf32>
    %541 = vector.extract_strided_slice %503 {offsets = [2, 0, 0], sizes = [1, 8, 128], strides = [1, 1, 1]} : vector<4x8x128xf32> to vector<1x8x128xf32>
    %542 = vector.shape_cast %541 : vector<1x8x128xf32> to vector<8x128xf32>
    %543 = arith.truncf %540 : vector<8x32xf32> to vector<8x32xbf16>
    %cst_186 = arith.constant dense<0.000000e+00> : vector<8x128xf32>
    %544 = tpu.matmul %543, %2, %cst_186 {dimension_numbers = #tpu.dot_dimension_numbers<[1], [0], [0], [1], [0, 0, 1, 1], [], []>} : vector<8x32xbf16>, vector<32x128xbf16>, vector<8x128xf32> -> vector<8x128xf32>
    %545 = arith.addf %544, %3 : vector<8x128xf32>
    %cst_187 = arith.constant 0.000000e+00 : f32
    %546 = vector.broadcast %cst_187 : f32 to vector<8x128xf32>
    %547 = arith.maximumf %545, %546 : vector<8x128xf32>
    %548 = arith.truncf %547 : vector<8x128xf32> to vector<8x128xbf16>
    %cst_188 = arith.constant dense<0.000000e+00> : vector<8x128xf32>
    %549 = tpu.matmul %548, %4, %cst_188 {dimension_numbers = #tpu.dot_dimension_numbers<[1], [0], [0], [1], [0, 0, 1, 1], [], []>} : vector<8x128xbf16>, vector<128x128xbf16>, vector<8x128xf32> -> vector<8x128xf32>
    %550 = arith.addf %549, %5 : vector<8x128xf32>
    %551 = math.tanh %550 : vector<8x128xf32>
    %552 = arith.mulf %551, %542 : vector<8x128xf32>
    %553 = arith.truncf %552 : vector<8x128xf32> to vector<8x128xbf16>
    %cst_189 = arith.constant dense<0.000000e+00> : vector<8x32xf32>
    %554 = tpu.matmul %553, %6, %cst_189 {dimension_numbers = #tpu.dot_dimension_numbers<[1], [0], [0], [1], [0, 0, 1, 1], [], []>} : vector<8x128xbf16>, vector<128x32xbf16>, vector<8x32xf32> -> vector<8x32xf32>
    %555 = arith.subf %517, %534 : vector<8x32xf32>
    %556 = arith.addf %555, %554 : vector<8x32xf32>
    %cst_190 = arith.constant 1.000000e+00 : f32
    %557 = vector.broadcast %cst_190 : f32 to vector<8x32xf32>
    %558 = arith.mulf %557, %556 : vector<8x32xf32>
    %559 = arith.addf %501, %558 : vector<8x32xf32>
    %560 = vector.extract_strided_slice %503 {offsets = [3, 0, 0], sizes = [1, 8, 128], strides = [1, 1, 1]} : vector<4x8x128xf32> to vector<1x8x128xf32>
    %561 = vector.shape_cast %560 : vector<1x8x128xf32> to vector<8x128xf32>
    %562 = arith.truncf %559 : vector<8x32xf32> to vector<8x32xbf16>
    %cst_191 = arith.constant dense<0.000000e+00> : vector<8x128xf32>
    %563 = tpu.matmul %562, %2, %cst_191 {dimension_numbers = #tpu.dot_dimension_numbers<[1], [0], [0], [1], [0, 0, 1, 1], [], []>} : vector<8x32xbf16>, vector<32x128xbf16>, vector<8x128xf32> -> vector<8x128xf32>
    %564 = arith.addf %563, %3 : vector<8x128xf32>
    %cst_192 = arith.constant 0.000000e+00 : f32
    %565 = vector.broadcast %cst_192 : f32 to vector<8x128xf32>
    %566 = arith.maximumf %564, %565 : vector<8x128xf32>
    %567 = arith.truncf %566 : vector<8x128xf32> to vector<8x128xbf16>
    %cst_193 = arith.constant dense<0.000000e+00> : vector<8x128xf32>
    %568 = tpu.matmul %567, %4, %cst_193 {dimension_numbers = #tpu.dot_dimension_numbers<[1], [0], [0], [1], [0, 0, 1, 1], [], []>} : vector<8x128xbf16>, vector<128x128xbf16>, vector<8x128xf32> -> vector<8x128xf32>
    %569 = arith.addf %568, %5 : vector<8x128xf32>
    %570 = math.tanh %569 : vector<8x128xf32>
    %571 = arith.mulf %570, %561 : vector<8x128xf32>
    %572 = arith.truncf %571 : vector<8x128xf32> to vector<8x128xbf16>
    %cst_194 = arith.constant dense<0.000000e+00> : vector<8x32xf32>
    %573 = tpu.matmul %572, %6, %cst_194 {dimension_numbers = #tpu.dot_dimension_numbers<[1], [0], [0], [1], [0, 0, 1, 1], [], []>} : vector<8x128xbf16>, vector<128x32xbf16>, vector<8x32xf32> -> vector<8x32xf32>
    %574 = arith.addf %534, %554 : vector<8x32xf32>
    %cst_195 = arith.constant 3.000000e+00 : f32
    %575 = vector.broadcast %cst_195 : f32 to vector<8x32xf32>
    %576 = arith.mulf %575, %574 : vector<8x32xf32>
    %577 = arith.addf %517, %576 : vector<8x32xf32>
    %578 = arith.addf %577, %573 : vector<8x32xf32>
    %cst_196 = arith.constant 1.000000e+00 : f32
    %579 = vector.broadcast %cst_196 : f32 to vector<8x32xf32>
    %580 = arith.mulf %579, %578 : vector<8x32xf32>
    %cst_197 = arith.constant 1.250000e-01 : f32
    %581 = vector.broadcast %cst_197 : f32 to vector<8x32xf32>
    %582 = arith.mulf %580, %581 : vector<8x32xf32>
    %583 = arith.addf %501, %582 : vector<8x32xf32>
    %c0_198 = arith.constant 0 : index
    %c0_199 = arith.constant 0 : index
    %584 = vector.load %arg9[%c0_198, %c0_199] : memref<8x32xf32, #tpu.memory_space<vmem>>, vector<8x32xf32>
    tpu.vector_store %arg9[%c0_198, %c0_199], %583 {strides = array<i32>} : memref<8x32xf32, #tpu.memory_space<vmem>>, vector<8x32xf32>,
    return
  }
}

</mosaic_0001>

<llo_original>
// kernel: neural_cde_forward.1
$region0: #{neural_cde_forward.1}
  #allocation0 [shape = 'u32[]', space=smem, size = 0x4, offset = 0x4, fixed_abs, tag = 'smem constant byte address 0x4 - core index']
  #allocation1 [shape = 'u32[144,128]{1,0:T(1,128)}', space=vmem, size = 0x12000, scoped, tag = 'internal scratch']
  %s0 = inlined_call_operand.vmem [shape: f32[8,4], index: 0, kind: input, shape index: {}]
  %s1 = inlined_call_operand.vmem [shape: f32[7,4,8,128], index: 1, kind: input, shape index: {}]
  %s2 = inlined_call_operand.vmem [shape: f32[4,32], index: 2, kind: input, shape index: {}]
  %s3 = inlined_call_operand.vmem [shape: f32[8,32], index: 3, kind: input, shape index: {}]
  %s4 = inlined_call_operand.vmem [shape: bf16[32,128], index: 4, kind: input, shape index: {}]
  %s5 = inlined_call_operand.vmem [shape: f32[8,128], index: 5, kind: input, shape index: {}]
  %s6 = inlined_call_operand.vmem [shape: bf16[128,128], index: 6, kind: input, shape index: {}]
  %s7 = inlined_call_operand.vmem [shape: f32[8,128], index: 7, kind: input, shape index: {}]
  %s8 = inlined_call_operand.vmem [shape: bf16[128,32], index: 8, kind: input, shape index: {}]
  %s9 = inlined_call_operand.hbm [shape: f32[8,32], index: 9, kind: output, shape index: {}]
  %s10 = sld [smem:[#allocation0]]
  $region46: #{neural_cde_forward.1} parent=0
    _
  %s12 = ssub.s32 1, %s10
  %s13 = scalar_select 0, %s12, %s10
  $region1: #{neural_cde_forward.1} parent=0
    #allocation2 [shape = 'u8[4096]{0}', space=vmem, size = 0x1000, scoped, tag = 'output window, operand 0, single buffered']
    #allocation3 [shape = 's32[1]{0}', space=sflag, size = 0x4, scoped, tag = 'scoped memory for neural_cde_forward.1']
    %14 = vsyncpa [#allocation3], 0
    // Predicated region
    $region2: #{neural_cde_forward.1} parent=1 // pred_check
      _
    $region3: #{neural_cde_forward.1} parent=1 // pred_check_branch
      %16 = sbr.rel (0) target = $region5
    $region4: #{neural_cde_forward.1} parent=1 // pred_region
      _
    $region5: #{neural_cde_forward.1} parent=1 // pred_fallthru
      _
    // Predicated region
    $region6: #{neural_cde_forward.1} parent=1 // pred_check
      _
    $region7: #{neural_cde_forward.1} parent=1 // pred_check_branch
      %18 = sbr.rel (0) target = $region9
    $region8: #{neural_cde_forward.1} parent=1 // pred_region
      _
    $region9: #{neural_cde_forward.1} parent=1 // pred_fallthru
      _
    // Predicated region
    $region10: #{neural_cde_forward.1} parent=1 // pred_check
      _
    $region11: #{neural_cde_forward.1} parent=1 // pred_check_branch
      %20 = sbr.rel (0) target = $region13
    $region12: #{neural_cde_forward.1} parent=1 // pred_region
      _
    $region13: #{neural_cde_forward.1} parent=1 // pred_fallthru
      _
    // Predicated region
    $region14: #{neural_cde_forward.1} parent=1 // pred_check
      _
    $region15: #{neural_cde_forward.1} parent=1 // pred_check_branch
      %22 = sbr.rel (0) target = $region17
    $region16: #{neural_cde_forward.1} parent=1 // pred_region
      _
    $region17: #{neural_cde_forward.1} parent=1 // pred_fallthru
      _
    // Predicated region
    $region18: #{neural_cde_forward.1} parent=1 // pred_check
      _
    $region19: #{neural_cde_forward.1} parent=1 // pred_check_branch
      %24 = sbr.rel (0) target = $region21
    $region20: #{neural_cde_forward.1} parent=1 // pred_region
      _
    $region21: #{neural_cde_forward.1} parent=1 // pred_fallthru
      _
    // Predicated region
    $region22: #{neural_cde_forward.1} parent=1 // pred_check
      _
    $region23: #{neural_cde_forward.1} parent=1 // pred_check_branch
      %26 = sbr.rel (0) target = $region25
    $region24: #{neural_cde_forward.1} parent=1 // pred_region
      _
    $region25: #{neural_cde_forward.1} parent=1 // pred_fallthru
      _
    // Predicated region
    $region26: #{neural_cde_forward.1} parent=1 // pred_check
      _
    $region27: #{neural_cde_forward.1} parent=1 // pred_check_branch
      %28 = sbr.rel (0) target = $region29
    $region28: #{neural_cde_forward.1} parent=1 // pred_region
      _
    $region29: #{neural_cde_forward.1} parent=1 // pred_fallthru
      _
    // Predicated region
    $region30: #{neural_cde_forward.1} parent=1 // pred_check
      _
    $region31: #{neural_cde_forward.1} parent=1 // pred_check_branch
      %30 = sbr.rel (0) target = $region33
    $region32: #{neural_cde_forward.1} parent=1 // pred_region
      _
    $region33: #{neural_cde_forward.1} parent=1 // pred_fallthru
      _
    // Predicated region
    $region34: #{neural_cde_forward.1} parent=1 // pred_check
      _
    $region35: #{neural_cde_forward.1} parent=1 // pred_check_branch
      %32 = sbr.rel (0) target = $region37
    $region36: #{neural_cde_forward.1} parent=1 // pred_region
      _
    $region37: #{neural_cde_forward.1} parent=1 // pred_fallthru
      _
    %v34 = vld [vmem:[%s2] sm:$0xf]
    %v35 = vld [vmem:[%s3] sm:$0xff]
    %v36 = vld [vmem:[%s4] sm:$0xf]
    %v37 = vld [vmem:[%s4 + $0x4] sm:$0xf]
    %v38 = vld [vmem:[%s4 + $0x8] sm:$0xf]
    %v39 = vld [vmem:[%s4 + $0xc] sm:$0xf]
    %v40 = vld [vmem:[%s5] sm:$0xff]
    %v41 = vld [vmem:[%s6] sm:$0xf]
    %v42 = vld [vmem:[%s6 + $0x4] sm:$0xf]
    %v43 = vld [vmem:[%s6 + $0x8] sm:$0xf]
    %v44 = vld [vmem:[%s6 + $0xc] sm:$0xf]
    %v45 = vld [vmem:[%s6 + $0x10] sm:$0xf]
    %v46 = vld [vmem:[%s6 + $0x14] sm:$0xf]
    %v47 = vld [vmem:[%s6 + $0x18] sm:$0xf]
    %v48 = vld [vmem:[%s6 + $0x1c] sm:$0xf]
    %v49 = vld [vmem:[%s6 + $0x20] sm:$0xf]
    %v50 = vld [vmem:[%s6 + $0x24] sm:$0xf]
    %v51 = vld [vmem:[%s6 + $0x28] sm:$0xf]
    %v52 = vld [vmem:[%s6 + $0x2c] sm:$0xf]
    %v53 = vld [vmem:[%s6 + $0x30] sm:$0xf]
    %v54 = vld [vmem:[%s6 + $0x34] sm:$0xf]
    %v55 = vld [vmem:[%s6 + $0x38] sm:$0xf]
    %v56 = vld [vmem:[%s6 + $0x3c] sm:$0xf]
    %v57 = vld [vmem:[%s7] sm:$0xff]
    %v58 = vld [vmem:[%s8] sm:$0xf]
    %v59 = vld [vmem:[%s8 + $0x4] sm:$0xf]
    %v60 = vld [vmem:[%s8 + $0x8] sm:$0xf]
    %v61 = vld [vmem:[%s8 + $0xc] sm:$0xf]
    %v62 = vld [vmem:[%s8 + $0x10] sm:$0xf]
    %v63 = vld [vmem:[%s8 + $0x14] sm:$0xf]
    %v64 = vld [vmem:[%s8 + $0x18] sm:$0xf]
    %v65 = vld [vmem:[%s8 + $0x1c] sm:$0xf]
    %v66 = vld [vmem:[%s8 + $0x20] sm:$0xf]
    %v67 = vld [vmem:[%s8 + $0x24] sm:$0xf]
    %v68 = vld [vmem:[%s8 + $0x28] sm:$0xf]
    %v69 = vld [vmem:[%s8 + $0x2c] sm:$0xf]
    %v70 = vld [vmem:[%s8 + $0x30] sm:$0xf]
    %v71 = vld [vmem:[%s8 + $0x34] sm:$0xf]
    %v72 = vld [vmem:[%s8 + $0x38] sm:$0xf]
    %v73 = vld [vmem:[%s8 + $0x3c] sm:$0xf]
    %v74 = vld [vmem:[%s0] sm:$0xff]
    %vm75 = vcmask 31744
    %v77 = vsel %vm75, %v74, 0
    %vm79 = vcmask 1043456
    %v81 = vsel %vm79, %v34, 0
    %83 = vmatprep.subr.mxu0 0.0
    %84 = vmatpush1.msra.mxu0 %v81
    %85 = vmatprep.subr.mxu0 0.0
    %86 = vmatpush1.msra.mxu0 0.0
    %87 = vmatprep.subr.mxu0 0.0
    %88 = vmatpush1.msra.mxu0 0.0
    %89 = vmatprep.subr.mxu0 0.0
    %90 = vmatpush1.msra.mxu0 0.0
    %91 = vmatprep.subr.mxu0 0.0
    %92 = vmatpush1.msra.mxu0 0.0
    %93 = vmatprep.subr.mxu0 0.0
    %94 = vmatpush1.msra.mxu0 0.0
    %95 = vmatprep.subr.mxu0 0.0
    %96 = vmatpush1.msra.mxu0 0.0
    %97 = vmatprep.subr.mxu0 0.0
    %98 = vmatpush1.msra.mxu0 0.0
    %99 = vmatprep.subr.mxu0 0.0
    %100 = vmatpush1.msra.mxu0 0.0
    %101 = vmatprep.subr.mxu0 0.0
    %102 = vmatpush1.msra.mxu0 0.0
    %103 = vmatprep.subr.mxu0 0.0
    %104 = vmatpush1.msra.mxu0 0.0
    %105 = vmatprep.subr.mxu0 0.0
    %106 = vmatpush1.msra.mxu0 0.0
    %107 = vmatprep.subr.mxu0 0.0
    %108 = vmatpush1.msra.mxu0 0.0
    %109 = vmatprep.subr.mxu0 0.0
    %110 = vmatpush1.msra.mxu0 0.0
    %111 = vmatprep.subr.mxu0 0.0
    %112 = vmatpush1.msra.mxu0 0.0
    %113 = vmatprep.subr.mxu0 0.0
    %114 = vmatpush1.msra.mxu0 0.0
    %115 = vmatprep.subr.mxu0 0.0
    %116 = vmatpush1.msra.mxu0 0.0
    %117 = vmatprep.subr.mxu0 0.0
    %118 = vmatpush1.msra.mxu0 0.0
    %119 = vmatprep.subr.mxu0 0.0
    %120 = vmatpush1.msra.mxu0 0.0
    %121 = vmatprep.subr.mxu0 0.0
    %122 = vmatpush1.msra.mxu0 0.0
    %123 = vmatprep.subr.mxu0 0.0
    %124 = vmatpush1.msra.mxu0 0.0
    %125 = vmatprep.subr.mxu0 0.0
    %126 = vmatpush1.msra.mxu0 0.0
    %127 = vmatprep.subr.mxu0 0.0
    %128 = vmatpush1.msra.mxu0 0.0
    %129 = vmatprep.subr.mxu0 0.0
    %130 = vmatpush1.msra.mxu0 0.0
    %131 = vmatprep.subr.mxu0 0.0
    %132 = vmatpush1.msra.mxu0 0.0
    %133 = vmatprep.subr.mxu0 0.0
    %134 = vmatpush1.msra.mxu0 0.0
    %135 = vmatprep.subr.mxu0 0.0
    %136 = vmatpush1.msra.mxu0 0.0
    %137 = vmatprep.subr.mxu0 0.0
    %138 = vmatpush1.msra.mxu0 0.0
    %139 = vmatprep.subr.mxu0 0.0
    %140 = vmatpush1.msra.mxu0 0.0
    %141 = vmatprep.subr.mxu0 0.0
    %142 = vmatpush1.msra.mxu0 0.0
    %143 = vmatprep.subr.mxu0 0.0
    %144 = vmatpush1.msra.mxu0 0.0
    %145 = vmatprep.subr.mxu0 0.0
    %146 = vmatpush1.msra.mxu0 0.0
    %147 = vmatprep.mubr.f32.mxu0 0.0
    %148 = vmatmul.mubr.f32.gmra.mrb[0].mxu0 %v77
    %v149 = vpop.f32.mrb[0].mxu0
    %v150 = vadd.f32 %v35, %v149
    %v151 = vpop.f32.mrb[0].mxu0
    %152 = vdwg.mxu0
    %v153 = vld [vmem:[%s1] sm:$0xff]
    %v154 = vld [vmem:[%s1 + $0x8] sm:$0xff]
    %v155 = vld [vmem:[%s1 + $0x10] sm:$0xff]
    %v156 = vld [vmem:[%s1 + $0x18] sm:$0xff]
    %v157 = vpack.c.bf16 %v150, %v150
    %v162 = vunpack.c.l.b16 %v36
    %v163 = vunpack.c.l.b16 %v37
    %v164 = vunpack.c.l.b16 %v38
    %v165 = vunpack.c.l.b16 %v39
    %v166 = vpack.c.b16 %v163, %v162
    %v167 = vpack.c.b16 %v165, %v164
    %vm170 = vcmask 261120
    %v172 = vsel %vm170, %v157, 0
    %174 = vmatprep.subr.bf16.mxu0 0
    %175 = vmatpush1.bf16.msra.mxu0 %v166
    %176 = vmatprep.subr.bf16.mxu0 0
    %177 = vmatpush1.bf16.msra.mxu0 %v167
    %178 = vmatprep.subr.bf16.mxu0 0
    %179 = vmatpush1.bf16.msra.mxu0 0
    %180 = vmatprep.subr.bf16.mxu0 0
    %181 = vmatpush1.bf16.msra.mxu0 0
    %182 = vmatprep.subr.bf16.mxu0 0
    %183 = vmatpush1.bf16.msra.mxu0 0
    %184 = vmatprep.subr.bf16.mxu0 0
    %185 = vmatpush1.bf16.msra.mxu0 0
    %186 = vmatprep.subr.bf16.mxu0 0
    %187 = vmatpush1.bf16.msra.mxu0 0
    %188 = vmatprep.subr.bf16.mxu0 0
    %189 = vmatpush1.bf16.msra.mxu0 0
    %190 = vmatprep.subr.bf16.mxu0 0
    %191 = vmatpush1.bf16.msra.mxu0 0
    %192 = vmatprep.subr.bf16.mxu0 0
    %193 = vmatpush1.bf16.msra.mxu0 0
    %194 = vmatprep.subr.bf16.mxu0 0
    %195 = vmatpush1.bf16.msra.mxu0 0
    %196 = vmatprep.subr.bf16.mxu0 0
    %197 = vmatpush1.bf16.msra.mxu0 0
    %198 = vmatprep.subr.bf16.mxu0 0
    %199 = vmatpush1.bf16.msra.mxu0 0
    %200 = vmatprep.subr.bf16.mxu0 0
    %201 = vmatpush1.bf16.msra.mxu0 0
    %202 = vmatprep.subr.bf16.mxu0 0
    %203 = vmatpush1.bf16.msra.mxu0 0
    %204 = vmatprep.subr.bf16.mxu0 0
    %205 = vmatpush1.bf16.msra.mxu0 0
    %206 = vmatprep.mubr.bf16.mxu0 0
    %207 = vmatmul.mubr.bf16.gmra.mrb[0].mxu0 %v172
    %v208 = vpop.f32.mrb[0].mxu0
    %v209 = vadd.f32 %v40, %v208
    %v210 = vpop.f32.mrb[0].mxu0
    %v211 = vpop.f32.mrb[0].mxu0
    %v212 = vpop.f32.mrb[0].mxu0
    %213 = vdwg.mxu0
    %v214 = vmax.f32 %v209, 0.0
    %v215 = vpack.c.bf16 %v214, %v214
    %v232 = vunpack.c.l.b16 %v41
    %v233 = vunpack.c.l.b16 %v42
    %v234 = vunpack.c.l.b16 %v43
    %v235 = vunpack.c.l.b16 %v44
    %v236 = vunpack.c.l.b16 %v45
    %v237 = vunpack.c.l.b16 %v46
    %v238 = vunpack.c.l.b16 %v47
    %v239 = vunpack.c.l.b16 %v48
    %v240 = vunpack.c.l.b16 %v49
    %v241 = vunpack.c.l.b16 %v50
    %v242 = vunpack.c.l.b16 %v51
    %v243 = vunpack.c.l.b16 %v52
    %v244 = vunpack.c.l.b16 %v53
    %v245 = vunpack.c.l.b16 %v54
    %v246 = vunpack.c.l.b16 %v55
    %v247 = vunpack.c.l.b16 %v56
    %v248 = vpack.c.b16 %v233, %v232
    %v249 = vpack.c.b16 %v235, %v234
    %v250 = vpack.c.b16 %v237, %v236
    %v251 = vpack.c.b16 %v239, %v238
    %v252 = vpack.c.b16 %v241, %v240
    %v253 = vpack.c.b16 %v243, %v242
    %v254 = vpack.c.b16 %v245, %v244
    %v255 = vpack.c.b16 %v247, %v246
    %264 = vmatprep.subr.bf16.mxu0 0
    %265 = vmatpush1.bf16.msra.mxu0 %v248
    %266 = vmatprep.subr.bf16.mxu0 0
    %267 = vmatpush1.bf16.msra.mxu0 %v249
    %268 = vmatprep.subr.bf16.mxu0 0
    %269 = vmatpush1.bf16.msra.mxu0 %v250
    %270 = vmatprep.subr.bf16.mxu0 0
    %271 = vmatpush1.bf16.msra.mxu0 %v251
    %272 = vmatprep.subr.bf16.mxu0 0
    %273 = vmatpush1.bf16.msra.mxu0 %v252
    %274 = vmatprep.subr.bf16.mxu0 0
    %275 = vmatpush1.bf16.msra.mxu0 %v253
    %276 = vmatprep.subr.bf16.mxu0 0
    %277 = vmatpush1.bf16.msra.mxu0 %v254
    %278 = vmatprep.subr.bf16.mxu0 0
    %279 = vmatpush1.bf16.msra.mxu0 %v255
    %280 = vmatprep.subr.bf16.mxu0 0
    %281 = vmatpush1.bf16.msra.mxu0 0
    %282 = vmatprep.subr.bf16.mxu0 0
    %283 = vmatpush1.bf16.msra.mxu0 0
    %284 = vmatprep.subr.bf16.mxu0 0
    %285 = vmatpush1.bf16.msra.mxu0 0
    %286 = vmatprep.subr.bf16.mxu0 0
    %287 = vmatpush1.bf16.msra.mxu0 0
    %288 = vmatprep.subr.bf16.mxu0 0
    %289 = vmatpush1.bf16.msra.mxu0 0
    %290 = vmatprep.subr.bf16.mxu0 0
    %291 = vmatpush1.bf16.msra.mxu0 0
    %292 = vmatprep.subr.bf16.mxu0 0
    %293 = vmatpush1.bf16.msra.mxu0 0
    %294 = vmatprep.subr.bf16.mxu0 0
    %295 = vmatpush1.bf16.msra.mxu0 0
    %296 = vmatprep.mubr.bf16.mxu0 0
    %297 = vmatmul.mubr.bf16.gmra.mrb[0].mxu0 %v215
    %v298 = vpop.f32.mrb[0].mxu0
    %v299 = vadd.f32 %v57, %v298
    %v300 = vpop.f32.mrb[0].mxu0
    %v301 = vpop.f32.mrb[0].mxu0
    %v302 = vpop.f32.mrb[0].mxu0
    %303 = vdwg.mxu0
    %v304 = vtanh.pop %v299
    %v305 = vmul.f32 %v304, %v153
    %v306 = vpack.c.bf16 %v305, %v305
    %v323 = vunpack.c.l.b16 %v58
    %v324 = vunpack.c.l.b16 %v59
    %v325 = vunpack.c.l.b16 %v60
    %v326 = vunpack.c.l.b16 %v61
    %v327 = vunpack.c.l.b16 %v62
    %v328 = vunpack.c.l.b16 %v63
    %v329 = vunpack.c.l.b16 %v64
    %v330 = vunpack.c.l.b16 %v65
    %v331 = vunpack.c.l.b16 %v66
    %v332 = vunpack.c.l.b16 %v67
    %v333 = vunpack.c.l.b16 %v68
    %v334 = vunpack.c.l.b16 %v69
    %v335 = vunpack.c.l.b16 %v70
    %v336 = vunpack.c.l.b16 %v71
    %v337 = vunpack.c.l.b16 %v72
    %v338 = vunpack.c.l.b16 %v73
    %v339 = vpack.c.b16 %v324, %v323
    %v340 = vpack.c.b16 %v326, %v325
    %v341 = vpack.c.b16 %v328, %v327
    %v342 = vpack.c.b16 %v330, %v329
    %v343 = vpack.c.b16 %v332, %v331
    %v344 = vpack.c.b16 %v334, %v333
    %v345 = vpack.c.b16 %v336, %v335
    %v346 = vpack.c.b16 %v338, %v337
    %355 = vmatprep.subr.bf16.mxu0 0
    %356 = vmatpush1.bf16.msra.mxu0 %v339
    %357 = vmatprep.subr.bf16.mxu0 0
    %358 = vmatpush1.bf16.msra.mxu0 %v340
    %359 = vmatprep.subr.bf16.mxu0 0
    %360 = vmatpush1.bf16.msra.mxu0 %v341
    %361 = vmatprep.subr.bf16.mxu0 0
    %362 = vmatpush1.bf16.msra.mxu0 %v342
    %363 = vmatprep.subr.bf16.mxu0 0
    %364 = vmatpush1.bf16.msra.mxu0 %v343
    %365 = vmatprep.subr.bf16.mxu0 0
    %366 = vmatpush1.bf16.msra.mxu0 %v344
    %367 = vmatprep.subr.bf16.mxu0 0
    %368 = vmatpush1.bf16.msra.mxu0 %v345
    %369 = vmatprep.subr.bf16.mxu0 0
    %370 = vmatpush1.bf16.msra.mxu0 %v346
    %371 = vmatprep.subr.bf16.mxu0 0
    %372 = vmatpush1.bf16.msra.mxu0 0
    %373 = vmatprep.subr.bf16.mxu0 0
    %374 = vmatpush1.bf16.msra.mxu0 0
    %375 = vmatprep.subr.bf16.mxu0 0
    %376 = vmatpush1.bf16.msra.mxu0 0
    %377 = vmatprep.subr.bf16.mxu0 0
    %378 = vmatpush1.bf16.msra.mxu0 0
    %379 = vmatprep.subr.bf16.mxu0 0
    %380 = vmatpush1.bf16.msra.mxu0 0
    %381 = vmatprep.subr.bf16.mxu0 0
    %382 = vmatpush1.bf16.msra.mxu0 0
    %383 = vmatprep.subr.bf16.mxu0 0
    %384 = vmatpush1.bf16.msra.mxu0 0
    %385 = vmatprep.subr.bf16.mxu0 0
    %386 = vmatpush1.bf16.msra.mxu0 0
    %387 = vmatprep.mubr.bf16.mxu0 0
    %388 = vmatmul.mubr.bf16.gmra.mrb[0].mxu0 %v306
    %v389 = vpop.f32.mrb[0].mxu0
    %v390 = vadd.f32 0.0, %v389
    %v391 = vpop.f32.mrb[0].mxu0
    %v392 = vpop.f32.mrb[0].mxu0
    %v393 = vpop.f32.mrb[0].mxu0
    %394 = vdwg.mxu0
    %v395 = vmul.f32 %v390, 0.33333334
    %v396 = vadd.f32 %v150, %v395
    %v397 = vpack.c.bf16 %v396, %v396
    %v399 = vsel %vm170, %v397, 0
    %401 = vmatprep.subr.bf16.mxu0 0
    %402 = vmatpush1.bf16.msra.mxu0 %v166
    %403 = vmatprep.subr.bf16.mxu0 0
    %404 = vmatpush1.bf16.msra.mxu0 %v167
    %405 = vmatprep.subr.bf16.mxu0 0
    %406 = vmatpush1.bf16.msra.mxu0 0
    %407 = vmatprep.subr.bf16.mxu0 0
    %408 = vmatpush1.bf16.msra.mxu0 0
    %409 = vmatprep.subr.bf16.mxu0 0
    %410 = vmatpush1.bf16.msra.mxu0 0
    %411 = vmatprep.subr.bf16.mxu0 0
    %412 = vmatpush1.bf16.msra.mxu0 0
    %413 = vmatprep.subr.bf16.mxu0 0
    %414 = vmatpush1.bf16.msra.mxu0 0
    %415 = vmatprep.subr.bf16.mxu0 0
    %416 = vmatpush1.bf16.msra.mxu0 0
    %417 = vmatprep.subr.bf16.mxu0 0
    %418 = vmatpush1.bf16.msra.mxu0 0
    %419 = vmatprep.subr.bf16.mxu0 0
    %420 = vmatpush1.bf16.msra.mxu0 0
    %421 = vmatprep.subr.bf16.mxu0 0
    %422 = vmatpush1.bf16.msra.mxu0 0
    %423 = vmatprep.subr.bf16.mxu0 0
    %424 = vmatpush1.bf16.msra.mxu0 0
    %425 = vmatprep.subr.bf16.mxu0 0
    %426 = vmatpush1.bf16.msra.mxu0 0
    %427 = vmatprep.subr.bf16.mxu0 0
    %428 = vmatpush1.bf16.msra.mxu0 0
    %429 = vmatprep.subr.bf16.mxu0 0
    %430 = vmatpush1.bf16.msra.mxu0 0
    %431 = vmatprep.subr.bf16.mxu0 0
    %432 = vmatpush1.bf16.msra.mxu0 0
    %433 = vmatprep.mubr.bf16.mxu0 0
    %434 = vmatmul.mubr.bf16.gmra.mrb[0].mxu0 %v399
    %v435 = vpop.f32.mrb[0].mxu0
    %v436 = vadd.f32 %v40, %v435
    %v437 = vpop.f32.mrb[0].mxu0
    %v438 = vpop.f32.mrb[0].mxu0
    %v439 = vpop.f32.mrb[0].mxu0
    %440 = vdwg.mxu0
    %v441 = vmax.f32 %v436, 0.0
    %v442 = vpack.c.bf16 %v441, %v441
    %443 = vmatprep.subr.bf16.mxu0 0
    %444 = vmatpush1.bf16.msra.mxu0 %v248
    %445 = vmatprep.subr.bf16.mxu0 0
    %446 = vmatpush1.bf16.msra.mxu0 %v249
    %447 = vmatprep.subr.bf16.mxu0 0
    %448 = vmatpush1.bf16.msra.mxu0 %v250
    %449 = vmatprep.subr.bf16.mxu0 0
    %450 = vmatpush1.bf16.msra.mxu0 %v251
    %451 = vmatprep.subr.bf16.mxu0 0
    %452 = vmatpush1.bf16.msra.mxu0 %v252
    %453 = vmatprep.subr.bf16.mxu0 0
    %454 = vmatpush1.bf16.msra.mxu0 %v253
    %455 = vmatprep.subr.bf16.mxu0 0
    %456 = vmatpush1.bf16.msra.mxu0 %v254
    %457 = vmatprep.subr.bf16.mxu0 0
    %458 = vmatpush1.bf16.msra.mxu0 %v255
    %459 = vmatprep.subr.bf16.mxu0 0
    %460 = vmatpush1.bf16.msra.mxu0 0
    %461 = vmatprep.subr.bf16.mxu0 0
    %462 = vmatpush1.bf16.msra.mxu0 0
    %463 = vmatprep.subr.bf16.mxu0 0
    %464 = vmatpush1.bf16.msra.mxu0 0
    %465 = vmatprep.subr.bf16.mxu0 0
    %466 = vmatpush1.bf16.msra.mxu0 0
    %467 = vmatprep.subr.bf16.mxu0 0
    %468 = vmatpush1.bf16.msra.mxu0 0
    %469 = vmatprep.subr.bf16.mxu0 0
    %470 = vmatpush1.bf16.msra.mxu0 0
    %471 = vmatprep.subr.bf16.mxu0 0
    %472 = vmatpush1.bf16.msra.mxu0 0
    %473 = vmatprep.subr.bf16.mxu0 0
    %474 = vmatpush1.bf16.msra.mxu0 0
    %475 = vmatprep.mubr.bf16.mxu0 0
    %476 = vmatmul.mubr.bf16.gmra.mrb[0].mxu0 %v442
    %v477 = vpop.f32.mrb[0].mxu0
    %v478 = vadd.f32 %v57, %v477
    %v479 = vpop.f32.mrb[0].mxu0
    %v480 = vpop.f32.mrb[0].mxu0
    %v481 = vpop.f32.mrb[0].mxu0
    %482 = vdwg.mxu0
    %v483 = vtanh.pop %v478
    %v484 = vmul.f32 %v483, %v154
    %v485 = vpack.c.bf16 %v484, %v484
    %486 = vmatprep.subr.bf16.mxu0 0
    %487 = vmatpush1.bf16.msra.mxu0 %v339
    %488 = vmatprep.subr.bf16.mxu0 0
    %489 = vmatpush1.bf16.msra.mxu0 %v340
    %490 = vmatprep.subr.bf16.mxu0 0
    %491 = vmatpush1.bf16.msra.mxu0 %v341
    %492 = vmatprep.subr.bf16.mxu0 0
    %493 = vmatpush1.bf16.msra.mxu0 %v342
    %494 = vmatprep.subr.bf16.mxu0 0
    %495 = vmatpush1.bf16.msra.mxu0 %v343
    %496 = vmatprep.subr.bf16.mxu0 0
    %497 = vmatpush1.bf16.msra.mxu0 %v344
    %498 = vmatprep.subr.bf16.mxu0 0
    %499 = vmatpush1.bf16.msra.mxu0 %v345
    %500 = vmatprep.subr.bf16.mxu0 0
    %501 = vmatpush1.bf16.msra.mxu0 %v346
    %502 = vmatprep.subr.bf16.mxu0 0
    %503 = vmatpush1.bf16.msra.mxu0 0
    %504 = vmatprep.subr.bf16.mxu0 0
    %505 = vmatpush1.bf16.msra.mxu0 0
    %506 = vmatprep.subr.bf16.mxu0 0
    %507 = vmatpush1.bf16.msra.mxu0 0
    %508 = vmatprep.subr.bf16.mxu0 0
    %509 = vmatpush1.bf16.msra.mxu0 0
    %510 = vmatprep.subr.bf16.mxu0 0
    %511 = vmatpush1.bf16.msra.mxu0 0
    %512 = vmatprep.subr.bf16.mxu0 0
    %513 = vmatpush1.bf16.msra.mxu0 0
    %514 = vmatprep.subr.bf16.mxu0 0
    %515 = vmatpush1.bf16.msra.mxu0 0
    %516 = vmatprep.subr.bf16.mxu0 0
    %517 = vmatpush1.bf16.msra.mxu0 0
    %518 = vmatprep.mubr.bf16.mxu0 0
    %519 = vmatmul.mubr.bf16.gmra.mrb[0].mxu0 %v485
    %v520 = vpop.f32.mrb[0].mxu0
    %v521 = vadd.f32 0.0, %v520
    %v522 = vpop.f32.mrb[0].mxu0
    %v523 = vpop.f32.mrb[0].mxu0
    %v524 = vpop.f32.mrb[0].mxu0
    %525 = vdwg.mxu0
    %v526 = vrcp.pop 3.0
    %v527 = vmul.f32 %v390, %v526
    %v528 = vsub.f32 %v521, %v527
    %v529 = vadd.f32 %v150, %v528
    %v530 = vpack.c.bf16 %v529, %v529
    %v532 = vsel %vm170, %v530, 0
    %534 = vmatprep.subr.bf16.mxu0 0
    %535 = vmatpush1.bf16.msra.mxu0 %v166
    %536 = vmatprep.subr.bf16.mxu0 0
    %537 = vmatpush1.bf16.msra.mxu0 %v167
    %538 = vmatprep.subr.bf16.mxu0 0
    %539 = vmatpush1.bf16.msra.mxu0 0
    %540 = vmatprep.subr.bf16.mxu0 0
    %541 = vmatpush1.bf16.msra.mxu0 0
    %542 = vmatprep.subr.bf16.mxu0 0
    %543 = vmatpush1.bf16.msra.mxu0 0
    %544 = vmatprep.subr.bf16.mxu0 0
    %545 = vmatpush1.bf16.msra.mxu0 0
    %546 = vmatprep.subr.bf16.mxu0 0
    %547 = vmatpush1.bf16.msra.mxu0 0
    %548 = vmatprep.subr.bf16.mxu0 0
    %549 = vmatpush1.bf16.msra.mxu0 0
    %550 = vmatprep.subr.bf16.mxu0 0
    %551 = vmatpush1.bf16.msra.mxu0 0
    %552 = vmatprep.subr.bf16.mxu0 0
    %553 = vmatpush1.bf16.msra.mxu0 0
    %554 = vmatprep.subr.bf16.mxu0 0
    %555 = vmatpush1.bf16.msra.mxu0 0
    %556 = vmatprep.subr.bf16.mxu0 0
    %557 = vmatpush1.bf16.msra.mxu0 0
    %558 = vmatprep.subr.bf16.mxu0 0
    %559 = vmatpush1.bf16.msra.mxu0 0
    %560 = vmatprep.subr.bf16.mxu0 0
    %561 = vmatpush1.bf16.msra.mxu0 0
    %562 = vmatprep.subr.bf16.mxu0 0
    %563 = vmatpush1.bf16.msra.mxu0 0
    %564 = vmatprep.subr.bf16.mxu0 0
    %565 = vmatpush1.bf16.msra.mxu0 0
    %566 = vmatprep.mubr.bf16.mxu0 0
    %567 = vmatmul.mubr.bf16.gmra.mrb[0].mxu0 %v532
    %v568 = vpop.f32.mrb[0].mxu0
    %v569 = vadd.f32 %v40, %v568
    %v570 = vpop.f32.mrb[0].mxu0
    %v571 = vpop.f32.mrb[0].mxu0
    %v572 = vpop.f32.mrb[0].mxu0
    %573 = vdwg.mxu0
    %v574 = vmax.f32 %v569, 0.0
    %v575 = vpack.c.bf16 %v574, %v574
    %576 = vmatprep.subr.bf16.mxu0 0
    %577 = vmatpush1.bf16.msra.mxu0 %v248
    %578 = vmatprep.subr.bf16.mxu0 0
    %579 = vmatpush1.bf16.msra.mxu0 %v249
    %580 = vmatprep.subr.bf16.mxu0 0
    %581 = vmatpush1.bf16.msra.mxu0 %v250
    %582 = vmatprep.subr.bf16.mxu0 0
    %583 = vmatpush1.bf16.msra.mxu0 %v251
    %584 = vmatprep.subr.bf16.mxu0 0
    %585 = vmatpush1.bf16.msra.mxu0 %v252
    %586 = vmatprep.subr.bf16.mxu0 0
    %587 = vmatpush1.bf16.msra.mxu0 %v253
    %588 = vmatprep.subr.bf16.mxu0 0
    %589 = vmatpush1.bf16.msra.mxu0 %v254
    %590 = vmatprep.subr.bf16.mxu0 0
    %591 = vmatpush1.bf16.msra.mxu0 %v255
    %592 = vmatprep.subr.bf16.mxu0 0
    %593 = vmatpush1.bf16.msra.mxu0 0
    %594 = vmatprep.subr.bf16.mxu0 0
    %595 = vmatpush1.bf16.msra.mxu0 0
    %596 = vmatprep.subr.bf16.mxu0 0
    %597 = vmatpush1.bf16.msra.mxu0 0
    %598 = vmatprep.subr.bf16.mxu0 0
    %599 = vmatpush1.bf16.msra.mxu0 0
    %600 = vmatprep.subr.bf16.mxu0 0
    %601 = vmatpush1.bf16.msra.mxu0 0
    %602 = vmatprep.subr.bf16.mxu0 0
    %603 = vmatpush1.bf16.msra.mxu0 0
    %604 = vmatprep.subr.bf16.mxu0 0
    %605 = vmatpush1.bf16.msra.mxu0 0
    %606 = vmatprep.subr.bf16.mxu0 0
    %607 = vmatpush1.bf16.msra.mxu0 0
    %608 = vmatprep.mubr.bf16.mxu0 0
    %609 = vmatmul.mubr.bf16.gmra.mrb[0].mxu0 %v575
    %v610 = vpop.f32.mrb[0].mxu0
    %v611 = vadd.f32 %v57, %v610
    %v612 = vpop.f32.mrb[0].mxu0
    %v613 = vpop.f32.mrb[0].mxu0
    %v614 = vpop.f32.mrb[0].mxu0
    %615 = vdwg.mxu0
    %v616 = vtanh.pop %v611
    %v617 = vmul.f32 %v616, %v155
    %v618 = vpack.c.bf16 %v617, %v617
    %619 = vmatprep.subr.bf16.mxu0 0
    %620 = vmatpush1.bf16.msra.mxu0 %v339
    %621 = vmatprep.subr.bf16.mxu0 0
    %622 = vmatpush1.bf16.msra.mxu0 %v340
    %623 = vmatprep.subr.bf16.mxu0 0
    %624 = vmatpush1.bf16.msra.mxu0 %v341
    %625 = vmatprep.subr.bf16.mxu0 0
    %626 = vmatpush1.bf16.msra.mxu0 %v342
    %627 = vmatprep.subr.bf16.mxu0 0
    %628 = vmatpush1.bf16.msra.mxu0 %v343
    %629 = vmatprep.subr.bf16.mxu0 0
    %630 = vmatpush1.bf16.msra.mxu0 %v344
    %631 = vmatprep.subr.bf16.mxu0 0
    %632 = vmatpush1.bf16.msra.mxu0 %v345
    %633 = vmatprep.subr.bf16.mxu0 0
    %634 = vmatpush1.bf16.msra.mxu0 %v346
    %635 = vmatprep.subr.bf16.mxu0 0
    %636 = vmatpush1.bf16.msra.mxu0 0
    %637 = vmatprep.subr.bf16.mxu0 0
    %638 = vmatpush1.bf16.msra.mxu0 0
    %639 = vmatprep.subr.bf16.mxu0 0
    %640 = vmatpush1.bf16.msra.mxu0 0
    %641 = vmatprep.subr.bf16.mxu0 0
    %642 = vmatpush1.bf16.msra.mxu0 0
    %643 = vmatprep.subr.bf16.mxu0 0
    %644 = vmatpush1.bf16.msra.mxu0 0
    %645 = vmatprep.subr.bf16.mxu0 0
    %646 = vmatpush1.bf16.msra.mxu0 0
    %647 = vmatprep.subr.bf16.mxu0 0
    %648 = vmatpush1.bf16.msra.mxu0 0
    %649 = vmatprep.subr.bf16.mxu0 0
    %650 = vmatpush1.bf16.msra.mxu0 0
    %651 = vmatprep.mubr.bf16.mxu0 0
    %652 = vmatmul.mubr.bf16.gmra.mrb[0].mxu0 %v618
    %v653 = vpop.f32.mrb[0].mxu0
    %v654 = vadd.f32 0.0, %v653
    %v655 = vpop.f32.mrb[0].mxu0
    %v656 = vpop.f32.mrb[0].mxu0
    %v657 = vpop.f32.mrb[0].mxu0
    %658 = vdwg.mxu0
    %v659 = vsub.f32 %v390, %v521
    %v660 = vadd.f32 %v659, %v654
    %v661 = vadd.f32 %v150, %v660
    %v662 = vpack.c.bf16 %v661, %v661
    %v664 = vsel %vm170, %v662, 0
    %666 = vmatprep.subr.bf16.mxu0 0
    %667 = vmatpush1.bf16.msra.mxu0 %v166
    %668 = vmatprep.subr.bf16.mxu0 0
    %669 = vmatpush1.bf16.msra.mxu0 %v167
    %670 = vmatprep.subr.bf16.mxu0 0
    %671 = vmatpush1.bf16.msra.mxu0 0
    %672 = vmatprep.subr.bf16.mxu0 0
    %673 = vmatpush1.bf16.msra.mxu0 0
    %674 = vmatprep.subr.bf16.mxu0 0
    %675 = vmatpush1.bf16.msra.mxu0 0
    %676 = vmatprep.subr.bf16.mxu0 0
    %677 = vmatpush1.bf16.msra.mxu0 0
    %678 = vmatprep.subr.bf16.mxu0 0
    %679 = vmatpush1.bf16.msra.mxu0 0
    %680 = vmatprep.subr.bf16.mxu0 0
    %681 = vmatpush1.bf16.msra.mxu0 0
    %682 = vmatprep.subr.bf16.mxu0 0
    %683 = vmatpush1.bf16.msra.mxu0 0
    %684 = vmatprep.subr.bf16.mxu0 0
    %685 = vmatpush1.bf16.msra.mxu0 0
    %686 = vmatprep.subr.bf16.mxu0 0
    %687 = vmatpush1.bf16.msra.mxu0 0
    %688 = vmatprep.subr.bf16.mxu0 0
    %689 = vmatpush1.bf16.msra.mxu0 0
    %690 = vmatprep.subr.bf16.mxu0 0
    %691 = vmatpush1.bf16.msra.mxu0 0
    %692 = vmatprep.subr.bf16.mxu0 0
    %693 = vmatpush1.bf16.msra.mxu0 0
    %694 = vmatprep.subr.bf16.mxu0 0
    %695 = vmatpush1.bf16.msra.mxu0 0
    %696 = vmatprep.subr.bf16.mxu0 0
    %697 = vmatpush1.bf16.msra.mxu0 0
    %698 = vmatprep.mubr.bf16.mxu0 0
    %699 = vmatmul.mubr.bf16.gmra.mrb[0].mxu0 %v664
    %v700 = vpop.f32.mrb[0].mxu0
    %v701 = vadd.f32 %v40, %v700
    %v702 = vpop.f32.mrb[0].mxu0
    %v703 = vpop.f32.mrb[0].mxu0
    %v704 = vpop.f32.mrb[0].mxu0
    %705 = vdwg.mxu0
    %v706 = vmax.f32 %v701, 0.0
    %v707 = vpack.c.bf16 %v706, %v706
    %708 = vmatprep.subr.bf16.mxu0 0
    %709 = vmatpush1.bf16.msra.mxu0 %v248
    %710 = vmatprep.subr.bf16.mxu0 0
    %711 = vmatpush1.bf16.msra.mxu0 %v249
    %712 = vmatprep.subr.bf16.mxu0 0
    %713 = vmatpush1.bf16.msra.mxu0 %v250
    %714 = vmatprep.subr.bf16.mxu0 0
    %715 = vmatpush1.bf16.msra.mxu0 %v251
    %716 = vmatprep.subr.bf16.mxu0 0
    %717 = vmatpush1.bf16.msra.mxu0 %v252
    %718 = vmatprep.subr.bf16.mxu0 0
    %719 = vmatpush1.bf16.msra.mxu0 %v253
    %720 = vmatprep.subr.bf16.mxu0 0
    %721 = vmatpush1.bf16.msra.mxu0 %v254
    %722 = vmatprep.subr.bf16.mxu0 0
    %723 = vmatpush1.bf16.msra.mxu0 %v255
    %724 = vmatprep.subr.bf16.mxu0 0
    %725 = vmatpush1.bf16.msra.mxu0 0
    %726 = vmatprep.subr.bf16.mxu0 0
    %727 = vmatpush1.bf16.msra.mxu0 0
    %728 = vmatprep.subr.bf16.mxu0 0
    %729 = vmatpush1.bf16.msra.mxu0 0
    %730 = vmatprep.subr.bf16.mxu0 0
    %731 = vmatpush1.bf16.msra.mxu0 0
    %732 = vmatprep.subr.bf16.mxu0 0
    %733 = vmatpush1.bf16.msra.mxu0 0
    %734 = vmatprep.subr.bf16.mxu0 0
    %735 = vmatpush1.bf16.msra.mxu0 0
    %736 = vmatprep.subr.bf16.mxu0 0
    %737 = vmatpush1.bf16.msra.mxu0 0
    %738 = vmatprep.subr.bf16.mxu0 0
    %739 = vmatpush1.bf16.msra.mxu0 0
    %740 = vmatprep.mubr.bf16.mxu0 0
    %741 = vmatmul.mubr.bf16.gmra.mrb[0].mxu0 %v707
    %v742 = vpop.f32.mrb[0].mxu0
    %v743 = vadd.f32 %v57, %v742
    %v744 = vpop.f32.mrb[0].mxu0
    %v745 = vpop.f32.mrb[0].mxu0
    %v746 = vpop.f32.mrb[0].mxu0
    %747 = vdwg.mxu0
    %v748 = vtanh.pop %v743
    %v749 = vmul.f32 %v748, %v156
    %v750 = vpack.c.bf16 %v749, %v749
    %751 = vmatprep.subr.bf16.mxu0 0
    %752 = vmatpush1.bf16.msra.mxu0 %v339
    %753 = vmatprep.subr.bf16.mxu0 0
    %754 = vmatpush1.bf16.msra.mxu0 %v340
    %755 = vmatprep.subr.bf16.mxu0 0
    %756 = vmatpush1.bf16.msra.mxu0 %v341
    %757 = vmatprep.subr.bf16.mxu0 0
    %758 = vmatpush1.bf16.msra.mxu0 %v342
    %759 = vmatprep.subr.bf16.mxu0 0
    %760 = vmatpush1.bf16.msra.mxu0 %v343
    %761 = vmatprep.subr.bf16.mxu0 0
    %762 = vmatpush1.bf16.msra.mxu0 %v344
    %763 = vmatprep.subr.bf16.mxu0 0
    %764 = vmatpush1.bf16.msra.mxu0 %v345
    %765 = vmatprep.subr.bf16.mxu0 0
    %766 = vmatpush1.bf16.msra.mxu0 %v346
    %767 = vmatprep.subr.bf16.mxu0 0
    %768 = vmatpush1.bf16.msra.mxu0 0
    %769 = vmatprep.subr.bf16.mxu0 0
    %770 = vmatpush1.bf16.msra.mxu0 0
    %771 = vmatprep.subr.bf16.mxu0 0
    %772 = vmatpush1.bf16.msra.mxu0 0
    %773 = vmatprep.subr.bf16.mxu0 0
    %774 = vmatpush1.bf16.msra.mxu0 0
    %775 = vmatprep.subr.bf16.mxu0 0
    %776 = vmatpush1.bf16.msra.mxu0 0
    %777 = vmatprep.subr.bf16.mxu0 0
    %778 = vmatpush1.bf16.msra.mxu0 0
    %779 = vmatprep.subr.bf16.mxu0 0
    %780 = vmatpush1.bf16.msra.mxu0 0
    %781 = vmatprep.subr.bf16.mxu0 0
    %782 = vmatpush1.bf16.msra.mxu0 0
    %783 = vmatprep.mubr.bf16.mxu0 0
    %784 = vmatmul.mubr.bf16.gmra.mrb[0].mxu0 %v750
    %v785 = vpop.f32.mrb[0].mxu0
    %v786 = vadd.f32 0.0, %v785
    %v787 = vpop.f32.mrb[0].mxu0
    %v788 = vpop.f32.mrb[0].mxu0
    %v789 = vpop.f32.mrb[0].mxu0
    %790 = vdwg.mxu0
    %v791 = vadd.f32 %v521, %v654
    %v792 = vmul.f32 %v791, 3.0
    %v793 = vadd.f32 %v390, %v792
    %v794 = vadd.f32 %v793, %v786
    %v795 = vmul.f32 %v794, 0.125
    %v796 = vadd.f32 %v150, %v795
    %s797 = scalar_lea.vmem %s1, 32
    %v798 = vld [vmem:[%s797] sm:$0xff]
    %v799 = vld [vmem:[%s797 + $0x8] sm:$0xff]
    %v800 = vld [vmem:[%s797 + $0x10] sm:$0xff]
    %v801 = vld [vmem:[%s797 + $0x18] sm:$0xff]
    %v802 = vpack.c.bf16 %v796, %v796
    %v804 = vsel %vm170, %v802, 0
    %806 = vmatprep.subr.bf16.mxu0 0
    %807 = vmatpush1.bf16.msra.mxu0 %v166
    %808 = vmatprep.subr.bf16.mxu0 0
    %809 = vmatpush1.bf16.msra.mxu0 %v167
    %810 = vmatprep.subr.bf16.mxu0 0
    %811 = vmatpush1.bf16.msra.mxu0 0
    %812 = vmatprep.subr.bf16.mxu0 0
    %813 = vmatpush1.bf16.msra.mxu0 0
    %814 = vmatprep.subr.bf16.mxu0 0
    %815 = vmatpush1.bf16.msra.mxu0 0
    %816 = vmatprep.subr.bf16.mxu0 0
    %817 = vmatpush1.bf16.msra.mxu0 0
    %818 = vmatprep.subr.bf16.mxu0 0
    %819 = vmatpush1.bf16.msra.mxu0 0
    %820 = vmatprep.subr.bf16.mxu0 0
    %821 = vmatpush1.bf16.msra.mxu0 0
    %822 = vmatprep.subr.bf16.mxu0 0
    %823 = vmatpush1.bf16.msra.mxu0 0
    %824 = vmatprep.subr.bf16.mxu0 0
    %825 = vmatpush1.bf16.msra.mxu0 0
    %826 = vmatprep.subr.bf16.mxu0 0
    %827 = vmatpush1.bf16.msra.mxu0 0
    %828 = vmatprep.subr.bf16.mxu0 0
    %829 = vmatpush1.bf16.msra.mxu0 0
    %830 = vmatprep.subr.bf16.mxu0 0
    %831 = vmatpush1.bf16.msra.mxu0 0
    %832 = vmatprep.subr.bf16.mxu0 0
    %833 = vmatpush1.bf16.msra.mxu0 0
    %834 = vmatprep.subr.bf16.mxu0 0
    %835 = vmatpush1.bf16.msra.mxu0 0
    %836 = vmatprep.subr.bf16.mxu0 0
    %837 = vmatpush1.bf16.msra.mxu0 0
    %838 = vmatprep.mubr.bf16.mxu0 0
    %839 = vmatmul.mubr.bf16.gmra.mrb[0].mxu0 %v804
    %v840 = vpop.f32.mrb[0].mxu0
    %v841 = vadd.f32 %v40, %v840
    %v842 = vpop.f32.mrb[0].mxu0
    %v843 = vpop.f32.mrb[0].mxu0
    %v844 = vpop.f32.mrb[0].mxu0
    %845 = vdwg.mxu0
    %v846 = vmax.f32 %v841, 0.0
    %v847 = vpack.c.bf16 %v846, %v846
    %848 = vmatprep.subr.bf16.mxu0 0
    %849 = vmatpush1.bf16.msra.mxu0 %v248
    %850 = vmatprep.subr.bf16.mxu0 0
    %851 = vmatpush1.bf16.msra.mxu0 %v249
    %852 = vmatprep.subr.bf16.mxu0 0
    %853 = vmatpush1.bf16.msra.mxu0 %v250
    %854 = vmatprep.subr.bf16.mxu0 0
    %855 = vmatpush1.bf16.msra.mxu0 %v251
    %856 = vmatprep.subr.bf16.mxu0 0
    %857 = vmatpush1.bf16.msra.mxu0 %v252
    %858 = vmatprep.subr.bf16.mxu0 0
    %859 = vmatpush1.bf16.msra.mxu0 %v253
    %860 = vmatprep.subr.bf16.mxu0 0
    %861 = vmatpush1.bf16.msra.mxu0 %v254
    %862 = vmatprep.subr.bf16.mxu0 0
    %863 = vmatpush1.bf16.msra.mxu0 %v255
    %864 = vmatprep.subr.bf16.mxu0 0
    %865 = vmatpush1.bf16.msra.mxu0 0
    %866 = vmatprep.subr.bf16.mxu0 0
    %867 = vmatpush1.bf16.msra.mxu0 0
    %868 = vmatprep.subr.bf16.mxu0 0
    %869 = vmatpush1.bf16.msra.mxu0 0
    %870 = vmatprep.subr.bf16.mxu0 0
    %871 = vmatpush1.bf16.msra.mxu0 0
    %872 = vmatprep.subr.bf16.mxu0 0
    %873 = vmatpush1.bf16.msra.mxu0 0
    %874 = vmatprep.subr.bf16.mxu0 0
    %875 = vmatpush1.bf16.msra.mxu0 0
    %876 = vmatprep.subr.bf16.mxu0 0
    %877 = vmatpush1.bf16.msra.mxu0 0
    %878 = vmatprep.subr.bf16.mxu0 0
    %879 = vmatpush1.bf16.msra.mxu0 0
    %880 = vmatprep.mubr.bf16.mxu0 0
    %881 = vmatmul.mubr.bf16.gmra.mrb[0].mxu0 %v847
    %v882 = vpop.f32.mrb[0].mxu0
    %v883 = vadd.f32 %v57, %v882
    %v884 = vpop.f32.mrb[0].mxu0
    %v885 = vpop.f32.mrb[0].mxu0
    %v886 = vpop.f32.mrb[0].mxu0
    %887 = vdwg.mxu0
    %v888 = vtanh.pop %v883
    %v889 = vmul.f32 %v888, %v798
    %v890 = vpack.c.bf16 %v889, %v889
    %891 = vmatprep.subr.bf16.mxu0 0
    %892 = vmatpush1.bf16.msra.mxu0 %v339
    %893 = vmatprep.subr.bf16.mxu0 0
    %894 = vmatpush1.bf16.msra.mxu0 %v340
    %895 = vmatprep.subr.bf16.mxu0 0
    %896 = vmatpush1.bf16.msra.mxu0 %v341
    %897 = vmatprep.subr.bf16.mxu0 0
    %898 = vmatpush1.bf16.msra.mxu0 %v342
    %899 = vmatprep.subr.bf16.mxu0 0
    %900 = vmatpush1.bf16.msra.mxu0 %v343
    %901 = vmatprep.subr.bf16.mxu0 0
    %902 = vmatpush1.bf16.msra.mxu0 %v344
    %903 = vmatprep.subr.bf16.mxu0 0
    %904 = vmatpush1.bf16.msra.mxu0 %v345
    %905 = vmatprep.subr.bf16.mxu0 0
    %906 = vmatpush1.bf16.msra.mxu0 %v346
    %907 = vmatprep.subr.bf16.mxu0 0
    %908 = vmatpush1.bf16.msra.mxu0 0
    %909 = vmatprep.subr.bf16.mxu0 0
    %910 = vmatpush1.bf16.msra.mxu0 0
    %911 = vmatprep.subr.bf16.mxu0 0
    %912 = vmatpush1.bf16.msra.mxu0 0
    %913 = vmatprep.subr.bf16.mxu0 0
    %914 = vmatpush1.bf16.msra.mxu0 0
    %915 = vmatprep.subr.bf16.mxu0 0
    %916 = vmatpush1.bf16.msra.mxu0 0
    %917 = vmatprep.subr.bf16.mxu0 0
    %918 = vmatpush1.bf16.msra.mxu0 0
    %919 = vmatprep.subr.bf16.mxu0 0
    %920 = vmatpush1.bf16.msra.mxu0 0
    %921 = vmatprep.subr.bf16.mxu0 0
    %922 = vmatpush1.bf16.msra.mxu0 0
    %923 = vmatprep.mubr.bf16.mxu0 0
    %924 = vmatmul.mubr.bf16.gmra.mrb[0].mxu0 %v890
    %v925 = vpop.f32.mrb[0].mxu0
    %v926 = vadd.f32 0.0, %v925
    %v927 = vpop.f32.mrb[0].mxu0
    %v928 = vpop.f32.mrb[0].mxu0
    %v929 = vpop.f32.mrb[0].mxu0
    %930 = vdwg.mxu0
    %v931 = vmul.f32 %v926, 0.33333334
    %v932 = vadd.f32 %v796, %v931
    %v933 = vpack.c.bf16 %v932, %v932
    %v935 = vsel %vm170, %v933, 0
    %937 = vmatprep.subr.bf16.mxu0 0
    %938 = vmatpush1.bf16.msra.mxu0 %v166
    %939 = vmatprep.subr.bf16.mxu0 0
    %940 = vmatpush1.bf16.msra.mxu0 %v167
    %941 = vmatprep.subr.bf16.mxu0 0
    %942 = vmatpush1.bf16.msra.mxu0 0
    %943 = vmatprep.subr.bf16.mxu0 0
    %944 = vmatpush1.bf16.msra.mxu0 0
    %945 = vmatprep.subr.bf16.mxu0 0
    %946 = vmatpush1.bf16.msra.mxu0 0
    %947 = vmatprep.subr.bf16.mxu0 0
    %948 = vmatpush1.bf16.msra.mxu0 0
    %949 = vmatprep.subr.bf16.mxu0 0
    %950 = vmatpush1.bf16.msra.mxu0 0
    %951 = vmatprep.subr.bf16.mxu0 0
    %952 = vmatpush1.bf16.msra.mxu0 0
    %953 = vmatprep.subr.bf16.mxu0 0
    %954 = vmatpush1.bf16.msra.mxu0 0
    %955 = vmatprep.subr.bf16.mxu0 0
    %956 = vmatpush1.bf16.msra.mxu0 0
    %957 = vmatprep.subr.bf16.mxu0 0
    %958 = vmatpush1.bf16.msra.mxu0 0
    %959 = vmatprep.subr.bf16.mxu0 0
    %960 = vmatpush1.bf16.msra.mxu0 0
    %961 = vmatprep.subr.bf16.mxu0 0
    %962 = vmatpush1.bf16.msra.mxu0 0
    %963 = vmatprep.subr.bf16.mxu0 0
    %964 = vmatpush1.bf16.msra.mxu0 0
    %965 = vmatprep.subr.bf16.mxu0 0
    %966 = vmatpush1.bf16.msra.mxu0 0
    %967 = vmatprep.subr.bf16.mxu0 0
    %968 = vmatpush1.bf16.msra.mxu0 0
    %969 = vmatprep.mubr.bf16.mxu0 0
    %970 = vmatmul.mubr.bf16.gmra.mrb[0].mxu0 %v935
    %v971 = vpop.f32.mrb[0].mxu0
    %v972 = vadd.f32 %v40, %v971
    %v973 = vpop.f32.mrb[0].mxu0
    %v974 = vpop.f32.mrb[0].mxu0
    %v975 = vpop.f32.mrb[0].mxu0
    %976 = vdwg.mxu0
    %v977 = vmax.f32 %v972, 0.0
    %v978 = vpack.c.bf16 %v977, %v977
    %979 = vmatprep.subr.bf16.mxu0 0
    %980 = vmatpush1.bf16.msra.mxu0 %v248
    %981 = vmatprep.subr.bf16.mxu0 0
    %982 = vmatpush1.bf16.msra.mxu0 %v249
    %983 = vmatprep.subr.bf16.mxu0 0
    %984 = vmatpush1.bf16.msra.mxu0 %v250
    %985 = vmatprep.subr.bf16.mxu0 0
    %986 = vmatpush1.bf16.msra.mxu0 %v251
    %987 = vmatprep.subr.bf16.mxu0 0
    %988 = vmatpush1.bf16.msra.mxu0 %v252
    %989 = vmatprep.subr.bf16.mxu0 0
    %990 = vmatpush1.bf16.msra.mxu0 %v253
    %991 = vmatprep.subr.bf16.mxu0 0
    %992 = vmatpush1.bf16.msra.mxu0 %v254
    %993 = vmatprep.subr.bf16.mxu0 0
    %994 = vmatpush1.bf16.msra.mxu0 %v255
    %995 = vmatprep.subr.bf16.mxu0 0
    %996 = vmatpush1.bf16.msra.mxu0 0
    %997 = vmatprep.subr.bf16.mxu0 0
    %998 = vmatpush1.bf16.msra.mxu0 0
    %999 = vmatprep.subr.bf16.mxu0 0
    %1000 = vmatpush1.bf16.msra.mxu0 0
    %1001 = vmatprep.subr.bf16.mxu0 0
    %1002 = vmatpush1.bf16.msra.mxu0 0
    %1003 = vmatprep.subr.bf16.mxu0 0
    %1004 = vmatpush1.bf16.msra.mxu0 0
    %1005 = vmatprep.subr.bf16.mxu0 0
    %1006 = vmatpush1.bf16.msra.mxu0 0
    %1007 = vmatprep.subr.bf16.mxu0 0
    %1008 = vmatpush1.bf16.msra.mxu0 0
    %1009 = vmatprep.subr.bf16.mxu0 0
    %1010 = vmatpush1.bf16.msra.mxu0 0
    %1011 = vmatprep.mubr.bf16.mxu0 0
    %1012 = vmatmul.mubr.bf16.gmra.mrb[0].mxu0 %v978
    %v1013 = vpop.f32.mrb[0].mxu0
    %v1014 = vadd.f32 %v57, %v1013
    %v1015 = vpop.f32.mrb[0].mxu0
    %v1016 = vpop.f32.mrb[0].mxu0
    %v1017 = vpop.f32.mrb[0].mxu0
    %1018 = vdwg.mxu0
    %v1019 = vtanh.pop %v1014
    %v1020 = vmul.f32 %v1019, %v799
    %v1021 = vpack.c.bf16 %v1020, %v1020
    %1022 = vmatprep.subr.bf16.mxu0 0
    %1023 = vmatpush1.bf16.msra.mxu0 %v339
    %1024 = vmatprep.subr.bf16.mxu0 0
    %1025 = vmatpush1.bf16.msra.mxu0 %v340
    %1026 = vmatprep.subr.bf16.mxu0 0
    %1027 = vmatpush1.bf16.msra.mxu0 %v341
    %1028 = vmatprep.subr.bf16.mxu0 0
    %1029 = vmatpush1.bf16.msra.mxu0 %v342
    %1030 = vmatprep.subr.bf16.mxu0 0
    %1031 = vmatpush1.bf16.msra.mxu0 %v343
    %1032 = vmatprep.subr.bf16.mxu0 0
    %1033 = vmatpush1.bf16.msra.mxu0 %v344
    %1034 = vmatprep.subr.bf16.mxu0 0
    %1035 = vmatpush1.bf16.msra.mxu0 %v345
    %1036 = vmatprep.subr.bf16.mxu0 0
    %1037 = vmatpush1.bf16.msra.mxu0 %v346
    %1038 = vmatprep.subr.bf16.mxu0 0
    %1039 = vmatpush1.bf16.msra.mxu0 0
    %1040 = vmatprep.subr.bf16.mxu0 0
    %1041 = vmatpush1.bf16.msra.mxu0 0
    %1042 = vmatprep.subr.bf16.mxu0 0
    %1043 = vmatpush1.bf16.msra.mxu0 0
    %1044 = vmatprep.subr.bf16.mxu0 0
    %1045 = vmatpush1.bf16.msra.mxu0 0
    %1046 = vmatprep.subr.bf16.mxu0 0
    %1047 = vmatpush1.bf16.msra.mxu0 0
    %1048 = vmatprep.subr.bf16.mxu0 0
    %1049 = vmatpush1.bf16.msra.mxu0 0
    %1050 = vmatprep.subr.bf16.mxu0 0
    %1051 = vmatpush1.bf16.msra.mxu0 0
    %1052 = vmatprep.subr.bf16.mxu0 0
    %1053 = vmatpush1.bf16.msra.mxu0 0
    %1054 = vmatprep.mubr.bf16.mxu0 0
    %1055 = vmatmul.mubr.bf16.gmra.mrb[0].mxu0 %v1021
    %v1056 = vpop.f32.mrb[0].mxu0
    %v1057 = vadd.f32 0.0, %v1056
    %v1058 = vpop.f32.mrb[0].mxu0
    %v1059 = vpop.f32.mrb[0].mxu0
    %v1060 = vpop.f32.mrb[0].mxu0
    %1061 = vdwg.mxu0
    %v1062 = vmul.f32 %v926, %v526
    %v1063 = vsub.f32 %v1057, %v1062
    %v1064 = vadd.f32 %v796, %v1063
    %v1065 = vpack.c.bf16 %v1064, %v1064
    %v1067 = vsel %vm170, %v1065, 0
    %1069 = vmatprep.subr.bf16.mxu0 0
    %1070 = vmatpush1.bf16.msra.mxu0 %v166
    %1071 = vmatprep.subr.bf16.mxu0 0
    %1072 = vmatpush1.bf16.msra.mxu0 %v167
    %1073 = vmatprep.subr.bf16.mxu0 0
    %1074 = vmatpush1.bf16.msra.mxu0 0
    %1075 = vmatprep.subr.bf16.mxu0 0
    %1076 = vmatpush1.bf16.msra.mxu0 0
    %1077 = vmatprep.subr.bf16.mxu0 0
    %1078 = vmatpush1.bf16.msra.mxu0 0
    %1079 = vmatprep.subr.bf16.mxu0 0
    %1080 = vmatpush1.bf16.msra.mxu0 0
    %1081 = vmatprep.subr.bf16.mxu0 0
    %1082 = vmatpush1.bf16.msra.mxu0 0
    %1083 = vmatprep.subr.bf16.mxu0 0
    %1084 = vmatpush1.bf16.msra.mxu0 0
    %1085 = vmatprep.subr.bf16.mxu0 0
    %1086 = vmatpush1.bf16.msra.mxu0 0
    %1087 = vmatprep.subr.bf16.mxu0 0
    %1088 = vmatpush1.bf16.msra.mxu0 0
    %1089 = vmatprep.subr.bf16.mxu0 0
    %1090 = vmatpush1.bf16.msra.mxu0 0
    %1091 = vmatprep.subr.bf16.mxu0 0
    %1092 = vmatpush1.bf16.msra.mxu0 0
    %1093 = vmatprep.subr.bf16.mxu0 0
    %1094 = vmatpush1.bf16.msra.mxu0 0
    %1095 = vmatprep.subr.bf16.mxu0 0
    %1096 = vmatpush1.bf16.msra.mxu0 0
    %1097 = vmatprep.subr.bf16.mxu0 0
    %1098 = vmatpush1.bf16.msra.mxu0 0
    %1099 = vmatprep.subr.bf16.mxu0 0
    %1100 = vmatpush1.bf16.msra.mxu0 0
    %1101 = vmatprep.mubr.bf16.mxu0 0
    %1102 = vmatmul.mubr.bf16.gmra.mrb[0].mxu0 %v1067
    %v1103 = vpop.f32.mrb[0].mxu0
    %v1104 = vadd.f32 %v40, %v1103
    %v1105 = vpop.f32.mrb[0].mxu0
    %v1106 = vpop.f32.mrb[0].mxu0
    %v1107 = vpop.f32.mrb[0].mxu0
    %1108 = vdwg.mxu0
    %v1109 = vmax.f32 %v1104, 0.0
    %v1110 = vpack.c.bf16 %v1109, %v1109
    %1111 = vmatprep.subr.bf16.mxu0 0
    %1112 = vmatpush1.bf16.msra.mxu0 %v248
    %1113 = vmatprep.subr.bf16.mxu0 0
    %1114 = vmatpush1.bf16.msra.mxu0 %v249
    %1115 = vmatprep.subr.bf16.mxu0 0
    %1116 = vmatpush1.bf16.msra.mxu0 %v250
    %1117 = vmatprep.subr.bf16.mxu0 0
    %1118 = vmatpush1.bf16.msra.mxu0 %v251
    %1119 = vmatprep.subr.bf16.mxu0 0
    %1120 = vmatpush1.bf16.msra.mxu0 %v252
    %1121 = vmatprep.subr.bf16.mxu0 0
    %1122 = vmatpush1.bf16.msra.mxu0 %v253
    %1123 = vmatprep.subr.bf16.mxu0 0
    %1124 = vmatpush1.bf16.msra.mxu0 %v254
    %1125 = vmatprep.subr.bf16.mxu0 0
    %1126 = vmatpush1.bf16.msra.mxu0 %v255
    %1127 = vmatprep.subr.bf16.mxu0 0
    %1128 = vmatpush1.bf16.msra.mxu0 0
    %1129 = vmatprep.subr.bf16.mxu0 0
    %1130 = vmatpush1.bf16.msra.mxu0 0
    %1131 = vmatprep.subr.bf16.mxu0 0
    %1132 = vmatpush1.bf16.msra.mxu0 0
    %1133 = vmatprep.subr.bf16.mxu0 0
    %1134 = vmatpush1.bf16.msra.mxu0 0
    %1135 = vmatprep.subr.bf16.mxu0 0
    %1136 = vmatpush1.bf16.msra.mxu0 0
    %1137 = vmatprep.subr.bf16.mxu0 0
    %1138 = vmatpush1.bf16.msra.mxu0 0
    %1139 = vmatprep.subr.bf16.mxu0 0
    %1140 = vmatpush1.bf16.msra.mxu0 0
    %1141 = vmatprep.subr.bf16.mxu0 0
    %1142 = vmatpush1.bf16.msra.mxu0 0
    %1143 = vmatprep.mubr.bf16.mxu0 0
    %1144 = vmatmul.mubr.bf16.gmra.mrb[0].mxu0 %v1110
    %v1145 = vpop.f32.mrb[0].mxu0
    %v1146 = vadd.f32 %v57, %v1145
    %v1147 = vpop.f32.mrb[0].mxu0
    %v1148 = vpop.f32.mrb[0].mxu0
    %v1149 = vpop.f32.mrb[0].mxu0
    %1150 = vdwg.mxu0
    %v1151 = vtanh.pop %v1146
    %v1152 = vmul.f32 %v1151, %v800
    %v1153 = vpack.c.bf16 %v1152, %v1152
    %1154 = vmatprep.subr.bf16.mxu0 0
    %1155 = vmatpush1.bf16.msra.mxu0 %v339
    %1156 = vmatprep.subr.bf16.mxu0 0
    %1157 = vmatpush1.bf16.msra.mxu0 %v340
    %1158 = vmatprep.subr.bf16.mxu0 0
    %1159 = vmatpush1.bf16.msra.mxu0 %v341
    %1160 = vmatprep.subr.bf16.mxu0 0
    %1161 = vmatpush1.bf16.msra.mxu0 %v342
    %1162 = vmatprep.subr.bf16.mxu0 0
    %1163 = vmatpush1.bf16.msra.mxu0 %v343
    %1164 = vmatprep.subr.bf16.mxu0 0
    %1165 = vmatpush1.bf16.msra.mxu0 %v344
    %1166 = vmatprep.subr.bf16.mxu0 0
    %1167 = vmatpush1.bf16.msra.mxu0 %v345
    %1168 = vmatprep.subr.bf16.mxu0 0
    %1169 = vmatpush1.bf16.msra.mxu0 %v346
    %1170 = vmatprep.subr.bf16.mxu0 0
    %1171 = vmatpush1.bf16.msra.mxu0 0
    %1172 = vmatprep.subr.bf16.mxu0 0
    %1173 = vmatpush1.bf16.msra.mxu0 0
    %1174 = vmatprep.subr.bf16.mxu0 0
    %1175 = vmatpush1.bf16.msra.mxu0 0
    %1176 = vmatprep.subr.bf16.mxu0 0
    %1177 = vmatpush1.bf16.msra.mxu0 0
    %1178 = vmatprep.subr.bf16.mxu0 0
    %1179 = vmatpush1.bf16.msra.mxu0 0
    %1180 = vmatprep.subr.bf16.mxu0 0
    %1181 = vmatpush1.bf16.msra.mxu0 0
    %1182 = vmatprep.subr.bf16.mxu0 0
    %1183 = vmatpush1.bf16.msra.mxu0 0
    %1184 = vmatprep.subr.bf16.mxu0 0
    %1185 = vmatpush1.bf16.msra.mxu0 0
    %1186 = vmatprep.mubr.bf16.mxu0 0
    %1187 = vmatmul.mubr.bf16.gmra.mrb[0].mxu0 %v1153
    %v1188 = vpop.f32.mrb[0].mxu0
    %v1189 = vadd.f32 0.0, %v1188
    %v1190 = vpop.f32.mrb[0].mxu0
    %v1191 = vpop.f32.mrb[0].mxu0
    %v1192 = vpop.f32.mrb[0].mxu0
    %1193 = vdwg.mxu0
    %v1194 = vsub.f32 %v926, %v1057
    %v1195 = vadd.f32 %v1194, %v1189
    %v1196 = vadd.f32 %v796, %v1195
    %v1197 = vpack.c.bf16 %v1196, %v1196
    %v1199 = vsel %vm170, %v1197, 0
    %1201 = vmatprep.subr.bf16.mxu0 0
    %1202 = vmatpush1.bf16.msra.mxu0 %v166
    %1203 = vmatprep.subr.bf16.mxu0 0
    %1204 = vmatpush1.bf16.msra.mxu0 %v167
    %1205 = vmatprep.subr.bf16.mxu0 0
    %1206 = vmatpush1.bf16.msra.mxu0 0
    %1207 = vmatprep.subr.bf16.mxu0 0
    %1208 = vmatpush1.bf16.msra.mxu0 0
    %1209 = vmatprep.subr.bf16.mxu0 0
    %1210 = vmatpush1.bf16.msra.mxu0 0
    %1211 = vmatprep.subr.bf16.mxu0 0
    %1212 = vmatpush1.bf16.msra.mxu0 0
    %1213 = vmatprep.subr.bf16.mxu0 0
    %1214 = vmatpush1.bf16.msra.mxu0 0
    %1215 = vmatprep.subr.bf16.mxu0 0
    %1216 = vmatpush1.bf16.msra.mxu0 0
    %1217 = vmatprep.subr.bf16.mxu0 0
    %1218 = vmatpush1.bf16.msra.mxu0 0
    %1219 = vmatprep.subr.bf16.mxu0 0
    %1220 = vmatpush1.bf16.msra.mxu0 0
    %1221 = vmatprep.subr.bf16.mxu0 0
    %1222 = vmatpush1.bf16.msra.mxu0 0
    %1223 = vmatprep.subr.bf16.mxu0 0
    %1224 = vmatpush1.bf16.msra.mxu0 0
    %1225 = vmatprep.subr.bf16.mxu0 0
    %1226 = vmatpush1.bf16.msra.mxu0 0
    %1227 = vmatprep.subr.bf16.mxu0 0
    %1228 = vmatpush1.bf16.msra.mxu0 0
    %1229 = vmatprep.subr.bf16.mxu0 0
    %1230 = vmatpush1.bf16.msra.mxu0 0
    %1231 = vmatprep.subr.bf16.mxu0 0
    %1232 = vmatpush1.bf16.msra.mxu0 0
    %1233 = vmatprep.mubr.bf16.mxu0 0
    %1234 = vmatmul.mubr.bf16.gmra.mrb[0].mxu0 %v1199
    %v1235 = vpop.f32.mrb[0].mxu0
    %v1236 = vadd.f32 %v40, %v1235
    %v1237 = vpop.f32.mrb[0].mxu0
    %v1238 = vpop.f32.mrb[0].mxu0
    %v1239 = vpop.f32.mrb[0].mxu0
    %1240 = vdwg.mxu0
    %v1241 = vmax.f32 %v1236, 0.0
    %v1242 = vpack.c.bf16 %v1241, %v1241
    %1243 = vmatprep.subr.bf16.mxu0 0
    %1244 = vmatpush1.bf16.msra.mxu0 %v248
    %1245 = vmatprep.subr.bf16.mxu0 0
    %1246 = vmatpush1.bf16.msra.mxu0 %v249
    %1247 = vmatprep.subr.bf16.mxu0 0
    %1248 = vmatpush1.bf16.msra.mxu0 %v250
    %1249 = vmatprep.subr.bf16.mxu0 0
    %1250 = vmatpush1.bf16.msra.mxu0 %v251
    %1251 = vmatprep.subr.bf16.mxu0 0
    %1252 = vmatpush1.bf16.msra.mxu0 %v252
    %1253 = vmatprep.subr.bf16.mxu0 0
    %1254 = vmatpush1.bf16.msra.mxu0 %v253
    %1255 = vmatprep.subr.bf16.mxu0 0
    %1256 = vmatpush1.bf16.msra.mxu0 %v254
    %1257 = vmatprep.subr.bf16.mxu0 0
    %1258 = vmatpush1.bf16.msra.mxu0 %v255
    %1259 = vmatprep.subr.bf16.mxu0 0
    %1260 = vmatpush1.bf16.msra.mxu0 0
    %1261 = vmatprep.subr.bf16.mxu0 0
    %1262 = vmatpush1.bf16.msra.mxu0 0
    %1263 = vmatprep.subr.bf16.mxu0 0
    %1264 = vmatpush1.bf16.msra.mxu0 0
    %1265 = vmatprep.subr.bf16.mxu0 0
    %1266 = vmatpush1.bf16.msra.mxu0 0
    %1267 = vmatprep.subr.bf16.mxu0 0
    %1268 = vmatpush1.bf16.msra.mxu0 0
    %1269 = vmatprep.subr.bf16.mxu0 0
    %1270 = vmatpush1.bf16.msra.mxu0 0
    %1271 = vmatprep.subr.bf16.mxu0 0
    %1272 = vmatpush1.bf16.msra.mxu0 0
    %1273 = vmatprep.subr.bf16.mxu0 0
    %1274 = vmatpush1.bf16.msra.mxu0 0
    %1275 = vmatprep.mubr.bf16.mxu0 0
    %1276 = vmatmul.mubr.bf16.gmra.mrb[0].mxu0 %v1242
    %v1277 = vpop.f32.mrb[0].mxu0
    %v1278 = vadd.f32 %v57, %v1277
    %v1279 = vpop.f32.mrb[0].mxu0
    %v1280 = vpop.f32.mrb[0].mxu0
    %v1281 = vpop.f32.mrb[0].mxu0
    %1282 = vdwg.mxu0
    %v1283 = vtanh.pop %v1278
    %v1284 = vmul.f32 %v1283, %v801
    %v1285 = vpack.c.bf16 %v1284, %v1284
    %1286 = vmatprep.subr.bf16.mxu0 0
    %1287 = vmatpush1.bf16.msra.mxu0 %v339
    %1288 = vmatprep.subr.bf16.mxu0 0
    %1289 = vmatpush1.bf16.msra.mxu0 %v340
    %1290 = vmatprep.subr.bf16.mxu0 0
    %1291 = vmatpush1.bf16.msra.mxu0 %v341
    %1292 = vmatprep.subr.bf16.mxu0 0
    %1293 = vmatpush1.bf16.msra.mxu0 %v342
    %1294 = vmatprep.subr.bf16.mxu0 0
    %1295 = vmatpush1.bf16.msra.mxu0 %v343
    %1296 = vmatprep.subr.bf16.mxu0 0
    %1297 = vmatpush1.bf16.msra.mxu0 %v344
    %1298 = vmatprep.subr.bf16.mxu0 0
    %1299 = vmatpush1.bf16.msra.mxu0 %v345
    %1300 = vmatprep.subr.bf16.mxu0 0
    %1301 = vmatpush1.bf16.msra.mxu0 %v346
    %1302 = vmatprep.subr.bf16.mxu0 0
    %1303 = vmatpush1.bf16.msra.mxu0 0
    %1304 = vmatprep.subr.bf16.mxu0 0
    %1305 = vmatpush1.bf16.msra.mxu0 0
    %1306 = vmatprep.subr.bf16.mxu0 0
    %1307 = vmatpush1.bf16.msra.mxu0 0
    %1308 = vmatprep.subr.bf16.mxu0 0
    %1309 = vmatpush1.bf16.msra.mxu0 0
    %1310 = vmatprep.subr.bf16.mxu0 0
    %1311 = vmatpush1.bf16.msra.mxu0 0
    %1312 = vmatprep.subr.bf16.mxu0 0
    %1313 = vmatpush1.bf16.msra.mxu0 0
    %1314 = vmatprep.subr.bf16.mxu0 0
    %1315 = vmatpush1.bf16.msra.mxu0 0
    %1316 = vmatprep.subr.bf16.mxu0 0
    %1317 = vmatpush1.bf16.msra.mxu0 0
    %1318 = vmatprep.mubr.bf16.mxu0 0
    %1319 = vmatmul.mubr.bf16.gmra.mrb[0].mxu0 %v1285
    %v1320 = vpop.f32.mrb[0].mxu0
    %v1321 = vadd.f32 0.0, %v1320
    %v1322 = vpop.f32.mrb[0].mxu0
    %v1323 = vpop.f32.mrb[0].mxu0
    %v1324 = vpop.f32.mrb[0].mxu0
    %1325 = vdwg.mxu0
    %v1326 = vadd.f32 %v1057, %v1189
    %v1327 = vmul.f32 %v1326, 3.0
    %v1328 = vadd.f32 %v926, %v1327
    %v1329 = vadd.f32 %v1328, %v1321
    %v1330 = vmul.f32 %v1329, 0.125
    %v1331 = vadd.f32 %v796, %v1330
    %s1332 = scalar_lea.vmem %s1, 64
    %v1333 = vld [vmem:[%s1332] sm:$0xff]
    %v1334 = vld [vmem:[%s1332 + $0x8] sm:$0xff]
    %v1335 = vld [vmem:[%s1332 + $0x10] sm:$0xff]
    %v1336 = vld [vmem:[%s1332 + $0x18] sm:$0xff]
    %v1337 = vpack.c.bf16 %v1331, %v1331
    %v1339 = vsel %vm170, %v1337, 0
    %1341 = vmatprep.subr.bf16.mxu0 0
    %1342 = vmatpush1.bf16.msra.mxu0 %v166
    %1343 = vmatprep.subr.bf16.mxu0 0
    %1344 = vmatpush1.bf16.msra.mxu0 %v167
    %1345 = vmatprep.subr.bf16.mxu0 0
    %1346 = vmatpush1.bf16.msra.mxu0 0
    %1347 = vmatprep.subr.bf16.mxu0 0
    %1348 = vmatpush1.bf16.msra.mxu0 0
    %1349 = vmatprep.subr.bf16.mxu0 0
    %1350 = vmatpush1.bf16.msra.mxu0 0
    %1351 = vmatprep.subr.bf16.mxu0 0
    %1352 = vmatpush1.bf16.msra.mxu0 0
    %1353 = vmatprep.subr.bf16.mxu0 0
    %1354 = vmatpush1.bf16.msra.mxu0 0
    %1355 = vmatprep.subr.bf16.mxu0 0
    %1356 = vmatpush1.bf16.msra.mxu0 0
    %1357 = vmatprep.subr.bf16.mxu0 0
    %1358 = vmatpush1.bf16.msra.mxu0 0
    %1359 = vmatprep.subr.bf16.mxu0 0
    %1360 = vmatpush1.bf16.msra.mxu0 0
    %1361 = vmatprep.subr.bf16.mxu0 0
    %1362 = vmatpush1.bf16.msra.mxu0 0
    %1363 = vmatprep.subr.bf16.mxu0 0
    %1364 = vmatpush1.bf16.msra.mxu0 0
    %1365 = vmatprep.subr.bf16.mxu0 0
    %1366 = vmatpush1.bf16.msra.mxu0 0
    %1367 = vmatprep.subr.bf16.mxu0 0
    %1368 = vmatpush1.bf16.msra.mxu0 0
    %1369 = vmatprep.subr.bf16.mxu0 0
    %1370 = vmatpush1.bf16.msra.mxu0 0
    %1371 = vmatprep.subr.bf16.mxu0 0
    %1372 = vmatpush1.bf16.msra.mxu0 0
    %1373 = vmatprep.mubr.bf16.mxu0 0
    %1374 = vmatmul.mubr.bf16.gmra.mrb[0].mxu0 %v1339
    %v1375 = vpop.f32.mrb[0].mxu0
    %v1376 = vadd.f32 %v40, %v1375
    %v1377 = vpop.f32.mrb[0].mxu0
    %v1378 = vpop.f32.mrb[0].mxu0
    %v1379 = vpop.f32.mrb[0].mxu0
    %1380 = vdwg.mxu0
    %v1381 = vmax.f32 %v1376, 0.0
    %v1382 = vpack.c.bf16 %v1381, %v1381
    %1383 = vmatprep.subr.bf16.mxu0 0
    %1384 = vmatpush1.bf16.msra.mxu0 %v248
    %1385 = vmatprep.subr.bf16.mxu0 0
    %1386 = vmatpush1.bf16.msra.mxu0 %v249
    %1387 = vmatprep.subr.bf16.mxu0 0
    %1388 = vmatpush1.bf16.msra.mxu0 %v250
    %1389 = vmatprep.subr.bf16.mxu0 0
    %1390 = vmatpush1.bf16.msra.mxu0 %v251
    %1391 = vmatprep.subr.bf16.mxu0 0
    %1392 = vmatpush1.bf16.msra.mxu0 %v252
    %1393 = vmatprep.subr.bf16.mxu0 0
    %1394 = vmatpush1.bf16.msra.mxu0 %v253
    %1395 = vmatprep.subr.bf16.mxu0 0
    %1396 = vmatpush1.bf16.msra.mxu0 %v254
    %1397 = vmatprep.subr.bf16.mxu0 0
    %1398 = vmatpush1.bf16.msra.mxu0 %v255
    %1399 = vmatprep.subr.bf16.mxu0 0
    %1400 = vmatpush1.bf16.msra.mxu0 0
    %1401 = vmatprep.subr.bf16.mxu0 0
    %1402 = vmatpush1.bf16.msra.mxu0 0
    %1403 = vmatprep.subr.bf16.mxu0 0
    %1404 = vmatpush1.bf16.msra.mxu0 0
    %1405 = vmatprep.subr.bf16.mxu0 0
    %1406 = vmatpush1.bf16.msra.mxu0 0
    %1407 = vmatprep.subr.bf16.mxu0 0
    %1408 = vmatpush1.bf16.msra.mxu0 0
    %1409 = vmatprep.subr.bf16.mxu0 0
    %1410 = vmatpush1.bf16.msra.mxu0 0
    %1411 = vmatprep.subr.bf16.mxu0 0
    %1412 = vmatpush1.bf16.msra.mxu0 0
    %1413 = vmatprep.subr.bf16.mxu0 0
    %1414 = vmatpush1.bf16.msra.mxu0 0
    %1415 = vmatprep.mubr.bf16.mxu0 0
    %1416 = vmatmul.mubr.bf16.gmra.mrb[0].mxu0 %v1382
    %v1417 = vpop.f32.mrb[0].mxu0
    %v1418 = vadd.f32 %v57, %v1417
    %v1419 = vpop.f32.mrb[0].mxu0
    %v1420 = vpop.f32.mrb[0].mxu0
    %v1421 = vpop.f32.mrb[0].mxu0
    %1422 = vdwg.mxu0
    %v1423 = vtanh.pop %v1418
    %v1424 = vmul.f32 %v1423, %v1333
    %v1425 = vpack.c.bf16 %v1424, %v1424
    %1426 = vmatprep.subr.bf16.mxu0 0
    %1427 = vmatpush1.bf16.msra.mxu0 %v339
    %1428 = vmatprep.subr.bf16.mxu0 0
    %1429 = vmatpush1.bf16.msra.mxu0 %v340
    %1430 = vmatprep.subr.bf16.mxu0 0
    %1431 = vmatpush1.bf16.msra.mxu0 %v341
    %1432 = vmatprep.subr.bf16.mxu0 0
    %1433 = vmatpush1.bf16.msra.mxu0 %v342
    %1434 = vmatprep.subr.bf16.mxu0 0
    %1435 = vmatpush1.bf16.msra.mxu0 %v343
    %1436 = vmatprep.subr.bf16.mxu0 0
    %1437 = vmatpush1.bf16.msra.mxu0 %v344
    %1438 = vmatprep.subr.bf16.mxu0 0
    %1439 = vmatpush1.bf16.msra.mxu0 %v345
    %1440 = vmatprep.subr.bf16.mxu0 0
    %1441 = vmatpush1.bf16.msra.mxu0 %v346
    %1442 = vmatprep.subr.bf16.mxu0 0
    %1443 = vmatpush1.bf16.msra.mxu0 0
    %1444 = vmatprep.subr.bf16.mxu0 0
    %1445 = vmatpush1.bf16.msra.mxu0 0
    %1446 = vmatprep.subr.bf16.mxu0 0
    %1447 = vmatpush1.bf16.msra.mxu0 0
    %1448 = vmatprep.subr.bf16.mxu0 0
    %1449 = vmatpush1.bf16.msra.mxu0 0
    %1450 = vmatprep.subr.bf16.mxu0 0
    %1451 = vmatpush1.bf16.msra.mxu0 0
    %1452 = vmatprep.subr.bf16.mxu0 0
    %1453 = vmatpush1.bf16.msra.mxu0 0
    %1454 = vmatprep.subr.bf16.mxu0 0
    %1455 = vmatpush1.bf16.msra.mxu0 0
    %1456 = vmatprep.subr.bf16.mxu0 0
    %1457 = vmatpush1.bf16.msra.mxu0 0
    %1458 = vmatprep.mubr.bf16.mxu0 0
    %1459 = vmatmul.mubr.bf16.gmra.mrb[0].mxu0 %v1425
    %v1460 = vpop.f32.mrb[0].mxu0
    %v1461 = vadd.f32 0.0, %v1460
    %v1462 = vpop.f32.mrb[0].mxu0
    %v1463 = vpop.f32.mrb[0].mxu0
    %v1464 = vpop.f32.mrb[0].mxu0
    %1465 = vdwg.mxu0
    %v1466 = vmul.f32 %v1461, 0.33333334
    %v1467 = vadd.f32 %v1331, %v1466
    %v1468 = vpack.c.bf16 %v1467, %v1467
    %v1470 = vsel %vm170, %v1468, 0
    %1472 = vmatprep.subr.bf16.mxu0 0
    %1473 = vmatpush1.bf16.msra.mxu0 %v166
    %1474 = vmatprep.subr.bf16.mxu0 0
    %1475 = vmatpush1.bf16.msra.mxu0 %v167
    %1476 = vmatprep.subr.bf16.mxu0 0
    %1477 = vmatpush1.bf16.msra.mxu0 0
    %1478 = vmatprep.subr.bf16.mxu0 0
    %1479 = vmatpush1.bf16.msra.mxu0 0
    %1480 = vmatprep.subr.bf16.mxu0 0
    %1481 = vmatpush1.bf16.msra.mxu0 0
    %1482 = vmatprep.subr.bf16.mxu0 0
    %1483 = vmatpush1.bf16.msra.mxu0 0
    %1484 = vmatprep.subr.bf16.mxu0 0
    %1485 = vmatpush1.bf16.msra.mxu0 0
    %1486 = vmatprep.subr.bf16.mxu0 0
    %1487 = vmatpush1.bf16.msra.mxu0 0
    %1488 = vmatprep.subr.bf16.mxu0 0
    %1489 = vmatpush1.bf16.msra.mxu0 0
    %1490 = vmatprep.subr.bf16.mxu0 0
    %1491 = vmatpush1.bf16.msra.mxu0 0
    %1492 = vmatprep.subr.bf16.mxu0 0
    %1493 = vmatpush1.bf16.msra.mxu0 0
    %1494 = vmatprep.subr.bf16.mxu0 0
    %1495 = vmatpush1.bf16.msra.mxu0 0
    %1496 = vmatprep.subr.bf16.mxu0 0
    %1497 = vmatpush1.bf16.msra.mxu0 0
    %1498 = vmatprep.subr.bf16.mxu0 0
    %1499 = vmatpush1.bf16.msra.mxu0 0
    %1500 = vmatprep.subr.bf16.mxu0 0
    %1501 = vmatpush1.bf16.msra.mxu0 0
    %1502 = vmatprep.subr.bf16.mxu0 0
    %1503 = vmatpush1.bf16.msra.mxu0 0
    %1504 = vmatprep.mubr.bf16.mxu0 0
    %1505 = vmatmul.mubr.bf16.gmra.mrb[0].mxu0 %v1470
    %v1506 = vpop.f32.mrb[0].mxu0
    %v1507 = vadd.f32 %v40, %v1506
    %v1508 = vpop.f32.mrb[0].mxu0
    %v1509 = vpop.f32.mrb[0].mxu0
    %v1510 = vpop.f32.mrb[0].mxu0
    %1511 = vdwg.mxu0
    %v1512 = vmax.f32 %v1507, 0.0
    %v1513 = vpack.c.bf16 %v1512, %v1512
    %1514 = vmatprep.subr.bf16.mxu0 0
    %1515 = vmatpush1.bf16.msra.mxu0 %v248
    %1516 = vmatprep.subr.bf16.mxu0 0
    %1517 = vmatpush1.bf16.msra.mxu0 %v249
    %1518 = vmatprep.subr.bf16.mxu0 0
    %1519 = vmatpush1.bf16.msra.mxu0 %v250
    %1520 = vmatprep.subr.bf16.mxu0 0
    %1521 = vmatpush1.bf16.msra.mxu0 %v251
    %1522 = vmatprep.subr.bf16.mxu0 0
    %1523 = vmatpush1.bf16.msra.mxu0 %v252
    %1524 = vmatprep.subr.bf16.mxu0 0
    %1525 = vmatpush1.bf16.msra.mxu0 %v253
    %1526 = vmatprep.subr.bf16.mxu0 0
    %1527 = vmatpush1.bf16.msra.mxu0 %v254
    %1528 = vmatprep.subr.bf16.mxu0 0
    %1529 = vmatpush1.bf16.msra.mxu0 %v255
    %1530 = vmatprep.subr.bf16.mxu0 0
    %1531 = vmatpush1.bf16.msra.mxu0 0
    %1532 = vmatprep.subr.bf16.mxu0 0
    %1533 = vmatpush1.bf16.msra.mxu0 0
    %1534 = vmatprep.subr.bf16.mxu0 0
    %1535 = vmatpush1.bf16.msra.mxu0 0
    %1536 = vmatprep.subr.bf16.mxu0 0
    %1537 = vmatpush1.bf16.msra.mxu0 0
    %1538 = vmatprep.subr.bf16.mxu0 0
    %1539 = vmatpush1.bf16.msra.mxu0 0
    %1540 = vmatprep.subr.bf16.mxu0 0
    %1541 = vmatpush1.bf16.msra.mxu0 0
    %1542 = vmatprep.subr.bf16.mxu0 0
    %1543 = vmatpush1.bf16.msra.mxu0 0
    %1544 = vmatprep.subr.bf16.mxu0 0
    %1545 = vmatpush1.bf16.msra.mxu0 0
    %1546 = vmatprep.mubr.bf16.mxu0 0
    %1547 = vmatmul.mubr.bf16.gmra.mrb[0].mxu0 %v1513
    %v1548 = vpop.f32.mrb[0].mxu0
    %v1549 = vadd.f32 %v57, %v1548
    %v1550 = vpop.f32.mrb[0].mxu0
    %v1551 = vpop.f32.mrb[0].mxu0
    %v1552 = vpop.f32.mrb[0].mxu0
    %1553 = vdwg.mxu0
    %v1554 = vtanh.pop %v1549
    %v1555 = vmul.f32 %v1554, %v1334
    %v1556 = vpack.c.bf16 %v1555, %v1555
    %1557 = vmatprep.subr.bf16.mxu0 0
    %1558 = vmatpush1.bf16.msra.mxu0 %v339
    %1559 = vmatprep.subr.bf16.mxu0 0
    %1560 = vmatpush1.bf16.msra.mxu0 %v340
    %1561 = vmatprep.subr.bf16.mxu0 0
    %1562 = vmatpush1.bf16.msra.mxu0 %v341
    %1563 = vmatprep.subr.bf16.mxu0 0
    %1564 = vmatpush1.bf16.msra.mxu0 %v342
    %1565 = vmatprep.subr.bf16.mxu0 0
    %1566 = vmatpush1.bf16.msra.mxu0 %v343
    %1567 = vmatprep.subr.bf16.mxu0 0
    %1568 = vmatpush1.bf16.msra.mxu0 %v344
    %1569 = vmatprep.subr.bf16.mxu0 0
    %1570 = vmatpush1.bf16.msra.mxu0 %v345
    %1571 = vmatprep.subr.bf16.mxu0 0
    %1572 = vmatpush1.bf16.msra.mxu0 %v346
    %1573 = vmatprep.subr.bf16.mxu0 0
    %1574 = vmatpush1.bf16.msra.mxu0 0
    %1575 = vmatprep.subr.bf16.mxu0 0
    %1576 = vmatpush1.bf16.msra.mxu0 0
    %1577 = vmatprep.subr.bf16.mxu0 0
    %1578 = vmatpush1.bf16.msra.mxu0 0
    %1579 = vmatprep.subr.bf16.mxu0 0
    %1580 = vmatpush1.bf16.msra.mxu0 0
    %1581 = vmatprep.subr.bf16.mxu0 0
    %1582 = vmatpush1.bf16.msra.mxu0 0
    %1583 = vmatprep.subr.bf16.mxu0 0
    %1584 = vmatpush1.bf16.msra.mxu0 0
    %1585 = vmatprep.subr.bf16.mxu0 0
    %1586 = vmatpush1.bf16.msra.mxu0 0
    %1587 = vmatprep.subr.bf16.mxu0 0
    %1588 = vmatpush1.bf16.msra.mxu0 0
    %1589 = vmatprep.mubr.bf16.mxu0 0
    %1590 = vmatmul.mubr.bf16.gmra.mrb[0].mxu0 %v1556
    %v1591 = vpop.f32.mrb[0].mxu0
    %v1592 = vadd.f32 0.0, %v1591
    %v1593 = vpop.f32.mrb[0].mxu0
    %v1594 = vpop.f32.mrb[0].mxu0
    %v1595 = vpop.f32.mrb[0].mxu0
    %1596 = vdwg.mxu0
    %v1597 = vmul.f32 %v1461, %v526
    %v1598 = vsub.f32 %v1592, %v1597
    %v1599 = vadd.f32 %v1331, %v1598
    %v1600 = vpack.c.bf16 %v1599, %v1599
    %v1602 = vsel %vm170, %v1600, 0
    %1604 = vmatprep.subr.bf16.mxu0 0
    %1605 = vmatpush1.bf16.msra.mxu0 %v166
    %1606 = vmatprep.subr.bf16.mxu0 0
    %1607 = vmatpush1.bf16.msra.mxu0 %v167
    %1608 = vmatprep.subr.bf16.mxu0 0
    %1609 = vmatpush1.bf16.msra.mxu0 0
    %1610 = vmatprep.subr.bf16.mxu0 0
    %1611 = vmatpush1.bf16.msra.mxu0 0
    %1612 = vmatprep.subr.bf16.mxu0 0
    %1613 = vmatpush1.bf16.msra.mxu0 0
    %1614 = vmatprep.subr.bf16.mxu0 0
    %1615 = vmatpush1.bf16.msra.mxu0 0
    %1616 = vmatprep.subr.bf16.mxu0 0
    %1617 = vmatpush1.bf16.msra.mxu0 0
    %1618 = vmatprep.subr.bf16.mxu0 0
    %1619 = vmatpush1.bf16.msra.mxu0 0
    %1620 = vmatprep.subr.bf16.mxu0 0
    %1621 = vmatpush1.bf16.msra.mxu0 0
    %1622 = vmatprep.subr.bf16.mxu0 0
    %1623 = vmatpush1.bf16.msra.mxu0 0
    %1624 = vmatprep.subr.bf16.mxu0 0
    %1625 = vmatpush1.bf16.msra.mxu0 0
    %1626 = vmatprep.subr.bf16.mxu0 0
    %1627 = vmatpush1.bf16.msra.mxu0 0
    %1628 = vmatprep.subr.bf16.mxu0 0
    %1629 = vmatpush1.bf16.msra.mxu0 0
    %1630 = vmatprep.subr.bf16.mxu0 0
    %1631 = vmatpush1.bf16.msra.mxu0 0
    %1632 = vmatprep.subr.bf16.mxu0 0
    %1633 = vmatpush1.bf16.msra.mxu0 0
    %1634 = vmatprep.subr.bf16.mxu0 0
    %1635 = vmatpush1.bf16.msra.mxu0 0
    %1636 = vmatprep.mubr.bf16.mxu0 0
    %1637 = vmatmul.mubr.bf16.gmra.mrb[0].mxu0 %v1602
    %v1638 = vpop.f32.mrb[0].mxu0
    %v1639 = vadd.f32 %v40, %v1638
    %v1640 = vpop.f32.mrb[0].mxu0
    %v1641 = vpop.f32.mrb[0].mxu0
    %v1642 = vpop.f32.mrb[0].mxu0
    %1643 = vdwg.mxu0
    %v1644 = vmax.f32 %v1639, 0.0
    %v1645 = vpack.c.bf16 %v1644, %v1644
    %1646 = vmatprep.subr.bf16.mxu0 0
    %1647 = vmatpush1.bf16.msra.mxu0 %v248
    %1648 = vmatprep.subr.bf16.mxu0 0
    %1649 = vmatpush1.bf16.msra.mxu0 %v249
    %1650 = vmatprep.subr.bf16.mxu0 0
    %1651 = vmatpush1.bf16.msra.mxu0 %v250
    %1652 = vmatprep.subr.bf16.mxu0 0
    %1653 = vmatpush1.bf16.msra.mxu0 %v251
    %1654 = vmatprep.subr.bf16.mxu0 0
    %1655 = vmatpush1.bf16.msra.mxu0 %v252
    %1656 = vmatprep.subr.bf16.mxu0 0
    %1657 = vmatpush1.bf16.msra.mxu0 %v253
    %1658 = vmatprep.subr.bf16.mxu0 0
    %1659 = vmatpush1.bf16.msra.mxu0 %v254
    %1660 = vmatprep.subr.bf16.mxu0 0
    %1661 = vmatpush1.bf16.msra.mxu0 %v255
    %1662 = vmatprep.subr.bf16.mxu0 0
    %1663 = vmatpush1.bf16.msra.mxu0 0
    %1664 = vmatprep.subr.bf16.mxu0 0
    %1665 = vmatpush1.bf16.msra.mxu0 0
    %1666 = vmatprep.subr.bf16.mxu0 0
    %1667 = vmatpush1.bf16.msra.mxu0 0
    %1668 = vmatprep.subr.bf16.mxu0 0
    %1669 = vmatpush1.bf16.msra.mxu0 0
    %1670 = vmatprep.subr.bf16.mxu0 0
    %1671 = vmatpush1.bf16.msra.mxu0 0
    %1672 = vmatprep.subr.bf16.mxu0 0
    %1673 = vmatpush1.bf16.msra.mxu0 0
    %1674 = vmatprep.subr.bf16.mxu0 0
    %1675 = vmatpush1.bf16.msra.mxu0 0
    %1676 = vmatprep.subr.bf16.mxu0 0
    %1677 = vmatpush1.bf16.msra.mxu0 0
    %1678 = vmatprep.mubr.bf16.mxu0 0
    %1679 = vmatmul.mubr.bf16.gmra.mrb[0].mxu0 %v1645
    %v1680 = vpop.f32.mrb[0].mxu0
    %v1681 = vadd.f32 %v57, %v1680
    %v1682 = vpop.f32.mrb[0].mxu0
    %v1683 = vpop.f32.mrb[0].mxu0
    %v1684 = vpop.f32.mrb[0].mxu0
    %1685 = vdwg.mxu0
    %v1686 = vtanh.pop %v1681
    %v1687 = vmul.f32 %v1686, %v1335
    %v1688 = vpack.c.bf16 %v1687, %v1687
    %1689 = vmatprep.subr.bf16.mxu0 0
    %1690 = vmatpush1.bf16.msra.mxu0 %v339
    %1691 = vmatprep.subr.bf16.mxu0 0
    %1692 = vmatpush1.bf16.msra.mxu0 %v340
    %1693 = vmatprep.subr.bf16.mxu0 0
    %1694 = vmatpush1.bf16.msra.mxu0 %v341
    %1695 = vmatprep.subr.bf16.mxu0 0
    %1696 = vmatpush1.bf16.msra.mxu0 %v342
    %1697 = vmatprep.subr.bf16.mxu0 0
    %1698 = vmatpush1.bf16.msra.mxu0 %v343
    %1699 = vmatprep.subr.bf16.mxu0 0
    %1700 = vmatpush1.bf16.msra.mxu0 %v344
    %1701 = vmatprep.subr.bf16.mxu0 0
    %1702 = vmatpush1.bf16.msra.mxu0 %v345
    %1703 = vmatprep.subr.bf16.mxu0 0
    %1704 = vmatpush1.bf16.msra.mxu0 %v346
    %1705 = vmatprep.subr.bf16.mxu0 0
    %1706 = vmatpush1.bf16.msra.mxu0 0
    %1707 = vmatprep.subr.bf16.mxu0 0
    %1708 = vmatpush1.bf16.msra.mxu0 0
    %1709 = vmatprep.subr.bf16.mxu0 0
    %1710 = vmatpush1.bf16.msra.mxu0 0
    %1711 = vmatprep.subr.bf16.mxu0 0
    %1712 = vmatpush1.bf16.msra.mxu0 0
    %1713 = vmatprep.subr.bf16.mxu0 0
    %1714 = vmatpush1.bf16.msra.mxu0 0
    %1715 = vmatprep.subr.bf16.mxu0 0
    %1716 = vmatpush1.bf16.msra.mxu0 0
    %1717 = vmatprep.subr.bf16.mxu0 0
    %1718 = vmatpush1.bf16.msra.mxu0 0
    %1719 = vmatprep.subr.bf16.mxu0 0
    %1720 = vmatpush1.bf16.msra.mxu0 0
    %1721 = vmatprep.mubr.bf16.mxu0 0
    %1722 = vmatmul.mubr.bf16.gmra.mrb[0].mxu0 %v1688
    %v1723 = vpop.f32.mrb[0].mxu0
    %v1724 = vadd.f32 0.0, %v1723
    %v1725 = vpop.f32.mrb[0].mxu0
    %v1726 = vpop.f32.mrb[0].mxu0
    %v1727 = vpop.f32.mrb[0].mxu0
    %1728 = vdwg.mxu0
    %v1729 = vsub.f32 %v1461, %v1592
    %v1730 = vadd.f32 %v1729, %v1724
    %v1731 = vadd.f32 %v1331, %v1730
    %v1732 = vpack.c.bf16 %v1731, %v1731
    %v1734 = vsel %vm170, %v1732, 0
    %1736 = vmatprep.subr.bf16.mxu0 0
    %1737 = vmatpush1.bf16.msra.mxu0 %v166
    %1738 = vmatprep.subr.bf16.mxu0 0
    %1739 = vmatpush1.bf16.msra.mxu0 %v167
    %1740 = vmatprep.subr.bf16.mxu0 0
    %1741 = vmatpush1.bf16.msra.mxu0 0
    %1742 = vmatprep.subr.bf16.mxu0 0
    %1743 = vmatpush1.bf16.msra.mxu0 0
    %1744 = vmatprep.subr.bf16.mxu0 0
    %1745 = vmatpush1.bf16.msra.mxu0 0
    %1746 = vmatprep.subr.bf16.mxu0 0
    %1747 = vmatpush1.bf16.msra.mxu0 0
    %1748 = vmatprep.subr.bf16.mxu0 0
    %1749 = vmatpush1.bf16.msra.mxu0 0
    %1750 = vmatprep.subr.bf16.mxu0 0
    %1751 = vmatpush1.bf16.msra.mxu0 0
    %1752 = vmatprep.subr.bf16.mxu0 0
    %1753 = vmatpush1.bf16.msra.mxu0 0
    %1754 = vmatprep.subr.bf16.mxu0 0
    %1755 = vmatpush1.bf16.msra.mxu0 0
    %1756 = vmatprep.subr.bf16.mxu0 0
    %1757 = vmatpush1.bf16.msra.mxu0 0
    %1758 = vmatprep.subr.bf16.mxu0 0
    %1759 = vmatpush1.bf16.msra.mxu0 0
    %1760 = vmatprep.subr.bf16.mxu0 0
    %1761 = vmatpush1.bf16.msra.mxu0 0
    %1762 = vmatprep.subr.bf16.mxu0 0
    %1763 = vmatpush1.bf16.msra.mxu0 0
    %1764 = vmatprep.subr.bf16.mxu0 0
    %1765 = vmatpush1.bf16.msra.mxu0 0
    %1766 = vmatprep.subr.bf16.mxu0 0
    %1767 = vmatpush1.bf16.msra.mxu0 0
    %1768 = vmatprep.mubr.bf16.mxu0 0
    %1769 = vmatmul.mubr.bf16.gmra.mrb[0].mxu0 %v1734
    %v1770 = vpop.f32.mrb[0].mxu0
    %v1771 = vadd.f32 %v40, %v1770
    %v1772 = vpop.f32.mrb[0].mxu0
    %v1773 = vpop.f32.mrb[0].mxu0
    %v1774 = vpop.f32.mrb[0].mxu0
    %1775 = vdwg.mxu0
    %v1776 = vmax.f32 %v1771, 0.0
    %v1777 = vpack.c.bf16 %v1776, %v1776
    %1778 = vmatprep.subr.bf16.mxu0 0
    %1779 = vmatpush1.bf16.msra.mxu0 %v248
    %1780 = vmatprep.subr.bf16.mxu0 0
    %1781 = vmatpush1.bf16.msra.mxu0 %v249
    %1782 = vmatprep.subr.bf16.mxu0 0
    %1783 = vmatpush1.bf16.msra.mxu0 %v250
    %1784 = vmatprep.subr.bf16.mxu0 0
    %1785 = vmatpush1.bf16.msra.mxu0 %v251
    %1786 = vmatprep.subr.bf16.mxu0 0
    %1787 = vmatpush1.bf16.msra.mxu0 %v252
    %1788 = vmatprep.subr.bf16.mxu0 0
    %1789 = vmatpush1.bf16.msra.mxu0 %v253
    %1790 = vmatprep.subr.bf16.mxu0 0
    %1791 = vmatpush1.bf16.msra.mxu0 %v254
    %1792 = vmatprep.subr.bf16.mxu0 0
    %1793 = vmatpush1.bf16.msra.mxu0 %v255
    %1794 = vmatprep.subr.bf16.mxu0 0
    %1795 = vmatpush1.bf16.msra.mxu0 0
    %1796 = vmatprep.subr.bf16.mxu0 0
    %1797 = vmatpush1.bf16.msra.mxu0 0
    %1798 = vmatprep.subr.bf16.mxu0 0
    %1799 = vmatpush1.bf16.msra.mxu0 0
    %1800 = vmatprep.subr.bf16.mxu0 0
    %1801 = vmatpush1.bf16.msra.mxu0 0
    %1802 = vmatprep.subr.bf16.mxu0 0
    %1803 = vmatpush1.bf16.msra.mxu0 0
    %1804 = vmatprep.subr.bf16.mxu0 0
    %1805 = vmatpush1.bf16.msra.mxu0 0
    %1806 = vmatprep.subr.bf16.mxu0 0
    %1807 = vmatpush1.bf16.msra.mxu0 0
    %1808 = vmatprep.subr.bf16.mxu0 0
    %1809 = vmatpush1.bf16.msra.mxu0 0
    %1810 = vmatprep.mubr.bf16.mxu0 0
    %1811 = vmatmul.mubr.bf16.gmra.mrb[0].mxu0 %v1777
    %v1812 = vpop.f32.mrb[0].mxu0
    %v1813 = vadd.f32 %v57, %v1812
    %v1814 = vpop.f32.mrb[0].mxu0
    %v1815 = vpop.f32.mrb[0].mxu0
    %v1816 = vpop.f32.mrb[0].mxu0
    %1817 = vdwg.mxu0
    %v1818 = vtanh.pop %v1813
    %v1819 = vmul.f32 %v1818, %v1336
    %v1820 = vpack.c.bf16 %v1819, %v1819
    %1821 = vmatprep.subr.bf16.mxu0 0
    %1822 = vmatpush1.bf16.msra.mxu0 %v339
    %1823 = vmatprep.subr.bf16.mxu0 0
    %1824 = vmatpush1.bf16.msra.mxu0 %v340
    %1825 = vmatprep.subr.bf16.mxu0 0
    %1826 = vmatpush1.bf16.msra.mxu0 %v341
    %1827 = vmatprep.subr.bf16.mxu0 0
    %1828 = vmatpush1.bf16.msra.mxu0 %v342
    %1829 = vmatprep.subr.bf16.mxu0 0
    %1830 = vmatpush1.bf16.msra.mxu0 %v343
    %1831 = vmatprep.subr.bf16.mxu0 0
    %1832 = vmatpush1.bf16.msra.mxu0 %v344
    %1833 = vmatprep.subr.bf16.mxu0 0
    %1834 = vmatpush1.bf16.msra.mxu0 %v345
    %1835 = vmatprep.subr.bf16.mxu0 0
    %1836 = vmatpush1.bf16.msra.mxu0 %v346
    %1837 = vmatprep.subr.bf16.mxu0 0
    %1838 = vmatpush1.bf16.msra.mxu0 0
    %1839 = vmatprep.subr.bf16.mxu0 0
    %1840 = vmatpush1.bf16.msra.mxu0 0
    %1841 = vmatprep.subr.bf16.mxu0 0
    %1842 = vmatpush1.bf16.msra.mxu0 0
    %1843 = vmatprep.subr.bf16.mxu0 0
    %1844 = vmatpush1.bf16.msra.mxu0 0
    %1845 = vmatprep.subr.bf16.mxu0 0
    %1846 = vmatpush1.bf16.msra.mxu0 0
    %1847 = vmatprep.subr.bf16.mxu0 0
    %1848 = vmatpush1.bf16.msra.mxu0 0
    %1849 = vmatprep.subr.bf16.mxu0 0
    %1850 = vmatpush1.bf16.msra.mxu0 0
    %1851 = vmatprep.subr.bf16.mxu0 0
    %1852 = vmatpush1.bf16.msra.mxu0 0
    %1853 = vmatprep.mubr.bf16.mxu0 0
    %1854 = vmatmul.mubr.bf16.gmra.mrb[0].mxu0 %v1820
    %v1855 = vpop.f32.mrb[0].mxu0
    %v1856 = vadd.f32 0.0, %v1855
    %v1857 = vpop.f32.mrb[0].mxu0
    %v1858 = vpop.f32.mrb[0].mxu0
    %v1859 = vpop.f32.mrb[0].mxu0
    %1860 = vdwg.mxu0
    %v1861 = vadd.f32 %v1592, %v1724
    %v1862 = vmul.f32 %v1861, 3.0
    %v1863 = vadd.f32 %v1461, %v1862
    %v1864 = vadd.f32 %v1863, %v1856
    %v1865 = vmul.f32 %v1864, 0.125
    %v1866 = vadd.f32 %v1331, %v1865
    %s1867 = scalar_lea.vmem %s1, 96
    %v1868 = vld [vmem:[%s1867] sm:$0xff]
    %v1869 = vld [vmem:[%s1867 + $0x8] sm:$0xff]
    %v1870 = vld [vmem:[%s1867 + $0x10] sm:$0xff]
    %v1871 = vld [vmem:[%s1867 + $0x18] sm:$0xff]
    %v1872 = vpack.c.bf16 %v1866, %v1866
    %v1874 = vsel %vm170, %v1872, 0
    %1876 = vmatprep.subr.bf16.mxu0 0
    %1877 = vmatpush1.bf16.msra.mxu0 %v166
    %1878 = vmatprep.subr.bf16.mxu0 0
    %1879 = vmatpush1.bf16.msra.mxu0 %v167
    %1880 = vmatprep.subr.bf16.mxu0 0
    %1881 = vmatpush1.bf16.msra.mxu0 0
    %1882 = vmatprep.subr.bf16.mxu0 0
    %1883 = vmatpush1.bf16.msra.mxu0 0
    %1884 = vmatprep.subr.bf16.mxu0 0
    %1885 = vmatpush1.bf16.msra.mxu0 0
    %1886 = vmatprep.subr.bf16.mxu0 0
    %1887 = vmatpush1.bf16.msra.mxu0 0
    %1888 = vmatprep.subr.bf16.mxu0 0
    %1889 = vmatpush1.bf16.msra.mxu0 0
    %1890 = vmatprep.subr.bf16.mxu0 0
    %1891 = vmatpush1.bf16.msra.mxu0 0
    %1892 = vmatprep.subr.bf16.mxu0 0
    %1893 = vmatpush1.bf16.msra.mxu0 0
    %1894 = vmatprep.subr.bf16.mxu0 0
    %1895 = vmatpush1.bf16.msra.mxu0 0
    %1896 = vmatprep.subr.bf16.mxu0 0
    %1897 = vmatpush1.bf16.msra.mxu0 0
    %1898 = vmatprep.subr.bf16.mxu0 0
    %1899 = vmatpush1.bf16.msra.mxu0 0
    %1900 = vmatprep.subr.bf16.mxu0 0
    %1901 = vmatpush1.bf16.msra.mxu0 0
    %1902 = vmatprep.subr.bf16.mxu0 0
    %1903 = vmatpush1.bf16.msra.mxu0 0
    %1904 = vmatprep.subr.bf16.mxu0 0
    %1905 = vmatpush1.bf16.msra.mxu0 0
    %1906 = vmatprep.subr.bf16.mxu0 0
    %1907 = vmatpush1.bf16.msra.mxu0 0
    %1908 = vmatprep.mubr.bf16.mxu0 0
    %1909 = vmatmul.mubr.bf16.gmra.mrb[0].mxu0 %v1874
    %v1910 = vpop.f32.mrb[0].mxu0
    %v1911 = vadd.f32 %v40, %v1910
    %v1912 = vpop.f32.mrb[0].mxu0
    %v1913 = vpop.f32.mrb[0].mxu0
    %v1914 = vpop.f32.mrb[0].mxu0
    %1915 = vdwg.mxu0
    %v1916 = vmax.f32 %v1911, 0.0
    %v1917 = vpack.c.bf16 %v1916, %v1916
    %1918 = vmatprep.subr.bf16.mxu0 0
    %1919 = vmatpush1.bf16.msra.mxu0 %v248
    %1920 = vmatprep.subr.bf16.mxu0 0
    %1921 = vmatpush1.bf16.msra.mxu0 %v249
    %1922 = vmatprep.subr.bf16.mxu0 0
    %1923 = vmatpush1.bf16.msra.mxu0 %v250
    %1924 = vmatprep.subr.bf16.mxu0 0
    %1925 = vmatpush1.bf16.msra.mxu0 %v251
    %1926 = vmatprep.subr.bf16.mxu0 0
    %1927 = vmatpush1.bf16.msra.mxu0 %v252
    %1928 = vmatprep.subr.bf16.mxu0 0
    %1929 = vmatpush1.bf16.msra.mxu0 %v253
    %1930 = vmatprep.subr.bf16.mxu0 0
    %1931 = vmatpush1.bf16.msra.mxu0 %v254
    %1932 = vmatprep.subr.bf16.mxu0 0
    %1933 = vmatpush1.bf16.msra.mxu0 %v255
    %1934 = vmatprep.subr.bf16.mxu0 0
    %1935 = vmatpush1.bf16.msra.mxu0 0
    %1936 = vmatprep.subr.bf16.mxu0 0
    %1937 = vmatpush1.bf16.msra.mxu0 0
    %1938 = vmatprep.subr.bf16.mxu0 0
    %1939 = vmatpush1.bf16.msra.mxu0 0
    %1940 = vmatprep.subr.bf16.mxu0 0
    %1941 = vmatpush1.bf16.msra.mxu0 0
    %1942 = vmatprep.subr.bf16.mxu0 0
    %1943 = vmatpush1.bf16.msra.mxu0 0
    %1944 = vmatprep.subr.bf16.mxu0 0
    %1945 = vmatpush1.bf16.msra.mxu0 0
    %1946 = vmatprep.subr.bf16.mxu0 0
    %1947 = vmatpush1.bf16.msra.mxu0 0
    %1948 = vmatprep.subr.bf16.mxu0 0
    %1949 = vmatpush1.bf16.msra.mxu0 0
    %1950 = vmatprep.mubr.bf16.mxu0 0
    %1951 = vmatmul.mubr.bf16.gmra.mrb[0].mxu0 %v1917
    %v1952 = vpop.f32.mrb[0].mxu0
    %v1953 = vadd.f32 %v57, %v1952
    %v1954 = vpop.f32.mrb[0].mxu0
    %v1955 = vpop.f32.mrb[0].mxu0
    %v1956 = vpop.f32.mrb[0].mxu0
    %1957 = vdwg.mxu0
    %v1958 = vtanh.pop %v1953
    %v1959 = vmul.f32 %v1958, %v1868
    %v1960 = vpack.c.bf16 %v1959, %v1959
    %1961 = vmatprep.subr.bf16.mxu0 0
    %1962 = vmatpush1.bf16.msra.mxu0 %v339
    %1963 = vmatprep.subr.bf16.mxu0 0
    %1964 = vmatpush1.bf16.msra.mxu0 %v340
    %1965 = vmatprep.subr.bf16.mxu0 0
    %1966 = vmatpush1.bf16.msra.mxu0 %v341
    %1967 = vmatprep.subr.bf16.mxu0 0
    %1968 = vmatpush1.bf16.msra.mxu0 %v342
    %1969 = vmatprep.subr.bf16.mxu0 0
    %1970 = vmatpush1.bf16.msra.mxu0 %v343
    %1971 = vmatprep.subr.bf16.mxu0 0
    %1972 = vmatpush1.bf16.msra.mxu0 %v344
    %1973 = vmatprep.subr.bf16.mxu0 0
    %1974 = vmatpush1.bf16.msra.mxu0 %v345
    %1975 = vmatprep.subr.bf16.mxu0 0
    %1976 = vmatpush1.bf16.msra.mxu0 %v346
    %1977 = vmatprep.subr.bf16.mxu0 0
    %1978 = vmatpush1.bf16.msra.mxu0 0
    %1979 = vmatprep.subr.bf16.mxu0 0
    %1980 = vmatpush1.bf16.msra.mxu0 0
    %1981 = vmatprep.subr.bf16.mxu0 0
    %1982 = vmatpush1.bf16.msra.mxu0 0
    %1983 = vmatprep.subr.bf16.mxu0 0
    %1984 = vmatpush1.bf16.msra.mxu0 0
    %1985 = vmatprep.subr.bf16.mxu0 0
    %1986 = vmatpush1.bf16.msra.mxu0 0
    %1987 = vmatprep.subr.bf16.mxu0 0
    %1988 = vmatpush1.bf16.msra.mxu0 0
    %1989 = vmatprep.subr.bf16.mxu0 0
    %1990 = vmatpush1.bf16.msra.mxu0 0
    %1991 = vmatprep.subr.bf16.mxu0 0
    %1992 = vmatpush1.bf16.msra.mxu0 0
    %1993 = vmatprep.mubr.bf16.mxu0 0
    %1994 = vmatmul.mubr.bf16.gmra.mrb[0].mxu0 %v1960
    %v1995 = vpop.f32.mrb[0].mxu0
    %v1996 = vadd.f32 0.0, %v1995
    %v1997 = vpop.f32.mrb[0].mxu0
    %v1998 = vpop.f32.mrb[0].mxu0
    %v1999 = vpop.f32.mrb[0].mxu0
    %2000 = vdwg.mxu0
    %v2001 = vmul.f32 %v1996, 0.33333334
    %v2002 = vadd.f32 %v1866, %v2001
    %v2003 = vpack.c.bf16 %v2002, %v2002
    %v2005 = vsel %vm170, %v2003, 0
    %2007 = vmatprep.subr.bf16.mxu0 0
    %2008 = vmatpush1.bf16.msra.mxu0 %v166
    %2009 = vmatprep.subr.bf16.mxu0 0
    %2010 = vmatpush1.bf16.msra.mxu0 %v167
    %2011 = vmatprep.subr.bf16.mxu0 0
    %2012 = vmatpush1.bf16.msra.mxu0 0
    %2013 = vmatprep.subr.bf16.mxu0 0
    %2014 = vmatpush1.bf16.msra.mxu0 0
    %2015 = vmatprep.subr.bf16.mxu0 0
    %2016 = vmatpush1.bf16.msra.mxu0 0
    %2017 = vmatprep.subr.bf16.mxu0 0
    %2018 = vmatpush1.bf16.msra.mxu0 0
    %2019 = vmatprep.subr.bf16.mxu0 0
    %2020 = vmatpush1.bf16.msra.mxu0 0
    %2021 = vmatprep.subr.bf16.mxu0 0
    %2022 = vmatpush1.bf16.msra.mxu0 0
    %2023 = vmatprep.subr.bf16.mxu0 0
    %2024 = vmatpush1.bf16.msra.mxu0 0
    %2025 = vmatprep.subr.bf16.mxu0 0
    %2026 = vmatpush1.bf16.msra.mxu0 0
    %2027 = vmatprep.subr.bf16.mxu0 0
    %2028 = vmatpush1.bf16.msra.mxu0 0
    %2029 = vmatprep.subr.bf16.mxu0 0
    %2030 = vmatpush1.bf16.msra.mxu0 0
    %2031 = vmatprep.subr.bf16.mxu0 0
    %2032 = vmatpush1.bf16.msra.mxu0 0
    %2033 = vmatprep.subr.bf16.mxu0 0
    %2034 = vmatpush1.bf16.msra.mxu0 0
    %2035 = vmatprep.subr.bf16.mxu0 0
    %2036 = vmatpush1.bf16.msra.mxu0 0
    %2037 = vmatprep.subr.bf16.mxu0 0
    %2038 = vmatpush1.bf16.msra.mxu0 0
    %2039 = vmatprep.mubr.bf16.mxu0 0
    %2040 = vmatmul.mubr.bf16.gmra.mrb[0].mxu0 %v2005
    %v2041 = vpop.f32.mrb[0].mxu0
    %v2042 = vadd.f32 %v40, %v2041
    %v2043 = vpop.f32.mrb[0].mxu0
    %v2044 = vpop.f32.mrb[0].mxu0
    %v2045 = vpop.f32.mrb[0].mxu0
    %2046 = vdwg.mxu0
    %v2047 = vmax.f32 %v2042, 0.0
    %v2048 = vpack.c.bf16 %v2047, %v2047
    %2049 = vmatprep.subr.bf16.mxu0 0
    %2050 = vmatpush1.bf16.msra.mxu0 %v248
    %2051 = vmatprep.subr.bf16.mxu0 0
    %2052 = vmatpush1.bf16.msra.mxu0 %v249
    %2053 = vmatprep.subr.bf16.mxu0 0
    %2054 = vmatpush1.bf16.msra.mxu0 %v250
    %2055 = vmatprep.subr.bf16.mxu0 0
    %2056 = vmatpush1.bf16.msra.mxu0 %v251
    %2057 = vmatprep.subr.bf16.mxu0 0
    %2058 = vmatpush1.bf16.msra.mxu0 %v252
    %2059 = vmatprep.subr.bf16.mxu0 0
    %2060 = vmatpush1.bf16.msra.mxu0 %v253
    %2061 = vmatprep.subr.bf16.mxu0 0
    %2062 = vmatpush1.bf16.msra.mxu0 %v254
    %2063 = vmatprep.subr.bf16.mxu0 0
    %2064 = vmatpush1.bf16.msra.mxu0 %v255
    %2065 = vmatprep.subr.bf16.mxu0 0
    %2066 = vmatpush1.bf16.msra.mxu0 0
    %2067 = vmatprep.subr.bf16.mxu0 0
    %2068 = vmatpush1.bf16.msra.mxu0 0
    %2069 = vmatprep.subr.bf16.mxu0 0
    %2070 = vmatpush1.bf16.msra.mxu0 0
    %2071 = vmatprep.subr.bf16.mxu0 0
    %2072 = vmatpush1.bf16.msra.mxu0 0
    %2073 = vmatprep.subr.bf16.mxu0 0
    %2074 = vmatpush1.bf16.msra.mxu0 0
    %2075 = vmatprep.subr.bf16.mxu0 0
    %2076 = vmatpush1.bf16.msra.mxu0 0
    %2077 = vmatprep.subr.bf16.mxu0 0
    %2078 = vmatpush1.bf16.msra.mxu0 0
    %2079 = vmatprep.subr.bf16.mxu0 0
    %2080 = vmatpush1.bf16.msra.mxu0 0
    %2081 = vmatprep.mubr.bf16.mxu0 0
    %2082 = vmatmul.mubr.bf16.gmra.mrb[0].mxu0 %v2048
    %v2083 = vpop.f32.mrb[0].mxu0
    %v2084 = vadd.f32 %v57, %v2083
    %v2085 = vpop.f32.mrb[0].mxu0
    %v2086 = vpop.f32.mrb[0].mxu0
    %v2087 = vpop.f32.mrb[0].mxu0
    %2088 = vdwg.mxu0
    %v2089 = vtanh.pop %v2084
    %v2090 = vmul.f32 %v2089, %v1869
    %v2091 = vpack.c.bf16 %v2090, %v2090
    %2092 = vmatprep.subr.bf16.mxu0 0
    %2093 = vmatpush1.bf16.msra.mxu0 %v339
    %2094 = vmatprep.subr.bf16.mxu0 0
    %2095 = vmatpush1.bf16.msra.mxu0 %v340
    %2096 = vmatprep.subr.bf16.mxu0 0
    %2097 = vmatpush1.bf16.msra.mxu0 %v341
    %2098 = vmatprep.subr.bf16.mxu0 0
    %2099 = vmatpush1.bf16.msra.mxu0 %v342
    %2100 = vmatprep.subr.bf16.mxu0 0
    %2101 = vmatpush1.bf16.msra.mxu0 %v343
    %2102 = vmatprep.subr.bf16.mxu0 0
    %2103 = vmatpush1.bf16.msra.mxu0 %v344
    %2104 = vmatprep.subr.bf16.mxu0 0
    %2105 = vmatpush1.bf16.msra.mxu0 %v345
    %2106 = vmatprep.subr.bf16.mxu0 0
    %2107 = vmatpush1.bf16.msra.mxu0 %v346
    %2108 = vmatprep.subr.bf16.mxu0 0
    %2109 = vmatpush1.bf16.msra.mxu0 0
    %2110 = vmatprep.subr.bf16.mxu0 0
    %2111 = vmatpush1.bf16.msra.mxu0 0
    %2112 = vmatprep.subr.bf16.mxu0 0
    %2113 = vmatpush1.bf16.msra.mxu0 0
    %2114 = vmatprep.subr.bf16.mxu0 0
    %2115 = vmatpush1.bf16.msra.mxu0 0
    %2116 = vmatprep.subr.bf16.mxu0 0
    %2117 = vmatpush1.bf16.msra.mxu0 0
    %2118 = vmatprep.subr.bf16.mxu0 0
    %2119 = vmatpush1.bf16.msra.mxu0 0
    %2120 = vmatprep.subr.bf16.mxu0 0
    %2121 = vmatpush1.bf16.msra.mxu0 0
    %2122 = vmatprep.subr.bf16.mxu0 0
    %2123 = vmatpush1.bf16.msra.mxu0 0
    %2124 = vmatprep.mubr.bf16.mxu0 0
    %2125 = vmatmul.mubr.bf16.gmra.mrb[0].mxu0 %v2091
    %v2126 = vpop.f32.mrb[0].mxu0
    %v2127 = vadd.f32 0.0, %v2126
    %v2128 = vpop.f32.mrb[0].mxu0
    %v2129 = vpop.f32.mrb[0].mxu0
    %v2130 = vpop.f32.mrb[0].mxu0
    %2131 = vdwg.mxu0
    %v2132 = vmul.f32 %v1996, %v526
    %v2133 = vsub.f32 %v2127, %v2132
    %v2134 = vadd.f32 %v1866, %v2133
    %v2135 = vpack.c.bf16 %v2134, %v2134
    %v2137 = vsel %vm170, %v2135, 0
    %2139 = vmatprep.subr.bf16.mxu0 0
    %2140 = vmatpush1.bf16.msra.mxu0 %v166
    %2141 = vmatprep.subr.bf16.mxu0 0
    %2142 = vmatpush1.bf16.msra.mxu0 %v167
    %2143 = vmatprep.subr.bf16.mxu0 0
    %2144 = vmatpush1.bf16.msra.mxu0 0
    %2145 = vmatprep.subr.bf16.mxu0 0
    %2146 = vmatpush1.bf16.msra.mxu0 0
    %2147 = vmatprep.subr.bf16.mxu0 0
    %2148 = vmatpush1.bf16.msra.mxu0 0
    %2149 = vmatprep.subr.bf16.mxu0 0
    %2150 = vmatpush1.bf16.msra.mxu0 0
    %2151 = vmatprep.subr.bf16.mxu0 0
    %2152 = vmatpush1.bf16.msra.mxu0 0
    %2153 = vmatprep.subr.bf16.mxu0 0
    %2154 = vmatpush1.bf16.msra.mxu0 0
    %2155 = vmatprep.subr.bf16.mxu0 0
    %2156 = vmatpush1.bf16.msra.mxu0 0
    %2157 = vmatprep.subr.bf16.mxu0 0
    %2158 = vmatpush1.bf16.msra.mxu0 0
    %2159 = vmatprep.subr.bf16.mxu0 0
    %2160 = vmatpush1.bf16.msra.mxu0 0
    %2161 = vmatprep.subr.bf16.mxu0 0
    %2162 = vmatpush1.bf16.msra.mxu0 0
    %2163 = vmatprep.subr.bf16.mxu0 0
    %2164 = vmatpush1.bf16.msra.mxu0 0
    %2165 = vmatprep.subr.bf16.mxu0 0
    %2166 = vmatpush1.bf16.msra.mxu0 0
    %2167 = vmatprep.subr.bf16.mxu0 0
    %2168 = vmatpush1.bf16.msra.mxu0 0
    %2169 = vmatprep.subr.bf16.mxu0 0
    %2170 = vmatpush1.bf16.msra.mxu0 0
    %2171 = vmatprep.mubr.bf16.mxu0 0
    %2172 = vmatmul.mubr.bf16.gmra.mrb[0].mxu0 %v2137
    %v2173 = vpop.f32.mrb[0].mxu0
    %v2174 = vadd.f32 %v40, %v2173
    %v2175 = vpop.f32.mrb[0].mxu0
    %v2176 = vpop.f32.mrb[0].mxu0
    %v2177 = vpop.f32.mrb[0].mxu0
    %2178 = vdwg.mxu0
    %v2179 = vmax.f32 %v2174, 0.0
    %v2180 = vpack.c.bf16 %v2179, %v2179
    %2181 = vmatprep.subr.bf16.mxu0 0
    %2182 = vmatpush1.bf16.msra.mxu0 %v248
    %2183 = vmatprep.subr.bf16.mxu0 0
    %2184 = vmatpush1.bf16.msra.mxu0 %v249
    %2185 = vmatprep.subr.bf16.mxu0 0
    %2186 = vmatpush1.bf16.msra.mxu0 %v250
    %2187 = vmatprep.subr.bf16.mxu0 0
    %2188 = vmatpush1.bf16.msra.mxu0 %v251
    %2189 = vmatprep.subr.bf16.mxu0 0
    %2190 = vmatpush1.bf16.msra.mxu0 %v252
    %2191 = vmatprep.subr.bf16.mxu0 0
    %2192 = vmatpush1.bf16.msra.mxu0 %v253
    %2193 = vmatprep.subr.bf16.mxu0 0
    %2194 = vmatpush1.bf16.msra.mxu0 %v254
    %2195 = vmatprep.subr.bf16.mxu0 0
    %2196 = vmatpush1.bf16.msra.mxu0 %v255
    %2197 = vmatprep.subr.bf16.mxu0 0
    %2198 = vmatpush1.bf16.msra.mxu0 0
    %2199 = vmatprep.subr.bf16.mxu0 0
    %2200 = vmatpush1.bf16.msra.mxu0 0
    %2201 = vmatprep.subr.bf16.mxu0 0
    %2202 = vmatpush1.bf16.msra.mxu0 0
    %2203 = vmatprep.subr.bf16.mxu0 0
    %2204 = vmatpush1.bf16.msra.mxu0 0
    %2205 = vmatprep.subr.bf16.mxu0 0
    %2206 = vmatpush1.bf16.msra.mxu0 0
    %2207 = vmatprep.subr.bf16.mxu0 0
    %2208 = vmatpush1.bf16.msra.mxu0 0
    %2209 = vmatprep.subr.bf16.mxu0 0
    %2210 = vmatpush1.bf16.msra.mxu0 0
    %2211 = vmatprep.subr.bf16.mxu0 0
    %2212 = vmatpush1.bf16.msra.mxu0 0
    %2213 = vmatprep.mubr.bf16.mxu0 0
    %2214 = vmatmul.mubr.bf16.gmra.mrb[0].mxu0 %v2180
    %v2215 = vpop.f32.mrb[0].mxu0
    %v2216 = vadd.f32 %v57, %v2215
    %v2217 = vpop.f32.mrb[0].mxu0
    %v2218 = vpop.f32.mrb[0].mxu0
    %v2219 = vpop.f32.mrb[0].mxu0
    %2220 = vdwg.mxu0
    %v2221 = vtanh.pop %v2216
    %v2222 = vmul.f32 %v2221, %v1870
    %v2223 = vpack.c.bf16 %v2222, %v2222
    %2224 = vmatprep.subr.bf16.mxu0 0
    %2225 = vmatpush1.bf16.msra.mxu0 %v339
    %2226 = vmatprep.subr.bf16.mxu0 0
    %2227 = vmatpush1.bf16.msra.mxu0 %v340
    %2228 = vmatprep.subr.bf16.mxu0 0
    %2229 = vmatpush1.bf16.msra.mxu0 %v341
    %2230 = vmatprep.subr.bf16.mxu0 0
    %2231 = vmatpush1.bf16.msra.mxu0 %v342
    %2232 = vmatprep.subr.bf16.mxu0 0
    %2233 = vmatpush1.bf16.msra.mxu0 %v343
    %2234 = vmatprep.subr.bf16.mxu0 0
    %2235 = vmatpush1.bf16.msra.mxu0 %v344
    %2236 = vmatprep.subr.bf16.mxu0 0
    %2237 = vmatpush1.bf16.msra.mxu0 %v345
    %2238 = vmatprep.subr.bf16.mxu0 0
    %2239 = vmatpush1.bf16.msra.mxu0 %v346
    %2240 = vmatprep.subr.bf16.mxu0 0
    %2241 = vmatpush1.bf16.msra.mxu0 0
    %2242 = vmatprep.subr.bf16.mxu0 0
    %2243 = vmatpush1.bf16.msra.mxu0 0
    %2244 = vmatprep.subr.bf16.mxu0 0
    %2245 = vmatpush1.bf16.msra.mxu0 0
    %2246 = vmatprep.subr.bf16.mxu0 0
    %2247 = vmatpush1.bf16.msra.mxu0 0
    %2248 = vmatprep.subr.bf16.mxu0 0
    %2249 = vmatpush1.bf16.msra.mxu0 0
    %2250 = vmatprep.subr.bf16.mxu0 0
    %2251 = vmatpush1.bf16.msra.mxu0 0
    %2252 = vmatprep.subr.bf16.mxu0 0
    %2253 = vmatpush1.bf16.msra.mxu0 0
    %2254 = vmatprep.subr.bf16.mxu0 0
    %2255 = vmatpush1.bf16.msra.mxu0 0
    %2256 = vmatprep.mubr.bf16.mxu0 0
    %2257 = vmatmul.mubr.bf16.gmra.mrb[0].mxu0 %v2223
    %v2258 = vpop.f32.mrb[0].mxu0
    %v2259 = vadd.f32 0.0, %v2258
    %v2260 = vpop.f32.mrb[0].mxu0
    %v2261 = vpop.f32.mrb[0].mxu0
    %v2262 = vpop.f32.mrb[0].mxu0
    %2263 = vdwg.mxu0
    %v2264 = vsub.f32 %v1996, %v2127
    %v2265 = vadd.f32 %v2264, %v2259
    %v2266 = vadd.f32 %v1866, %v2265
    %v2267 = vpack.c.bf16 %v2266, %v2266
    %v2269 = vsel %vm170, %v2267, 0
    %2271 = vmatprep.subr.bf16.mxu0 0
    %2272 = vmatpush1.bf16.msra.mxu0 %v166
    %2273 = vmatprep.subr.bf16.mxu0 0
    %2274 = vmatpush1.bf16.msra.mxu0 %v167
    %2275 = vmatprep.subr.bf16.mxu0 0
    %2276 = vmatpush1.bf16.msra.mxu0 0
    %2277 = vmatprep.subr.bf16.mxu0 0
    %2278 = vmatpush1.bf16.msra.mxu0 0
    %2279 = vmatprep.subr.bf16.mxu0 0
    %2280 = vmatpush1.bf16.msra.mxu0 0
    %2281 = vmatprep.subr.bf16.mxu0 0
    %2282 = vmatpush1.bf16.msra.mxu0 0
    %2283 = vmatprep.subr.bf16.mxu0 0
    %2284 = vmatpush1.bf16.msra.mxu0 0
    %2285 = vmatprep.subr.bf16.mxu0 0
    %2286 = vmatpush1.bf16.msra.mxu0 0
    %2287 = vmatprep.subr.bf16.mxu0 0
    %2288 = vmatpush1.bf16.msra.mxu0 0
    %2289 = vmatprep.subr.bf16.mxu0 0
    %2290 = vmatpush1.bf16.msra.mxu0 0
    %2291 = vmatprep.subr.bf16.mxu0 0
    %2292 = vmatpush1.bf16.msra.mxu0 0
    %2293 = vmatprep.subr.bf16.mxu0 0
    %2294 = vmatpush1.bf16.msra.mxu0 0
    %2295 = vmatprep.subr.bf16.mxu0 0
    %2296 = vmatpush1.bf16.msra.mxu0 0
    %2297 = vmatprep.subr.bf16.mxu0 0
    %2298 = vmatpush1.bf16.msra.mxu0 0
    %2299 = vmatprep.subr.bf16.mxu0 0
    %2300 = vmatpush1.bf16.msra.mxu0 0
    %2301 = vmatprep.subr.bf16.mxu0 0
    %2302 = vmatpush1.bf16.msra.mxu0 0
    %2303 = vmatprep.mubr.bf16.mxu0 0
    %2304 = vmatmul.mubr.bf16.gmra.mrb[0].mxu0 %v2269
    %v2305 = vpop.f32.mrb[0].mxu0
    %v2306 = vadd.f32 %v40, %v2305
    %v2307 = vpop.f32.mrb[0].mxu0
    %v2308 = vpop.f32.mrb[0].mxu0
    %v2309 = vpop.f32.mrb[0].mxu0
    %2310 = vdwg.mxu0
    %v2311 = vmax.f32 %v2306, 0.0
    %v2312 = vpack.c.bf16 %v2311, %v2311
    %2313 = vmatprep.subr.bf16.mxu0 0
    %2314 = vmatpush1.bf16.msra.mxu0 %v248
    %2315 = vmatprep.subr.bf16.mxu0 0
    %2316 = vmatpush1.bf16.msra.mxu0 %v249
    %2317 = vmatprep.subr.bf16.mxu0 0
    %2318 = vmatpush1.bf16.msra.mxu0 %v250
    %2319 = vmatprep.subr.bf16.mxu0 0
    %2320 = vmatpush1.bf16.msra.mxu0 %v251
    %2321 = vmatprep.subr.bf16.mxu0 0
    %2322 = vmatpush1.bf16.msra.mxu0 %v252
    %2323 = vmatprep.subr.bf16.mxu0 0
    %2324 = vmatpush1.bf16.msra.mxu0 %v253
    %2325 = vmatprep.subr.bf16.mxu0 0
    %2326 = vmatpush1.bf16.msra.mxu0 %v254
    %2327 = vmatprep.subr.bf16.mxu0 0
    %2328 = vmatpush1.bf16.msra.mxu0 %v255
    %2329 = vmatprep.subr.bf16.mxu0 0
    %2330 = vmatpush1.bf16.msra.mxu0 0
    %2331 = vmatprep.subr.bf16.mxu0 0
    %2332 = vmatpush1.bf16.msra.mxu0 0
    %2333 = vmatprep.subr.bf16.mxu0 0
    %2334 = vmatpush1.bf16.msra.mxu0 0
    %2335 = vmatprep.subr.bf16.mxu0 0
    %2336 = vmatpush1.bf16.msra.mxu0 0
    %2337 = vmatprep.subr.bf16.mxu0 0
    %2338 = vmatpush1.bf16.msra.mxu0 0
    %2339 = vmatprep.subr.bf16.mxu0 0
    %2340 = vmatpush1.bf16.msra.mxu0 0
    %2341 = vmatprep.subr.bf16.mxu0 0
    %2342 = vmatpush1.bf16.msra.mxu0 0
    %2343 = vmatprep.subr.bf16.mxu0 0
    %2344 = vmatpush1.bf16.msra.mxu0 0
    %2345 = vmatprep.mubr.bf16.mxu0 0
    %2346 = vmatmul.mubr.bf16.gmra.mrb[0].mxu0 %v2312
    %v2347 = vpop.f32.mrb[0].mxu0
    %v2348 = vadd.f32 %v57, %v2347
    %v2349 = vpop.f32.mrb[0].mxu0
    %v2350 = vpop.f32.mrb[0].mxu0
    %v2351 = vpop.f32.mrb[0].mxu0
    %2352 = vdwg.mxu0
    %v2353 = vtanh.pop %v2348
    %v2354 = vmul.f32 %v2353, %v1871
    %v2355 = vpack.c.bf16 %v2354, %v2354
    %2356 = vmatprep.subr.bf16.mxu0 0
    %2357 = vmatpush1.bf16.msra.mxu0 %v339
    %2358 = vmatprep.subr.bf16.mxu0 0
    %2359 = vmatpush1.bf16.msra.mxu0 %v340
    %2360 = vmatprep.subr.bf16.mxu0 0
    %2361 = vmatpush1.bf16.msra.mxu0 %v341
    %2362 = vmatprep.subr.bf16.mxu0 0
    %2363 = vmatpush1.bf16.msra.mxu0 %v342
    %2364 = vmatprep.subr.bf16.mxu0 0
    %2365 = vmatpush1.bf16.msra.mxu0 %v343
    %2366 = vmatprep.subr.bf16.mxu0 0
    %2367 = vmatpush1.bf16.msra.mxu0 %v344
    %2368 = vmatprep.subr.bf16.mxu0 0
    %2369 = vmatpush1.bf16.msra.mxu0 %v345
    %2370 = vmatprep.subr.bf16.mxu0 0
    %2371 = vmatpush1.bf16.msra.mxu0 %v346
    %2372 = vmatprep.subr.bf16.mxu0 0
    %2373 = vmatpush1.bf16.msra.mxu0 0
    %2374 = vmatprep.subr.bf16.mxu0 0
    %2375 = vmatpush1.bf16.msra.mxu0 0
    %2376 = vmatprep.subr.bf16.mxu0 0
    %2377 = vmatpush1.bf16.msra.mxu0 0
    %2378 = vmatprep.subr.bf16.mxu0 0
    %2379 = vmatpush1.bf16.msra.mxu0 0
    %2380 = vmatprep.subr.bf16.mxu0 0
    %2381 = vmatpush1.bf16.msra.mxu0 0
    %2382 = vmatprep.subr.bf16.mxu0 0
    %2383 = vmatpush1.bf16.msra.mxu0 0
    %2384 = vmatprep.subr.bf16.mxu0 0
    %2385 = vmatpush1.bf16.msra.mxu0 0
    %2386 = vmatprep.subr.bf16.mxu0 0
    %2387 = vmatpush1.bf16.msra.mxu0 0
    %2388 = vmatprep.mubr.bf16.mxu0 0
    %2389 = vmatmul.mubr.bf16.gmra.mrb[0].mxu0 %v2355
    %v2390 = vpop.f32.mrb[0].mxu0
    %v2391 = vadd.f32 0.0, %v2390
    %v2392 = vpop.f32.mrb[0].mxu0
    %v2393 = vpop.f32.mrb[0].mxu0
    %v2394 = vpop.f32.mrb[0].mxu0
    %2395 = vdwg.mxu0
    %v2396 = vadd.f32 %v2127, %v2259
    %v2397 = vmul.f32 %v2396, 3.0
    %v2398 = vadd.f32 %v1996, %v2397
    %v2399 = vadd.f32 %v2398, %v2391
    %v2400 = vmul.f32 %v2399, 0.125
    %v2401 = vadd.f32 %v1866, %v2400
    %s2402 = scalar_lea.vmem %s1, 128
    %v2403 = vld [vmem:[%s2402] sm:$0xff]
    %v2404 = vld [vmem:[%s2402 + $0x8] sm:$0xff]
    %v2405 = vld [vmem:[%s2402 + $0x10] sm:$0xff]
    %v2406 = vld [vmem:[%s2402 + $0x18] sm:$0xff]
    %v2407 = vpack.c.bf16 %v2401, %v2401
    %v2409 = vsel %vm170, %v2407, 0
    %2411 = vmatprep.subr.bf16.mxu0 0
    %2412 = vmatpush1.bf16.msra.mxu0 %v166
    %2413 = vmatprep.subr.bf16.mxu0 0
    %2414 = vmatpush1.bf16.msra.mxu0 %v167
    %2415 = vmatprep.subr.bf16.mxu0 0
    %2416 = vmatpush1.bf16.msra.mxu0 0
    %2417 = vmatprep.subr.bf16.mxu0 0
    %2418 = vmatpush1.bf16.msra.mxu0 0
    %2419 = vmatprep.subr.bf16.mxu0 0
    %2420 = vmatpush1.bf16.msra.mxu0 0
    %2421 = vmatprep.subr.bf16.mxu0 0
    %2422 = vmatpush1.bf16.msra.mxu0 0
    %2423 = vmatprep.subr.bf16.mxu0 0
    %2424 = vmatpush1.bf16.msra.mxu0 0
    %2425 = vmatprep.subr.bf16.mxu0 0
    %2426 = vmatpush1.bf16.msra.mxu0 0
    %2427 = vmatprep.subr.bf16.mxu0 0
    %2428 = vmatpush1.bf16.msra.mxu0 0
    %2429 = vmatprep.subr.bf16.mxu0 0
    %2430 = vmatpush1.bf16.msra.mxu0 0
    %2431 = vmatprep.subr.bf16.mxu0 0
    %2432 = vmatpush1.bf16.msra.mxu0 0
    %2433 = vmatprep.subr.bf16.mxu0 0
    %2434 = vmatpush1.bf16.msra.mxu0 0
    %2435 = vmatprep.subr.bf16.mxu0 0
    %2436 = vmatpush1.bf16.msra.mxu0 0
    %2437 = vmatprep.subr.bf16.mxu0 0
    %2438 = vmatpush1.bf16.msra.mxu0 0
    %2439 = vmatprep.subr.bf16.mxu0 0
    %2440 = vmatpush1.bf16.msra.mxu0 0
    %2441 = vmatprep.subr.bf16.mxu0 0
    %2442 = vmatpush1.bf16.msra.mxu0 0
    %2443 = vmatprep.mubr.bf16.mxu0 0
    %2444 = vmatmul.mubr.bf16.gmra.mrb[0].mxu0 %v2409
    %v2445 = vpop.f32.mrb[0].mxu0
    %v2446 = vadd.f32 %v40, %v2445
    %v2447 = vpop.f32.mrb[0].mxu0
    %v2448 = vpop.f32.mrb[0].mxu0
    %v2449 = vpop.f32.mrb[0].mxu0
    %2450 = vdwg.mxu0
    %v2451 = vmax.f32 %v2446, 0.0
    %v2452 = vpack.c.bf16 %v2451, %v2451
    %2453 = vmatprep.subr.bf16.mxu0 0
    %2454 = vmatpush1.bf16.msra.mxu0 %v248
    %2455 = vmatprep.subr.bf16.mxu0 0
    %2456 = vmatpush1.bf16.msra.mxu0 %v249
    %2457 = vmatprep.subr.bf16.mxu0 0
    %2458 = vmatpush1.bf16.msra.mxu0 %v250
    %2459 = vmatprep.subr.bf16.mxu0 0
    %2460 = vmatpush1.bf16.msra.mxu0 %v251
    %2461 = vmatprep.subr.bf16.mxu0 0
    %2462 = vmatpush1.bf16.msra.mxu0 %v252
    %2463 = vmatprep.subr.bf16.mxu0 0
    %2464 = vmatpush1.bf16.msra.mxu0 %v253
    %2465 = vmatprep.subr.bf16.mxu0 0
    %2466 = vmatpush1.bf16.msra.mxu0 %v254
    %2467 = vmatprep.subr.bf16.mxu0 0
    %2468 = vmatpush1.bf16.msra.mxu0 %v255
    %2469 = vmatprep.subr.bf16.mxu0 0
    %2470 = vmatpush1.bf16.msra.mxu0 0
    %2471 = vmatprep.subr.bf16.mxu0 0
    %2472 = vmatpush1.bf16.msra.mxu0 0
    %2473 = vmatprep.subr.bf16.mxu0 0
    %2474 = vmatpush1.bf16.msra.mxu0 0
    %2475 = vmatprep.subr.bf16.mxu0 0
    %2476 = vmatpush1.bf16.msra.mxu0 0
    %2477 = vmatprep.subr.bf16.mxu0 0
    %2478 = vmatpush1.bf16.msra.mxu0 0
    %2479 = vmatprep.subr.bf16.mxu0 0
    %2480 = vmatpush1.bf16.msra.mxu0 0
    %2481 = vmatprep.subr.bf16.mxu0 0
    %2482 = vmatpush1.bf16.msra.mxu0 0
    %2483 = vmatprep.subr.bf16.mxu0 0
    %2484 = vmatpush1.bf16.msra.mxu0 0
    %2485 = vmatprep.mubr.bf16.mxu0 0
    %2486 = vmatmul.mubr.bf16.gmra.mrb[0].mxu0 %v2452
    %v2487 = vpop.f32.mrb[0].mxu0
    %v2488 = vadd.f32 %v57, %v2487
    %v2489 = vpop.f32.mrb[0].mxu0
    %v2490 = vpop.f32.mrb[0].mxu0
    %v2491 = vpop.f32.mrb[0].mxu0
    %2492 = vdwg.mxu0
    %v2493 = vtanh.pop %v2488
    %v2494 = vmul.f32 %v2493, %v2403
    %v2495 = vpack.c.bf16 %v2494, %v2494
    %2496 = vmatprep.subr.bf16.mxu0 0
    %2497 = vmatpush1.bf16.msra.mxu0 %v339
    %2498 = vmatprep.subr.bf16.mxu0 0
    %2499 = vmatpush1.bf16.msra.mxu0 %v340
    %2500 = vmatprep.subr.bf16.mxu0 0
    %2501 = vmatpush1.bf16.msra.mxu0 %v341
    %2502 = vmatprep.subr.bf16.mxu0 0
    %2503 = vmatpush1.bf16.msra.mxu0 %v342
    %2504 = vmatprep.subr.bf16.mxu0 0
    %2505 = vmatpush1.bf16.msra.mxu0 %v343
    %2506 = vmatprep.subr.bf16.mxu0 0
    %2507 = vmatpush1.bf16.msra.mxu0 %v344
    %2508 = vmatprep.subr.bf16.mxu0 0
    %2509 = vmatpush1.bf16.msra.mxu0 %v345
    %2510 = vmatprep.subr.bf16.mxu0 0
    %2511 = vmatpush1.bf16.msra.mxu0 %v346
    %2512 = vmatprep.subr.bf16.mxu0 0
    %2513 = vmatpush1.bf16.msra.mxu0 0
    %2514 = vmatprep.subr.bf16.mxu0 0
    %2515 = vmatpush1.bf16.msra.mxu0 0
    %2516 = vmatprep.subr.bf16.mxu0 0
    %2517 = vmatpush1.bf16.msra.mxu0 0
    %2518 = vmatprep.subr.bf16.mxu0 0
    %2519 = vmatpush1.bf16.msra.mxu0 0
    %2520 = vmatprep.subr.bf16.mxu0 0
    %2521 = vmatpush1.bf16.msra.mxu0 0
    %2522 = vmatprep.subr.bf16.mxu0 0
    %2523 = vmatpush1.bf16.msra.mxu0 0
    %2524 = vmatprep.subr.bf16.mxu0 0
    %2525 = vmatpush1.bf16.msra.mxu0 0
    %2526 = vmatprep.subr.bf16.mxu0 0
    %2527 = vmatpush1.bf16.msra.mxu0 0
    %2528 = vmatprep.mubr.bf16.mxu0 0
    %2529 = vmatmul.mubr.bf16.gmra.mrb[0].mxu0 %v2495
    %v2530 = vpop.f32.mrb[0].mxu0
    %v2531 = vadd.f32 0.0, %v2530
    %v2532 = vpop.f32.mrb[0].mxu0
    %v2533 = vpop.f32.mrb[0].mxu0
    %v2534 = vpop.f32.mrb[0].mxu0
    %2535 = vdwg.mxu0
    %v2536 = vmul.f32 %v2531, 0.33333334
    %v2537 = vadd.f32 %v2401, %v2536
    %v2538 = vpack.c.bf16 %v2537, %v2537
    %v2540 = vsel %vm170, %v2538, 0
    %2542 = vmatprep.subr.bf16.mxu0 0
    %2543 = vmatpush1.bf16.msra.mxu0 %v166
    %2544 = vmatprep.subr.bf16.mxu0 0
    %2545 = vmatpush1.bf16.msra.mxu0 %v167
    %2546 = vmatprep.subr.bf16.mxu0 0
    %2547 = vmatpush1.bf16.msra.mxu0 0
    %2548 = vmatprep.subr.bf16.mxu0 0
    %2549 = vmatpush1.bf16.msra.mxu0 0
    %2550 = vmatprep.subr.bf16.mxu0 0
    %2551 = vmatpush1.bf16.msra.mxu0 0
    %2552 = vmatprep.subr.bf16.mxu0 0
    %2553 = vmatpush1.bf16.msra.mxu0 0
    %2554 = vmatprep.subr.bf16.mxu0 0
    %2555 = vmatpush1.bf16.msra.mxu0 0
    %2556 = vmatprep.subr.bf16.mxu0 0
    %2557 = vmatpush1.bf16.msra.mxu0 0
    %2558 = vmatprep.subr.bf16.mxu0 0
    %2559 = vmatpush1.bf16.msra.mxu0 0
    %2560 = vmatprep.subr.bf16.mxu0 0
    %2561 = vmatpush1.bf16.msra.mxu0 0
    %2562 = vmatprep.subr.bf16.mxu0 0
    %2563 = vmatpush1.bf16.msra.mxu0 0
    %2564 = vmatprep.subr.bf16.mxu0 0
    %2565 = vmatpush1.bf16.msra.mxu0 0
    %2566 = vmatprep.subr.bf16.mxu0 0
    %2567 = vmatpush1.bf16.msra.mxu0 0
    %2568 = vmatprep.subr.bf16.mxu0 0
    %2569 = vmatpush1.bf16.msra.mxu0 0
    %2570 = vmatprep.subr.bf16.mxu0 0
    %2571 = vmatpush1.bf16.msra.mxu0 0
    %2572 = vmatprep.subr.bf16.mxu0 0
    %2573 = vmatpush1.bf16.msra.mxu0 0
    %2574 = vmatprep.mubr.bf16.mxu0 0
    %2575 = vmatmul.mubr.bf16.gmra.mrb[0].mxu0 %v2540
    %v2576 = vpop.f32.mrb[0].mxu0
    %v2577 = vadd.f32 %v40, %v2576
    %v2578 = vpop.f32.mrb[0].mxu0
    %v2579 = vpop.f32.mrb[0].mxu0
    %v2580 = vpop.f32.mrb[0].mxu0
    %2581 = vdwg.mxu0
    %v2582 = vmax.f32 %v2577, 0.0
    %v2583 = vpack.c.bf16 %v2582, %v2582
    %2584 = vmatprep.subr.bf16.mxu0 0
    %2585 = vmatpush1.bf16.msra.mxu0 %v248
    %2586 = vmatprep.subr.bf16.mxu0 0
    %2587 = vmatpush1.bf16.msra.mxu0 %v249
    %2588 = vmatprep.subr.bf16.mxu0 0
    %2589 = vmatpush1.bf16.msra.mxu0 %v250
    %2590 = vmatprep.subr.bf16.mxu0 0
    %2591 = vmatpush1.bf16.msra.mxu0 %v251
    %2592 = vmatprep.subr.bf16.mxu0 0
    %2593 = vmatpush1.bf16.msra.mxu0 %v252
    %2594 = vmatprep.subr.bf16.mxu0 0
    %2595 = vmatpush1.bf16.msra.mxu0 %v253
    %2596 = vmatprep.subr.bf16.mxu0 0
    %2597 = vmatpush1.bf16.msra.mxu0 %v254
    %2598 = vmatprep.subr.bf16.mxu0 0
    %2599 = vmatpush1.bf16.msra.mxu0 %v255
    %2600 = vmatprep.subr.bf16.mxu0 0
    %2601 = vmatpush1.bf16.msra.mxu0 0
    %2602 = vmatprep.subr.bf16.mxu0 0
    %2603 = vmatpush1.bf16.msra.mxu0 0
    %2604 = vmatprep.subr.bf16.mxu0 0
    %2605 = vmatpush1.bf16.msra.mxu0 0
    %2606 = vmatprep.subr.bf16.mxu0 0
    %2607 = vmatpush1.bf16.msra.mxu0 0
    %2608 = vmatprep.subr.bf16.mxu0 0
    %2609 = vmatpush1.bf16.msra.mxu0 0
    %2610 = vmatprep.subr.bf16.mxu0 0
    %2611 = vmatpush1.bf16.msra.mxu0 0
    %2612 = vmatprep.subr.bf16.mxu0 0
    %2613 = vmatpush1.bf16.msra.mxu0 0
    %2614 = vmatprep.subr.bf16.mxu0 0
    %2615 = vmatpush1.bf16.msra.mxu0 0
    %2616 = vmatprep.mubr.bf16.mxu0 0
    %2617 = vmatmul.mubr.bf16.gmra.mrb[0].mxu0 %v2583
    %v2618 = vpop.f32.mrb[0].mxu0
    %v2619 = vadd.f32 %v57, %v2618
    %v2620 = vpop.f32.mrb[0].mxu0
    %v2621 = vpop.f32.mrb[0].mxu0
    %v2622 = vpop.f32.mrb[0].mxu0
    %2623 = vdwg.mxu0
    %v2624 = vtanh.pop %v2619
    %v2625 = vmul.f32 %v2624, %v2404
    %v2626 = vpack.c.bf16 %v2625, %v2625
    %2627 = vmatprep.subr.bf16.mxu0 0
    %2628 = vmatpush1.bf16.msra.mxu0 %v339
    %2629 = vmatprep.subr.bf16.mxu0 0
    %2630 = vmatpush1.bf16.msra.mxu0 %v340
    %2631 = vmatprep.subr.bf16.mxu0 0
    %2632 = vmatpush1.bf16.msra.mxu0 %v341
    %2633 = vmatprep.subr.bf16.mxu0 0
    %2634 = vmatpush1.bf16.msra.mxu0 %v342
    %2635 = vmatprep.subr.bf16.mxu0 0
    %2636 = vmatpush1.bf16.msra.mxu0 %v343
    %2637 = vmatprep.subr.bf16.mxu0 0
    %2638 = vmatpush1.bf16.msra.mxu0 %v344
    %2639 = vmatprep.subr.bf16.mxu0 0
    %2640 = vmatpush1.bf16.msra.mxu0 %v345
    %2641 = vmatprep.subr.bf16.mxu0 0
    %2642 = vmatpush1.bf16.msra.mxu0 %v346
    %2643 = vmatprep.subr.bf16.mxu0 0
    %2644 = vmatpush1.bf16.msra.mxu0 0
    %2645 = vmatprep.subr.bf16.mxu0 0
    %2646 = vmatpush1.bf16.msra.mxu0 0
    %2647 = vmatprep.subr.bf16.mxu0 0
    %2648 = vmatpush1.bf16.msra.mxu0 0
    %2649 = vmatprep.subr.bf16.mxu0 0
    %2650 = vmatpush1.bf16.msra.mxu0 0
    %2651 = vmatprep.subr.bf16.mxu0 0
    %2652 = vmatpush1.bf16.msra.mxu0 0
    %2653 = vmatprep.subr.bf16.mxu0 0
    %2654 = vmatpush1.bf16.msra.mxu0 0
    %2655 = vmatprep.subr.bf16.mxu0 0
    %2656 = vmatpush1.bf16.msra.mxu0 0
    %2657 = vmatprep.subr.bf16.mxu0 0
    %2658 = vmatpush1.bf16.msra.mxu0 0
    %2659 = vmatprep.mubr.bf16.mxu0 0
    %2660 = vmatmul.mubr.bf16.gmra.mrb[0].mxu0 %v2626
    %v2661 = vpop.f32.mrb[0].mxu0
    %v2662 = vadd.f32 0.0, %v2661
    %v2663 = vpop.f32.mrb[0].mxu0
    %v2664 = vpop.f32.mrb[0].mxu0
    %v2665 = vpop.f32.mrb[0].mxu0
    %2666 = vdwg.mxu0
    %v2667 = vmul.f32 %v2531, %v526
    %v2668 = vsub.f32 %v2662, %v2667
    %v2669 = vadd.f32 %v2401, %v2668
    %v2670 = vpack.c.bf16 %v2669, %v2669
    %v2672 = vsel %vm170, %v2670, 0
    %2674 = vmatprep.subr.bf16.mxu0 0
    %2675 = vmatpush1.bf16.msra.mxu0 %v166
    %2676 = vmatprep.subr.bf16.mxu0 0
    %2677 = vmatpush1.bf16.msra.mxu0 %v167
    %2678 = vmatprep.subr.bf16.mxu0 0
    %2679 = vmatpush1.bf16.msra.mxu0 0
    %2680 = vmatprep.subr.bf16.mxu0 0
    %2681 = vmatpush1.bf16.msra.mxu0 0
    %2682 = vmatprep.subr.bf16.mxu0 0
    %2683 = vmatpush1.bf16.msra.mxu0 0
    %2684 = vmatprep.subr.bf16.mxu0 0
    %2685 = vmatpush1.bf16.msra.mxu0 0
    %2686 = vmatprep.subr.bf16.mxu0 0
    %2687 = vmatpush1.bf16.msra.mxu0 0
    %2688 = vmatprep.subr.bf16.mxu0 0
    %2689 = vmatpush1.bf16.msra.mxu0 0
    %2690 = vmatprep.subr.bf16.mxu0 0
    %2691 = vmatpush1.bf16.msra.mxu0 0
    %2692 = vmatprep.subr.bf16.mxu0 0
    %2693 = vmatpush1.bf16.msra.mxu0 0
    %2694 = vmatprep.subr.bf16.mxu0 0
    %2695 = vmatpush1.bf16.msra.mxu0 0
    %2696 = vmatprep.subr.bf16.mxu0 0
    %2697 = vmatpush1.bf16.msra.mxu0 0
    %2698 = vmatprep.subr.bf16.mxu0 0
    %2699 = vmatpush1.bf16.msra.mxu0 0
    %2700 = vmatprep.subr.bf16.mxu0 0
    %2701 = vmatpush1.bf16.msra.mxu0 0
    %2702 = vmatprep.subr.bf16.mxu0 0
    %2703 = vmatpush1.bf16.msra.mxu0 0
    %2704 = vmatprep.subr.bf16.mxu0 0
    %2705 = vmatpush1.bf16.msra.mxu0 0
    %2706 = vmatprep.mubr.bf16.mxu0 0
    %2707 = vmatmul.mubr.bf16.gmra.mrb[0].mxu0 %v2672
    %v2708 = vpop.f32.mrb[0].mxu0
    %v2709 = vadd.f32 %v40, %v2708
    %v2710 = vpop.f32.mrb[0].mxu0
    %v2711 = vpop.f32.mrb[0].mxu0
    %v2712 = vpop.f32.mrb[0].mxu0
    %2713 = vdwg.mxu0
    %v2714 = vmax.f32 %v2709, 0.0
    %v2715 = vpack.c.bf16 %v2714, %v2714
    %2716 = vmatprep.subr.bf16.mxu0 0
    %2717 = vmatpush1.bf16.msra.mxu0 %v248
    %2718 = vmatprep.subr.bf16.mxu0 0
    %2719 = vmatpush1.bf16.msra.mxu0 %v249
    %2720 = vmatprep.subr.bf16.mxu0 0
    %2721 = vmatpush1.bf16.msra.mxu0 %v250
    %2722 = vmatprep.subr.bf16.mxu0 0
    %2723 = vmatpush1.bf16.msra.mxu0 %v251
    %2724 = vmatprep.subr.bf16.mxu0 0
    %2725 = vmatpush1.bf16.msra.mxu0 %v252
    %2726 = vmatprep.subr.bf16.mxu0 0
    %2727 = vmatpush1.bf16.msra.mxu0 %v253
    %2728 = vmatprep.subr.bf16.mxu0 0
    %2729 = vmatpush1.bf16.msra.mxu0 %v254
    %2730 = vmatprep.subr.bf16.mxu0 0
    %2731 = vmatpush1.bf16.msra.mxu0 %v255
    %2732 = vmatprep.subr.bf16.mxu0 0
    %2733 = vmatpush1.bf16.msra.mxu0 0
    %2734 = vmatprep.subr.bf16.mxu0 0
    %2735 = vmatpush1.bf16.msra.mxu0 0
    %2736 = vmatprep.subr.bf16.mxu0 0
    %2737 = vmatpush1.bf16.msra.mxu0 0
    %2738 = vmatprep.subr.bf16.mxu0 0
    %2739 = vmatpush1.bf16.msra.mxu0 0
    %2740 = vmatprep.subr.bf16.mxu0 0
    %2741 = vmatpush1.bf16.msra.mxu0 0
    %2742 = vmatprep.subr.bf16.mxu0 0
    %2743 = vmatpush1.bf16.msra.mxu0 0
    %2744 = vmatprep.subr.bf16.mxu0 0
    %2745 = vmatpush1.bf16.msra.mxu0 0
    %2746 = vmatprep.subr.bf16.mxu0 0
    %2747 = vmatpush1.bf16.msra.mxu0 0
    %2748 = vmatprep.mubr.bf16.mxu0 0
    %2749 = vmatmul.mubr.bf16.gmra.mrb[0].mxu0 %v2715
    %v2750 = vpop.f32.mrb[0].mxu0
    %v2751 = vadd.f32 %v57, %v2750
    %v2752 = vpop.f32.mrb[0].mxu0
    %v2753 = vpop.f32.mrb[0].mxu0
    %v2754 = vpop.f32.mrb[0].mxu0
    %2755 = vdwg.mxu0
    %v2756 = vtanh.pop %v2751
    %v2757 = vmul.f32 %v2756, %v2405
    %v2758 = vpack.c.bf16 %v2757, %v2757
    %2759 = vmatprep.subr.bf16.mxu0 0
    %2760 = vmatpush1.bf16.msra.mxu0 %v339
    %2761 = vmatprep.subr.bf16.mxu0 0
    %2762 = vmatpush1.bf16.msra.mxu0 %v340
    %2763 = vmatprep.subr.bf16.mxu0 0
    %2764 = vmatpush1.bf16.msra.mxu0 %v341
    %2765 = vmatprep.subr.bf16.mxu0 0
    %2766 = vmatpush1.bf16.msra.mxu0 %v342
    %2767 = vmatprep.subr.bf16.mxu0 0
    %2768 = vmatpush1.bf16.msra.mxu0 %v343
    %2769 = vmatprep.subr.bf16.mxu0 0
    %2770 = vmatpush1.bf16.msra.mxu0 %v344
    %2771 = vmatprep.subr.bf16.mxu0 0
    %2772 = vmatpush1.bf16.msra.mxu0 %v345
    %2773 = vmatprep.subr.bf16.mxu0 0
    %2774 = vmatpush1.bf16.msra.mxu0 %v346
    %2775 = vmatprep.subr.bf16.mxu0 0
    %2776 = vmatpush1.bf16.msra.mxu0 0
    %2777 = vmatprep.subr.bf16.mxu0 0
    %2778 = vmatpush1.bf16.msra.mxu0 0
    %2779 = vmatprep.subr.bf16.mxu0 0
    %2780 = vmatpush1.bf16.msra.mxu0 0
    %2781 = vmatprep.subr.bf16.mxu0 0
    %2782 = vmatpush1.bf16.msra.mxu0 0
    %2783 = vmatprep.subr.bf16.mxu0 0
    %2784 = vmatpush1.bf16.msra.mxu0 0
    %2785 = vmatprep.subr.bf16.mxu0 0
    %2786 = vmatpush1.bf16.msra.mxu0 0
    %2787 = vmatprep.subr.bf16.mxu0 0
    %2788 = vmatpush1.bf16.msra.mxu0 0
    %2789 = vmatprep.subr.bf16.mxu0 0
    %2790 = vmatpush1.bf16.msra.mxu0 0
    %2791 = vmatprep.mubr.bf16.mxu0 0
    %2792 = vmatmul.mubr.bf16.gmra.mrb[0].mxu0 %v2758
    %v2793 = vpop.f32.mrb[0].mxu0
    %v2794 = vadd.f32 0.0, %v2793
    %v2795 = vpop.f32.mrb[0].mxu0
    %v2796 = vpop.f32.mrb[0].mxu0
    %v2797 = vpop.f32.mrb[0].mxu0
    %2798 = vdwg.mxu0
    %v2799 = vsub.f32 %v2531, %v2662
    %v2800 = vadd.f32 %v2799, %v2794
    %v2801 = vadd.f32 %v2401, %v2800
    %v2802 = vpack.c.bf16 %v2801, %v2801
    %v2804 = vsel %vm170, %v2802, 0
    %2806 = vmatprep.subr.bf16.mxu0 0
    %2807 = vmatpush1.bf16.msra.mxu0 %v166
    %2808 = vmatprep.subr.bf16.mxu0 0
    %2809 = vmatpush1.bf16.msra.mxu0 %v167
    %2810 = vmatprep.subr.bf16.mxu0 0
    %2811 = vmatpush1.bf16.msra.mxu0 0
    %2812 = vmatprep.subr.bf16.mxu0 0
    %2813 = vmatpush1.bf16.msra.mxu0 0
    %2814 = vmatprep.subr.bf16.mxu0 0
    %2815 = vmatpush1.bf16.msra.mxu0 0
    %2816 = vmatprep.subr.bf16.mxu0 0
    %2817 = vmatpush1.bf16.msra.mxu0 0
    %2818 = vmatprep.subr.bf16.mxu0 0
    %2819 = vmatpush1.bf16.msra.mxu0 0
    %2820 = vmatprep.subr.bf16.mxu0 0
    %2821 = vmatpush1.bf16.msra.mxu0 0
    %2822 = vmatprep.subr.bf16.mxu0 0
    %2823 = vmatpush1.bf16.msra.mxu0 0
    %2824 = vmatprep.subr.bf16.mxu0 0
    %2825 = vmatpush1.bf16.msra.mxu0 0
    %2826 = vmatprep.subr.bf16.mxu0 0
    %2827 = vmatpush1.bf16.msra.mxu0 0
    %2828 = vmatprep.subr.bf16.mxu0 0
    %2829 = vmatpush1.bf16.msra.mxu0 0
    %2830 = vmatprep.subr.bf16.mxu0 0
    %2831 = vmatpush1.bf16.msra.mxu0 0
    %2832 = vmatprep.subr.bf16.mxu0 0
    %2833 = vmatpush1.bf16.msra.mxu0 0
    %2834 = vmatprep.subr.bf16.mxu0 0
    %2835 = vmatpush1.bf16.msra.mxu0 0
    %2836 = vmatprep.subr.bf16.mxu0 0
    %2837 = vmatpush1.bf16.msra.mxu0 0
    %2838 = vmatprep.mubr.bf16.mxu0 0
    %2839 = vmatmul.mubr.bf16.gmra.mrb[0].mxu0 %v2804
    %v2840 = vpop.f32.mrb[0].mxu0
    %v2841 = vadd.f32 %v40, %v2840
    %v2842 = vpop.f32.mrb[0].mxu0
    %v2843 = vpop.f32.mrb[0].mxu0
    %v2844 = vpop.f32.mrb[0].mxu0
    %2845 = vdwg.mxu0
    %v2846 = vmax.f32 %v2841, 0.0
    %v2847 = vpack.c.bf16 %v2846, %v2846
    %2848 = vmatprep.subr.bf16.mxu0 0
    %2849 = vmatpush1.bf16.msra.mxu0 %v248
    %2850 = vmatprep.subr.bf16.mxu0 0
    %2851 = vmatpush1.bf16.msra.mxu0 %v249
    %2852 = vmatprep.subr.bf16.mxu0 0
    %2853 = vmatpush1.bf16.msra.mxu0 %v250
    %2854 = vmatprep.subr.bf16.mxu0 0
    %2855 = vmatpush1.bf16.msra.mxu0 %v251
    %2856 = vmatprep.subr.bf16.mxu0 0
    %2857 = vmatpush1.bf16.msra.mxu0 %v252
    %2858 = vmatprep.subr.bf16.mxu0 0
    %2859 = vmatpush1.bf16.msra.mxu0 %v253
    %2860 = vmatprep.subr.bf16.mxu0 0
    %2861 = vmatpush1.bf16.msra.mxu0 %v254
    %2862 = vmatprep.subr.bf16.mxu0 0
    %2863 = vmatpush1.bf16.msra.mxu0 %v255
    %2864 = vmatprep.subr.bf16.mxu0 0
    %2865 = vmatpush1.bf16.msra.mxu0 0
    %2866 = vmatprep.subr.bf16.mxu0 0
    %2867 = vmatpush1.bf16.msra.mxu0 0
    %2868 = vmatprep.subr.bf16.mxu0 0
    %2869 = vmatpush1.bf16.msra.mxu0 0
    %2870 = vmatprep.subr.bf16.mxu0 0
    %2871 = vmatpush1.bf16.msra.mxu0 0
    %2872 = vmatprep.subr.bf16.mxu0 0
    %2873 = vmatpush1.bf16.msra.mxu0 0
    %2874 = vmatprep.subr.bf16.mxu0 0
    %2875 = vmatpush1.bf16.msra.mxu0 0
    %2876 = vmatprep.subr.bf16.mxu0 0
    %2877 = vmatpush1.bf16.msra.mxu0 0
    %2878 = vmatprep.subr.bf16.mxu0 0
    %2879 = vmatpush1.bf16.msra.mxu0 0
    %2880 = vmatprep.mubr.bf16.mxu0 0
    %2881 = vmatmul.mubr.bf16.gmra.mrb[0].mxu0 %v2847
    %v2882 = vpop.f32.mrb[0].mxu0
    %v2883 = vadd.f32 %v57, %v2882
    %v2884 = vpop.f32.mrb[0].mxu0
    %v2885 = vpop.f32.mrb[0].mxu0
    %v2886 = vpop.f32.mrb[0].mxu0
    %2887 = vdwg.mxu0
    %v2888 = vtanh.pop %v2883
    %v2889 = vmul.f32 %v2888, %v2406
    %v2890 = vpack.c.bf16 %v2889, %v2889
    %2891 = vmatprep.subr.bf16.mxu0 0
    %2892 = vmatpush1.bf16.msra.mxu0 %v339
    %2893 = vmatprep.subr.bf16.mxu0 0
    %2894 = vmatpush1.bf16.msra.mxu0 %v340
    %2895 = vmatprep.subr.bf16.mxu0 0
    %2896 = vmatpush1.bf16.msra.mxu0 %v341
    %2897 = vmatprep.subr.bf16.mxu0 0
    %2898 = vmatpush1.bf16.msra.mxu0 %v342
    %2899 = vmatprep.subr.bf16.mxu0 0
    %2900 = vmatpush1.bf16.msra.mxu0 %v343
    %2901 = vmatprep.subr.bf16.mxu0 0
    %2902 = vmatpush1.bf16.msra.mxu0 %v344
    %2903 = vmatprep.subr.bf16.mxu0 0
    %2904 = vmatpush1.bf16.msra.mxu0 %v345
    %2905 = vmatprep.subr.bf16.mxu0 0
    %2906 = vmatpush1.bf16.msra.mxu0 %v346
    %2907 = vmatprep.subr.bf16.mxu0 0
    %2908 = vmatpush1.bf16.msra.mxu0 0
    %2909 = vmatprep.subr.bf16.mxu0 0
    %2910 = vmatpush1.bf16.msra.mxu0 0
    %2911 = vmatprep.subr.bf16.mxu0 0
    %2912 = vmatpush1.bf16.msra.mxu0 0
    %2913 = vmatprep.subr.bf16.mxu0 0
    %2914 = vmatpush1.bf16.msra.mxu0 0
    %2915 = vmatprep.subr.bf16.mxu0 0
    %2916 = vmatpush1.bf16.msra.mxu0 0
    %2917 = vmatprep.subr.bf16.mxu0 0
    %2918 = vmatpush1.bf16.msra.mxu0 0
    %2919 = vmatprep.subr.bf16.mxu0 0
    %2920 = vmatpush1.bf16.msra.mxu0 0
    %2921 = vmatprep.subr.bf16.mxu0 0
    %2922 = vmatpush1.bf16.msra.mxu0 0
    %2923 = vmatprep.mubr.bf16.mxu0 0
    %2924 = vmatmul.mubr.bf16.gmra.mrb[0].mxu0 %v2890
    %v2925 = vpop.f32.mrb[0].mxu0
    %v2926 = vadd.f32 0.0, %v2925
    %v2927 = vpop.f32.mrb[0].mxu0
    %v2928 = vpop.f32.mrb[0].mxu0
    %v2929 = vpop.f32.mrb[0].mxu0
    %2930 = vdwg.mxu0
    %v2931 = vadd.f32 %v2662, %v2794
    %v2932 = vmul.f32 %v2931, 3.0
    %v2933 = vadd.f32 %v2531, %v2932
    %v2934 = vadd.f32 %v2933, %v2926
    %v2935 = vmul.f32 %v2934, 0.125
    %v2936 = vadd.f32 %v2401, %v2935
    %s2937 = scalar_lea.vmem %s1, 160
    %v2938 = vld [vmem:[%s2937] sm:$0xff]
    %v2939 = vld [vmem:[%s2937 + $0x8] sm:$0xff]
    %v2940 = vld [vmem:[%s2937 + $0x10] sm:$0xff]
    %v2941 = vld [vmem:[%s2937 + $0x18] sm:$0xff]
    %v2942 = vpack.c.bf16 %v2936, %v2936
    %v2944 = vsel %vm170, %v2942, 0
    %2946 = vmatprep.subr.bf16.mxu0 0
    %2947 = vmatpush1.bf16.msra.mxu0 %v166
    %2948 = vmatprep.subr.bf16.mxu0 0
    %2949 = vmatpush1.bf16.msra.mxu0 %v167
    %2950 = vmatprep.subr.bf16.mxu0 0
    %2951 = vmatpush1.bf16.msra.mxu0 0
    %2952 = vmatprep.subr.bf16.mxu0 0
    %2953 = vmatpush1.bf16.msra.mxu0 0
    %2954 = vmatprep.subr.bf16.mxu0 0
    %2955 = vmatpush1.bf16.msra.mxu0 0
    %2956 = vmatprep.subr.bf16.mxu0 0
    %2957 = vmatpush1.bf16.msra.mxu0 0
    %2958 = vmatprep.subr.bf16.mxu0 0
    %2959 = vmatpush1.bf16.msra.mxu0 0
    %2960 = vmatprep.subr.bf16.mxu0 0
    %2961 = vmatpush1.bf16.msra.mxu0 0
    %2962 = vmatprep.subr.bf16.mxu0 0
    %2963 = vmatpush1.bf16.msra.mxu0 0
    %2964 = vmatprep.subr.bf16.mxu0 0
    %2965 = vmatpush1.bf16.msra.mxu0 0
    %2966 = vmatprep.subr.bf16.mxu0 0
    %2967 = vmatpush1.bf16.msra.mxu0 0
    %2968 = vmatprep.subr.bf16.mxu0 0
    %2969 = vmatpush1.bf16.msra.mxu0 0
    %2970 = vmatprep.subr.bf16.mxu0 0
    %2971 = vmatpush1.bf16.msra.mxu0 0
    %2972 = vmatprep.subr.bf16.mxu0 0
    %2973 = vmatpush1.bf16.msra.mxu0 0
    %2974 = vmatprep.subr.bf16.mxu0 0
    %2975 = vmatpush1.bf16.msra.mxu0 0
    %2976 = vmatprep.subr.bf16.mxu0 0
    %2977 = vmatpush1.bf16.msra.mxu0 0
    %2978 = vmatprep.mubr.bf16.mxu0 0
    %2979 = vmatmul.mubr.bf16.gmra.mrb[0].mxu0 %v2944
    %v2980 = vpop.f32.mrb[0].mxu0
    %v2981 = vadd.f32 %v40, %v2980
    %v2982 = vpop.f32.mrb[0].mxu0
    %v2983 = vpop.f32.mrb[0].mxu0
    %v2984 = vpop.f32.mrb[0].mxu0
    %2985 = vdwg.mxu0
    %v2986 = vmax.f32 %v2981, 0.0
    %v2987 = vpack.c.bf16 %v2986, %v2986
    %2988 = vmatprep.subr.bf16.mxu0 0
    %2989 = vmatpush1.bf16.msra.mxu0 %v248
    %2990 = vmatprep.subr.bf16.mxu0 0
    %2991 = vmatpush1.bf16.msra.mxu0 %v249
    %2992 = vmatprep.subr.bf16.mxu0 0
    %2993 = vmatpush1.bf16.msra.mxu0 %v250
    %2994 = vmatprep.subr.bf16.mxu0 0
    %2995 = vmatpush1.bf16.msra.mxu0 %v251
    %2996 = vmatprep.subr.bf16.mxu0 0
    %2997 = vmatpush1.bf16.msra.mxu0 %v252
    %2998 = vmatprep.subr.bf16.mxu0 0
    %2999 = vmatpush1.bf16.msra.mxu0 %v253
    %3000 = vmatprep.subr.bf16.mxu0 0
    %3001 = vmatpush1.bf16.msra.mxu0 %v254
    %3002 = vmatprep.subr.bf16.mxu0 0
    %3003 = vmatpush1.bf16.msra.mxu0 %v255
    %3004 = vmatprep.subr.bf16.mxu0 0
    %3005 = vmatpush1.bf16.msra.mxu0 0
    %3006 = vmatprep.subr.bf16.mxu0 0
    %3007 = vmatpush1.bf16.msra.mxu0 0
    %3008 = vmatprep.subr.bf16.mxu0 0
    %3009 = vmatpush1.bf16.msra.mxu0 0
    %3010 = vmatprep.subr.bf16.mxu0 0
    %3011 = vmatpush1.bf16.msra.mxu0 0
    %3012 = vmatprep.subr.bf16.mxu0 0
    %3013 = vmatpush1.bf16.msra.mxu0 0
    %3014 = vmatprep.subr.bf16.mxu0 0
    %3015 = vmatpush1.bf16.msra.mxu0 0
    %3016 = vmatprep.subr.bf16.mxu0 0
    %3017 = vmatpush1.bf16.msra.mxu0 0
    %3018 = vmatprep.subr.bf16.mxu0 0
    %3019 = vmatpush1.bf16.msra.mxu0 0
    %3020 = vmatprep.mubr.bf16.mxu0 0
    %3021 = vmatmul.mubr.bf16.gmra.mrb[0].mxu0 %v2987
    %v3022 = vpop.f32.mrb[0].mxu0
    %v3023 = vadd.f32 %v57, %v3022
    %v3024 = vpop.f32.mrb[0].mxu0
    %v3025 = vpop.f32.mrb[0].mxu0
    %v3026 = vpop.f32.mrb[0].mxu0
    %3027 = vdwg.mxu0
    %v3028 = vtanh.pop %v3023
    %v3029 = vmul.f32 %v3028, %v2938
    %v3030 = vpack.c.bf16 %v3029, %v3029
    %3031 = vmatprep.subr.bf16.mxu0 0
    %3032 = vmatpush1.bf16.msra.mxu0 %v339
    %3033 = vmatprep.subr.bf16.mxu0 0
    %3034 = vmatpush1.bf16.msra.mxu0 %v340
    %3035 = vmatprep.subr.bf16.mxu0 0
    %3036 = vmatpush1.bf16.msra.mxu0 %v341
    %3037 = vmatprep.subr.bf16.mxu0 0
    %3038 = vmatpush1.bf16.msra.mxu0 %v342
    %3039 = vmatprep.subr.bf16.mxu0 0
    %3040 = vmatpush1.bf16.msra.mxu0 %v343
    %3041 = vmatprep.subr.bf16.mxu0 0
    %3042 = vmatpush1.bf16.msra.mxu0 %v344
    %3043 = vmatprep.subr.bf16.mxu0 0
    %3044 = vmatpush1.bf16.msra.mxu0 %v345
    %3045 = vmatprep.subr.bf16.mxu0 0
    %3046 = vmatpush1.bf16.msra.mxu0 %v346
    %3047 = vmatprep.subr.bf16.mxu0 0
    %3048 = vmatpush1.bf16.msra.mxu0 0
    %3049 = vmatprep.subr.bf16.mxu0 0
    %3050 = vmatpush1.bf16.msra.mxu0 0
    %3051 = vmatprep.subr.bf16.mxu0 0
    %3052 = vmatpush1.bf16.msra.mxu0 0
    %3053 = vmatprep.subr.bf16.mxu0 0
    %3054 = vmatpush1.bf16.msra.mxu0 0
    %3055 = vmatprep.subr.bf16.mxu0 0
    %3056 = vmatpush1.bf16.msra.mxu0 0
    %3057 = vmatprep.subr.bf16.mxu0 0
    %3058 = vmatpush1.bf16.msra.mxu0 0
    %3059 = vmatprep.subr.bf16.mxu0 0
    %3060 = vmatpush1.bf16.msra.mxu0 0
    %3061 = vmatprep.subr.bf16.mxu0 0
    %3062 = vmatpush1.bf16.msra.mxu0 0
    %3063 = vmatprep.mubr.bf16.mxu0 0
    %3064 = vmatmul.mubr.bf16.gmra.mrb[0].mxu0 %v3030
    %v3065 = vpop.f32.mrb[0].mxu0
    %v3066 = vadd.f32 0.0, %v3065
    %v3067 = vpop.f32.mrb[0].mxu0
    %v3068 = vpop.f32.mrb[0].mxu0
    %v3069 = vpop.f32.mrb[0].mxu0
    %3070 = vdwg.mxu0
    %v3071 = vmul.f32 %v3066, 0.33333334
    %v3072 = vadd.f32 %v2936, %v3071
    %v3073 = vpack.c.bf16 %v3072, %v3072
    %v3075 = vsel %vm170, %v3073, 0
    %3077 = vmatprep.subr.bf16.mxu0 0
    %3078 = vmatpush1.bf16.msra.mxu0 %v166
    %3079 = vmatprep.subr.bf16.mxu0 0
    %3080 = vmatpush1.bf16.msra.mxu0 %v167
    %3081 = vmatprep.subr.bf16.mxu0 0
    %3082 = vmatpush1.bf16.msra.mxu0 0
    %3083 = vmatprep.subr.bf16.mxu0 0
    %3084 = vmatpush1.bf16.msra.mxu0 0
    %3085 = vmatprep.subr.bf16.mxu0 0
    %3086 = vmatpush1.bf16.msra.mxu0 0
    %3087 = vmatprep.subr.bf16.mxu0 0
    %3088 = vmatpush1.bf16.msra.mxu0 0
    %3089 = vmatprep.subr.bf16.mxu0 0
    %3090 = vmatpush1.bf16.msra.mxu0 0
    %3091 = vmatprep.subr.bf16.mxu0 0
    %3092 = vmatpush1.bf16.msra.mxu0 0
    %3093 = vmatprep.subr.bf16.mxu0 0
    %3094 = vmatpush1.bf16.msra.mxu0 0
    %3095 = vmatprep.subr.bf16.mxu0 0
    %3096 = vmatpush1.bf16.msra.mxu0 0
    %3097 = vmatprep.subr.bf16.mxu0 0
    %3098 = vmatpush1.bf16.msra.mxu0 0
    %3099 = vmatprep.subr.bf16.mxu0 0
    %3100 = vmatpush1.bf16.msra.mxu0 0
    %3101 = vmatprep.subr.bf16.mxu0 0
    %3102 = vmatpush1.bf16.msra.mxu0 0
    %3103 = vmatprep.subr.bf16.mxu0 0
    %3104 = vmatpush1.bf16.msra.mxu0 0
    %3105 = vmatprep.subr.bf16.mxu0 0
    %3106 = vmatpush1.bf16.msra.mxu0 0
    %3107 = vmatprep.subr.bf16.mxu0 0
    %3108 = vmatpush1.bf16.msra.mxu0 0
    %3109 = vmatprep.mubr.bf16.mxu0 0
    %3110 = vmatmul.mubr.bf16.gmra.mrb[0].mxu0 %v3075
    %v3111 = vpop.f32.mrb[0].mxu0
    %v3112 = vadd.f32 %v40, %v3111
    %v3113 = vpop.f32.mrb[0].mxu0
    %v3114 = vpop.f32.mrb[0].mxu0
    %v3115 = vpop.f32.mrb[0].mxu0
    %3116 = vdwg.mxu0
    %v3117 = vmax.f32 %v3112, 0.0
    %v3118 = vpack.c.bf16 %v3117, %v3117
    %3119 = vmatprep.subr.bf16.mxu0 0
    %3120 = vmatpush1.bf16.msra.mxu0 %v248
    %3121 = vmatprep.subr.bf16.mxu0 0
    %3122 = vmatpush1.bf16.msra.mxu0 %v249
    %3123 = vmatprep.subr.bf16.mxu0 0
    %3124 = vmatpush1.bf16.msra.mxu0 %v250
    %3125 = vmatprep.subr.bf16.mxu0 0
    %3126 = vmatpush1.bf16.msra.mxu0 %v251
    %3127 = vmatprep.subr.bf16.mxu0 0
    %3128 = vmatpush1.bf16.msra.mxu0 %v252
    %3129 = vmatprep.subr.bf16.mxu0 0
    %3130 = vmatpush1.bf16.msra.mxu0 %v253
    %3131 = vmatprep.subr.bf16.mxu0 0
    %3132 = vmatpush1.bf16.msra.mxu0 %v254
    %3133 = vmatprep.subr.bf16.mxu0 0
    %3134 = vmatpush1.bf16.msra.mxu0 %v255
    %3135 = vmatprep.subr.bf16.mxu0 0
    %3136 = vmatpush1.bf16.msra.mxu0 0
    %3137 = vmatprep.subr.bf16.mxu0 0
    %3138 = vmatpush1.bf16.msra.mxu0 0
    %3139 = vmatprep.subr.bf16.mxu0 0
    %3140 = vmatpush1.bf16.msra.mxu0 0
    %3141 = vmatprep.subr.bf16.mxu0 0
    %3142 = vmatpush1.bf16.msra.mxu0 0
    %3143 = vmatprep.subr.bf16.mxu0 0
    %3144 = vmatpush1.bf16.msra.mxu0 0
    %3145 = vmatprep.subr.bf16.mxu0 0
    %3146 = vmatpush1.bf16.msra.mxu0 0
    %3147 = vmatprep.subr.bf16.mxu0 0
    %3148 = vmatpush1.bf16.msra.mxu0 0
    %3149 = vmatprep.subr.bf16.mxu0 0
    %3150 = vmatpush1.bf16.msra.mxu0 0
    %3151 = vmatprep.mubr.bf16.mxu0 0
    %3152 = vmatmul.mubr.bf16.gmra.mrb[0].mxu0 %v3118
    %v3153 = vpop.f32.mrb[0].mxu0
    %v3154 = vadd.f32 %v57, %v3153
    %v3155 = vpop.f32.mrb[0].mxu0
    %v3156 = vpop.f32.mrb[0].mxu0
    %v3157 = vpop.f32.mrb[0].mxu0
    %3158 = vdwg.mxu0
    %v3159 = vtanh.pop %v3154
    %v3160 = vmul.f32 %v3159, %v2939
    %v3161 = vpack.c.bf16 %v3160, %v3160
    %3162 = vmatprep.subr.bf16.mxu0 0
    %3163 = vmatpush1.bf16.msra.mxu0 %v339
    %3164 = vmatprep.subr.bf16.mxu0 0
    %3165 = vmatpush1.bf16.msra.mxu0 %v340
    %3166 = vmatprep.subr.bf16.mxu0 0
    %3167 = vmatpush1.bf16.msra.mxu0 %v341
    %3168 = vmatprep.subr.bf16.mxu0 0
    %3169 = vmatpush1.bf16.msra.mxu0 %v342
    %3170 = vmatprep.subr.bf16.mxu0 0
    %3171 = vmatpush1.bf16.msra.mxu0 %v343
    %3172 = vmatprep.subr.bf16.mxu0 0
    %3173 = vmatpush1.bf16.msra.mxu0 %v344
    %3174 = vmatprep.subr.bf16.mxu0 0
    %3175 = vmatpush1.bf16.msra.mxu0 %v345
    %3176 = vmatprep.subr.bf16.mxu0 0
    %3177 = vmatpush1.bf16.msra.mxu0 %v346
    %3178 = vmatprep.subr.bf16.mxu0 0
    %3179 = vmatpush1.bf16.msra.mxu0 0
    %3180 = vmatprep.subr.bf16.mxu0 0
    %3181 = vmatpush1.bf16.msra.mxu0 0
    %3182 = vmatprep.subr.bf16.mxu0 0
    %3183 = vmatpush1.bf16.msra.mxu0 0
    %3184 = vmatprep.subr.bf16.mxu0 0
    %3185 = vmatpush1.bf16.msra.mxu0 0
    %3186 = vmatprep.subr.bf16.mxu0 0
    %3187 = vmatpush1.bf16.msra.mxu0 0
    %3188 = vmatprep.subr.bf16.mxu0 0
    %3189 = vmatpush1.bf16.msra.mxu0 0
    %3190 = vmatprep.subr.bf16.mxu0 0
    %3191 = vmatpush1.bf16.msra.mxu0 0
    %3192 = vmatprep.subr.bf16.mxu0 0
    %3193 = vmatpush1.bf16.msra.mxu0 0
    %3194 = vmatprep.mubr.bf16.mxu0 0
    %3195 = vmatmul.mubr.bf16.gmra.mrb[0].mxu0 %v3161
    %v3196 = vpop.f32.mrb[0].mxu0
    %v3197 = vadd.f32 0.0, %v3196
    %v3198 = vpop.f32.mrb[0].mxu0
    %v3199 = vpop.f32.mrb[0].mxu0
    %v3200 = vpop.f32.mrb[0].mxu0
    %3201 = vdwg.mxu0
    %v3202 = vmul.f32 %v3066, %v526
    %v3203 = vsub.f32 %v3197, %v3202
    %v3204 = vadd.f32 %v2936, %v3203
    %v3205 = vpack.c.bf16 %v3204, %v3204
    %v3207 = vsel %vm170, %v3205, 0
    %3209 = vmatprep.subr.bf16.mxu0 0
    %3210 = vmatpush1.bf16.msra.mxu0 %v166
    %3211 = vmatprep.subr.bf16.mxu0 0
    %3212 = vmatpush1.bf16.msra.mxu0 %v167
    %3213 = vmatprep.subr.bf16.mxu0 0
    %3214 = vmatpush1.bf16.msra.mxu0 0
    %3215 = vmatprep.subr.bf16.mxu0 0
    %3216 = vmatpush1.bf16.msra.mxu0 0
    %3217 = vmatprep.subr.bf16.mxu0 0
    %3218 = vmatpush1.bf16.msra.mxu0 0
    %3219 = vmatprep.subr.bf16.mxu0 0
    %3220 = vmatpush1.bf16.msra.mxu0 0
    %3221 = vmatprep.subr.bf16.mxu0 0
    %3222 = vmatpush1.bf16.msra.mxu0 0
    %3223 = vmatprep.subr.bf16.mxu0 0
    %3224 = vmatpush1.bf16.msra.mxu0 0
    %3225 = vmatprep.subr.bf16.mxu0 0
    %3226 = vmatpush1.bf16.msra.mxu0 0
    %3227 = vmatprep.subr.bf16.mxu0 0
    %3228 = vmatpush1.bf16.msra.mxu0 0
    %3229 = vmatprep.subr.bf16.mxu0 0
    %3230 = vmatpush1.bf16.msra.mxu0 0
    %3231 = vmatprep.subr.bf16.mxu0 0
    %3232 = vmatpush1.bf16.msra.mxu0 0
    %3233 = vmatprep.subr.bf16.mxu0 0
    %3234 = vmatpush1.bf16.msra.mxu0 0
    %3235 = vmatprep.subr.bf16.mxu0 0
    %3236 = vmatpush1.bf16.msra.mxu0 0
    %3237 = vmatprep.subr.bf16.mxu0 0
    %3238 = vmatpush1.bf16.msra.mxu0 0
    %3239 = vmatprep.subr.bf16.mxu0 0
    %3240 = vmatpush1.bf16.msra.mxu0 0
    %3241 = vmatprep.mubr.bf16.mxu0 0
    %3242 = vmatmul.mubr.bf16.gmra.mrb[0].mxu0 %v3207
    %v3243 = vpop.f32.mrb[0].mxu0
    %v3244 = vadd.f32 %v40, %v3243
    %v3245 = vpop.f32.mrb[0].mxu0
    %v3246 = vpop.f32.mrb[0].mxu0
    %v3247 = vpop.f32.mrb[0].mxu0
    %3248 = vdwg.mxu0
    %v3249 = vmax.f32 %v3244, 0.0
    %v3250 = vpack.c.bf16 %v3249, %v3249
    %3251 = vmatprep.subr.bf16.mxu0 0
    %3252 = vmatpush1.bf16.msra.mxu0 %v248
    %3253 = vmatprep.subr.bf16.mxu0 0
    %3254 = vmatpush1.bf16.msra.mxu0 %v249
    %3255 = vmatprep.subr.bf16.mxu0 0
    %3256 = vmatpush1.bf16.msra.mxu0 %v250
    %3257 = vmatprep.subr.bf16.mxu0 0
    %3258 = vmatpush1.bf16.msra.mxu0 %v251
    %3259 = vmatprep.subr.bf16.mxu0 0
    %3260 = vmatpush1.bf16.msra.mxu0 %v252
    %3261 = vmatprep.subr.bf16.mxu0 0
    %3262 = vmatpush1.bf16.msra.mxu0 %v253
    %3263 = vmatprep.subr.bf16.mxu0 0
    %3264 = vmatpush1.bf16.msra.mxu0 %v254
    %3265 = vmatprep.subr.bf16.mxu0 0
    %3266 = vmatpush1.bf16.msra.mxu0 %v255
    %3267 = vmatprep.subr.bf16.mxu0 0
    %3268 = vmatpush1.bf16.msra.mxu0 0
    %3269 = vmatprep.subr.bf16.mxu0 0
    %3270 = vmatpush1.bf16.msra.mxu0 0
    %3271 = vmatprep.subr.bf16.mxu0 0
    %3272 = vmatpush1.bf16.msra.mxu0 0
    %3273 = vmatprep.subr.bf16.mxu0 0
    %3274 = vmatpush1.bf16.msra.mxu0 0
    %3275 = vmatprep.subr.bf16.mxu0 0
    %3276 = vmatpush1.bf16.msra.mxu0 0
    %3277 = vmatprep.subr.bf16.mxu0 0
    %3278 = vmatpush1.bf16.msra.mxu0 0
    %3279 = vmatprep.subr.bf16.mxu0 0
    %3280 = vmatpush1.bf16.msra.mxu0 0
    %3281 = vmatprep.subr.bf16.mxu0 0
    %3282 = vmatpush1.bf16.msra.mxu0 0
    %3283 = vmatprep.mubr.bf16.mxu0 0
    %3284 = vmatmul.mubr.bf16.gmra.mrb[0].mxu0 %v3250
    %v3285 = vpop.f32.mrb[0].mxu0
    %v3286 = vadd.f32 %v57, %v3285
    %v3287 = vpop.f32.mrb[0].mxu0
    %v3288 = vpop.f32.mrb[0].mxu0
    %v3289 = vpop.f32.mrb[0].mxu0
    %3290 = vdwg.mxu0
    %v3291 = vtanh.pop %v3286
    %v3292 = vmul.f32 %v3291, %v2940
    %v3293 = vpack.c.bf16 %v3292, %v3292
    %3294 = vmatprep.subr.bf16.mxu0 0
    %3295 = vmatpush1.bf16.msra.mxu0 %v339
    %3296 = vmatprep.subr.bf16.mxu0 0
    %3297 = vmatpush1.bf16.msra.mxu0 %v340
    %3298 = vmatprep.subr.bf16.mxu0 0
    %3299 = vmatpush1.bf16.msra.mxu0 %v341
    %3300 = vmatprep.subr.bf16.mxu0 0
    %3301 = vmatpush1.bf16.msra.mxu0 %v342
    %3302 = vmatprep.subr.bf16.mxu0 0
    %3303 = vmatpush1.bf16.msra.mxu0 %v343
    %3304 = vmatprep.subr.bf16.mxu0 0
    %3305 = vmatpush1.bf16.msra.mxu0 %v344
    %3306 = vmatprep.subr.bf16.mxu0 0
    %3307 = vmatpush1.bf16.msra.mxu0 %v345
    %3308 = vmatprep.subr.bf16.mxu0 0
    %3309 = vmatpush1.bf16.msra.mxu0 %v346
    %3310 = vmatprep.subr.bf16.mxu0 0
    %3311 = vmatpush1.bf16.msra.mxu0 0
    %3312 = vmatprep.subr.bf16.mxu0 0
    %3313 = vmatpush1.bf16.msra.mxu0 0
    %3314 = vmatprep.subr.bf16.mxu0 0
    %3315 = vmatpush1.bf16.msra.mxu0 0
    %3316 = vmatprep.subr.bf16.mxu0 0
    %3317 = vmatpush1.bf16.msra.mxu0 0
    %3318 = vmatprep.subr.bf16.mxu0 0
    %3319 = vmatpush1.bf16.msra.mxu0 0
    %3320 = vmatprep.subr.bf16.mxu0 0
    %3321 = vmatpush1.bf16.msra.mxu0 0
    %3322 = vmatprep.subr.bf16.mxu0 0
    %3323 = vmatpush1.bf16.msra.mxu0 0
    %3324 = vmatprep.subr.bf16.mxu0 0
    %3325 = vmatpush1.bf16.msra.mxu0 0
    %3326 = vmatprep.mubr.bf16.mxu0 0
    %3327 = vmatmul.mubr.bf16.gmra.mrb[0].mxu0 %v3293
    %v3328 = vpop.f32.mrb[0].mxu0
    %v3329 = vadd.f32 0.0, %v3328
    %v3330 = vpop.f32.mrb[0].mxu0
    %v3331 = vpop.f32.mrb[0].mxu0
    %v3332 = vpop.f32.mrb[0].mxu0
    %3333 = vdwg.mxu0
    %v3334 = vsub.f32 %v3066, %v3197
    %v3335 = vadd.f32 %v3334, %v3329
    %v3336 = vadd.f32 %v2936, %v3335
    %v3337 = vpack.c.bf16 %v3336, %v3336
    %v3339 = vsel %vm170, %v3337, 0
    %3341 = vmatprep.subr.bf16.mxu0 0
    %3342 = vmatpush1.bf16.msra.mxu0 %v166
    %3343 = vmatprep.subr.bf16.mxu0 0
    %3344 = vmatpush1.bf16.msra.mxu0 %v167
    %3345 = vmatprep.subr.bf16.mxu0 0
    %3346 = vmatpush1.bf16.msra.mxu0 0
    %3347 = vmatprep.subr.bf16.mxu0 0
    %3348 = vmatpush1.bf16.msra.mxu0 0
    %3349 = vmatprep.subr.bf16.mxu0 0
    %3350 = vmatpush1.bf16.msra.mxu0 0
    %3351 = vmatprep.subr.bf16.mxu0 0
    %3352 = vmatpush1.bf16.msra.mxu0 0
    %3353 = vmatprep.subr.bf16.mxu0 0
    %3354 = vmatpush1.bf16.msra.mxu0 0
    %3355 = vmatprep.subr.bf16.mxu0 0
    %3356 = vmatpush1.bf16.msra.mxu0 0
    %3357 = vmatprep.subr.bf16.mxu0 0
    %3358 = vmatpush1.bf16.msra.mxu0 0
    %3359 = vmatprep.subr.bf16.mxu0 0
    %3360 = vmatpush1.bf16.msra.mxu0 0
    %3361 = vmatprep.subr.bf16.mxu0 0
    %3362 = vmatpush1.bf16.msra.mxu0 0
    %3363 = vmatprep.subr.bf16.mxu0 0
    %3364 = vmatpush1.bf16.msra.mxu0 0
    %3365 = vmatprep.subr.bf16.mxu0 0
    %3366 = vmatpush1.bf16.msra.mxu0 0
    %3367 = vmatprep.subr.bf16.mxu0 0
    %3368 = vmatpush1.bf16.msra.mxu0 0
    %3369 = vmatprep.subr.bf16.mxu0 0
    %3370 = vmatpush1.bf16.msra.mxu0 0
    %3371 = vmatprep.subr.bf16.mxu0 0
    %3372 = vmatpush1.bf16.msra.mxu0 0
    %3373 = vmatprep.mubr.bf16.mxu0 0
    %3374 = vmatmul.mubr.bf16.gmra.mrb[0].mxu0 %v3339
    %v3375 = vpop.f32.mrb[0].mxu0
    %v3376 = vadd.f32 %v40, %v3375
    %v3377 = vpop.f32.mrb[0].mxu0
    %v3378 = vpop.f32.mrb[0].mxu0
    %v3379 = vpop.f32.mrb[0].mxu0
    %3380 = vdwg.mxu0
    %v3381 = vmax.f32 %v3376, 0.0
    %v3382 = vpack.c.bf16 %v3381, %v3381
    %3383 = vmatprep.subr.bf16.mxu0 0
    %3384 = vmatpush1.bf16.msra.mxu0 %v248
    %3385 = vmatprep.subr.bf16.mxu0 0
    %3386 = vmatpush1.bf16.msra.mxu0 %v249
    %3387 = vmatprep.subr.bf16.mxu0 0
    %3388 = vmatpush1.bf16.msra.mxu0 %v250
    %3389 = vmatprep.subr.bf16.mxu0 0
    %3390 = vmatpush1.bf16.msra.mxu0 %v251
    %3391 = vmatprep.subr.bf16.mxu0 0
    %3392 = vmatpush1.bf16.msra.mxu0 %v252
    %3393 = vmatprep.subr.bf16.mxu0 0
    %3394 = vmatpush1.bf16.msra.mxu0 %v253
    %3395 = vmatprep.subr.bf16.mxu0 0
    %3396 = vmatpush1.bf16.msra.mxu0 %v254
    %3397 = vmatprep.subr.bf16.mxu0 0
    %3398 = vmatpush1.bf16.msra.mxu0 %v255
    %3399 = vmatprep.subr.bf16.mxu0 0
    %3400 = vmatpush1.bf16.msra.mxu0 0
    %3401 = vmatprep.subr.bf16.mxu0 0
    %3402 = vmatpush1.bf16.msra.mxu0 0
    %3403 = vmatprep.subr.bf16.mxu0 0
    %3404 = vmatpush1.bf16.msra.mxu0 0
    %3405 = vmatprep.subr.bf16.mxu0 0
    %3406 = vmatpush1.bf16.msra.mxu0 0
    %3407 = vmatprep.subr.bf16.mxu0 0
    %3408 = vmatpush1.bf16.msra.mxu0 0
    %3409 = vmatprep.subr.bf16.mxu0 0
    %3410 = vmatpush1.bf16.msra.mxu0 0
    %3411 = vmatprep.subr.bf16.mxu0 0
    %3412 = vmatpush1.bf16.msra.mxu0 0
    %3413 = vmatprep.subr.bf16.mxu0 0
    %3414 = vmatpush1.bf16.msra.mxu0 0
    %3415 = vmatprep.mubr.bf16.mxu0 0
    %3416 = vmatmul.mubr.bf16.gmra.mrb[0].mxu0 %v3382
    %v3417 = vpop.f32.mrb[0].mxu0
    %v3418 = vadd.f32 %v57, %v3417
    %v3419 = vpop.f32.mrb[0].mxu0
    %v3420 = vpop.f32.mrb[0].mxu0
    %v3421 = vpop.f32.mrb[0].mxu0
    %3422 = vdwg.mxu0
    %v3423 = vtanh.pop %v3418
    %v3424 = vmul.f32 %v3423, %v2941
    %v3425 = vpack.c.bf16 %v3424, %v3424
    %3426 = vmatprep.subr.bf16.mxu0 0
    %3427 = vmatpush1.bf16.msra.mxu0 %v339
    %3428 = vmatprep.subr.bf16.mxu0 0
    %3429 = vmatpush1.bf16.msra.mxu0 %v340
    %3430 = vmatprep.subr.bf16.mxu0 0
    %3431 = vmatpush1.bf16.msra.mxu0 %v341
    %3432 = vmatprep.subr.bf16.mxu0 0
    %3433 = vmatpush1.bf16.msra.mxu0 %v342
    %3434 = vmatprep.subr.bf16.mxu0 0
    %3435 = vmatpush1.bf16.msra.mxu0 %v343
    %3436 = vmatprep.subr.bf16.mxu0 0
    %3437 = vmatpush1.bf16.msra.mxu0 %v344
    %3438 = vmatprep.subr.bf16.mxu0 0
    %3439 = vmatpush1.bf16.msra.mxu0 %v345
    %3440 = vmatprep.subr.bf16.mxu0 0
    %3441 = vmatpush1.bf16.msra.mxu0 %v346
    %3442 = vmatprep.subr.bf16.mxu0 0
    %3443 = vmatpush1.bf16.msra.mxu0 0
    %3444 = vmatprep.subr.bf16.mxu0 0
    %3445 = vmatpush1.bf16.msra.mxu0 0
    %3446 = vmatprep.subr.bf16.mxu0 0
    %3447 = vmatpush1.bf16.msra.mxu0 0
    %3448 = vmatprep.subr.bf16.mxu0 0
    %3449 = vmatpush1.bf16.msra.mxu0 0
    %3450 = vmatprep.subr.bf16.mxu0 0
    %3451 = vmatpush1.bf16.msra.mxu0 0
    %3452 = vmatprep.subr.bf16.mxu0 0
    %3453 = vmatpush1.bf16.msra.mxu0 0
    %3454 = vmatprep.subr.bf16.mxu0 0
    %3455 = vmatpush1.bf16.msra.mxu0 0
    %3456 = vmatprep.subr.bf16.mxu0 0
    %3457 = vmatpush1.bf16.msra.mxu0 0
    %3458 = vmatprep.mubr.bf16.mxu0 0
    %3459 = vmatmul.mubr.bf16.gmra.mrb[0].mxu0 %v3425
    %v3460 = vpop.f32.mrb[0].mxu0
    %v3461 = vadd.f32 0.0, %v3460
    %v3462 = vpop.f32.mrb[0].mxu0
    %v3463 = vpop.f32.mrb[0].mxu0
    %v3464 = vpop.f32.mrb[0].mxu0
    %3465 = vdwg.mxu0
    %v3466 = vadd.f32 %v3197, %v3329
    %v3467 = vmul.f32 %v3466, 3.0
    %v3468 = vadd.f32 %v3066, %v3467
    %v3469 = vadd.f32 %v3468, %v3461
    %v3470 = vmul.f32 %v3469, 0.125
    %v3471 = vadd.f32 %v2936, %v3470
    %s3472 = scalar_lea.vmem %s1, 192
    %v3473 = vld [vmem:[%s3472] sm:$0xff]
    %v3474 = vld [vmem:[%s3472 + $0x8] sm:$0xff]
    %v3475 = vld [vmem:[%s3472 + $0x10] sm:$0xff]
    %v3476 = vld [vmem:[%s3472 + $0x18] sm:$0xff]
    %v3477 = vpack.c.bf16 %v3471, %v3471
    %v3479 = vsel %vm170, %v3477, 0
    %3481 = vmatprep.subr.bf16.mxu0 0
    %3482 = vmatpush1.bf16.msra.mxu0 %v166
    %3483 = vmatprep.subr.bf16.mxu0 0
    %3484 = vmatpush1.bf16.msra.mxu0 %v167
    %3485 = vmatprep.subr.bf16.mxu0 0
    %3486 = vmatpush1.bf16.msra.mxu0 0
    %3487 = vmatprep.subr.bf16.mxu0 0
    %3488 = vmatpush1.bf16.msra.mxu0 0
    %3489 = vmatprep.subr.bf16.mxu0 0
    %3490 = vmatpush1.bf16.msra.mxu0 0
    %3491 = vmatprep.subr.bf16.mxu0 0
    %3492 = vmatpush1.bf16.msra.mxu0 0
    %3493 = vmatprep.subr.bf16.mxu0 0
    %3494 = vmatpush1.bf16.msra.mxu0 0
    %3495 = vmatprep.subr.bf16.mxu0 0
    %3496 = vmatpush1.bf16.msra.mxu0 0
    %3497 = vmatprep.subr.bf16.mxu0 0
    %3498 = vmatpush1.bf16.msra.mxu0 0
    %3499 = vmatprep.subr.bf16.mxu0 0
    %3500 = vmatpush1.bf16.msra.mxu0 0
    %3501 = vmatprep.subr.bf16.mxu0 0
    %3502 = vmatpush1.bf16.msra.mxu0 0
    %3503 = vmatprep.subr.bf16.mxu0 0
    %3504 = vmatpush1.bf16.msra.mxu0 0
    %3505 = vmatprep.subr.bf16.mxu0 0
    %3506 = vmatpush1.bf16.msra.mxu0 0
    %3507 = vmatprep.subr.bf16.mxu0 0
    %3508 = vmatpush1.bf16.msra.mxu0 0
    %3509 = vmatprep.subr.bf16.mxu0 0
    %3510 = vmatpush1.bf16.msra.mxu0 0
    %3511 = vmatprep.subr.bf16.mxu0 0
    %3512 = vmatpush1.bf16.msra.mxu0 0
    %3513 = vmatprep.mubr.bf16.mxu0 0
    %3514 = vmatmul.mubr.bf16.gmra.mrb[0].mxu0 %v3479
    %v3515 = vpop.f32.mrb[0].mxu0
    %v3516 = vadd.f32 %v40, %v3515
    %v3517 = vpop.f32.mrb[0].mxu0
    %v3518 = vpop.f32.mrb[0].mxu0
    %v3519 = vpop.f32.mrb[0].mxu0
    %3520 = vdwg.mxu0
    %v3521 = vmax.f32 %v3516, 0.0
    %v3522 = vpack.c.bf16 %v3521, %v3521
    %3523 = vmatprep.subr.bf16.mxu0 0
    %3524 = vmatpush1.bf16.msra.mxu0 %v248
    %3525 = vmatprep.subr.bf16.mxu0 0
    %3526 = vmatpush1.bf16.msra.mxu0 %v249
    %3527 = vmatprep.subr.bf16.mxu0 0
    %3528 = vmatpush1.bf16.msra.mxu0 %v250
    %3529 = vmatprep.subr.bf16.mxu0 0
    %3530 = vmatpush1.bf16.msra.mxu0 %v251
    %3531 = vmatprep.subr.bf16.mxu0 0
    %3532 = vmatpush1.bf16.msra.mxu0 %v252
    %3533 = vmatprep.subr.bf16.mxu0 0
    %3534 = vmatpush1.bf16.msra.mxu0 %v253
    %3535 = vmatprep.subr.bf16.mxu0 0
    %3536 = vmatpush1.bf16.msra.mxu0 %v254
    %3537 = vmatprep.subr.bf16.mxu0 0
    %3538 = vmatpush1.bf16.msra.mxu0 %v255
    %3539 = vmatprep.subr.bf16.mxu0 0
    %3540 = vmatpush1.bf16.msra.mxu0 0
    %3541 = vmatprep.subr.bf16.mxu0 0
    %3542 = vmatpush1.bf16.msra.mxu0 0
    %3543 = vmatprep.subr.bf16.mxu0 0
    %3544 = vmatpush1.bf16.msra.mxu0 0
    %3545 = vmatprep.subr.bf16.mxu0 0
    %3546 = vmatpush1.bf16.msra.mxu0 0
    %3547 = vmatprep.subr.bf16.mxu0 0
    %3548 = vmatpush1.bf16.msra.mxu0 0
    %3549 = vmatprep.subr.bf16.mxu0 0
    %3550 = vmatpush1.bf16.msra.mxu0 0
    %3551 = vmatprep.subr.bf16.mxu0 0
    %3552 = vmatpush1.bf16.msra.mxu0 0
    %3553 = vmatprep.subr.bf16.mxu0 0
    %3554 = vmatpush1.bf16.msra.mxu0 0
    %3555 = vmatprep.mubr.bf16.mxu0 0
    %3556 = vmatmul.mubr.bf16.gmra.mrb[0].mxu0 %v3522
    %v3557 = vpop.f32.mrb[0].mxu0
    %v3558 = vadd.f32 %v57, %v3557
    %v3559 = vpop.f32.mrb[0].mxu0
    %v3560 = vpop.f32.mrb[0].mxu0
    %v3561 = vpop.f32.mrb[0].mxu0
    %3562 = vdwg.mxu0
    %v3563 = vtanh.pop %v3558
    %v3564 = vmul.f32 %v3563, %v3473
    %v3565 = vpack.c.bf16 %v3564, %v3564
    %3566 = vmatprep.subr.bf16.mxu0 0
    %3567 = vmatpush1.bf16.msra.mxu0 %v339
    %3568 = vmatprep.subr.bf16.mxu0 0
    %3569 = vmatpush1.bf16.msra.mxu0 %v340
    %3570 = vmatprep.subr.bf16.mxu0 0
    %3571 = vmatpush1.bf16.msra.mxu0 %v341
    %3572 = vmatprep.subr.bf16.mxu0 0
    %3573 = vmatpush1.bf16.msra.mxu0 %v342
    %3574 = vmatprep.subr.bf16.mxu0 0
    %3575 = vmatpush1.bf16.msra.mxu0 %v343
    %3576 = vmatprep.subr.bf16.mxu0 0
    %3577 = vmatpush1.bf16.msra.mxu0 %v344
    %3578 = vmatprep.subr.bf16.mxu0 0
    %3579 = vmatpush1.bf16.msra.mxu0 %v345
    %3580 = vmatprep.subr.bf16.mxu0 0
    %3581 = vmatpush1.bf16.msra.mxu0 %v346
    %3582 = vmatprep.subr.bf16.mxu0 0
    %3583 = vmatpush1.bf16.msra.mxu0 0
    %3584 = vmatprep.subr.bf16.mxu0 0
    %3585 = vmatpush1.bf16.msra.mxu0 0
    %3586 = vmatprep.subr.bf16.mxu0 0
    %3587 = vmatpush1.bf16.msra.mxu0 0
    %3588 = vmatprep.subr.bf16.mxu0 0
    %3589 = vmatpush1.bf16.msra.mxu0 0
    %3590 = vmatprep.subr.bf16.mxu0 0
    %3591 = vmatpush1.bf16.msra.mxu0 0
    %3592 = vmatprep.subr.bf16.mxu0 0
    %3593 = vmatpush1.bf16.msra.mxu0 0
    %3594 = vmatprep.subr.bf16.mxu0 0
    %3595 = vmatpush1.bf16.msra.mxu0 0
    %3596 = vmatprep.subr.bf16.mxu0 0
    %3597 = vmatpush1.bf16.msra.mxu0 0
    %3598 = vmatprep.mubr.bf16.mxu0 0
    %3599 = vmatmul.mubr.bf16.gmra.mrb[0].mxu0 %v3565
    %v3600 = vpop.f32.mrb[0].mxu0
    %v3601 = vadd.f32 0.0, %v3600
    %v3602 = vpop.f32.mrb[0].mxu0
    %v3603 = vpop.f32.mrb[0].mxu0
    %v3604 = vpop.f32.mrb[0].mxu0
    %3605 = vdwg.mxu0
    %v3606 = vmul.f32 %v3601, 0.33333334
    %v3607 = vadd.f32 %v3471, %v3606
    %v3608 = vpack.c.bf16 %v3607, %v3607
    %v3610 = vsel %vm170, %v3608, 0
    %3612 = vmatprep.subr.bf16.mxu0 0
    %3613 = vmatpush1.bf16.msra.mxu0 %v166
    %3614 = vmatprep.subr.bf16.mxu0 0
    %3615 = vmatpush1.bf16.msra.mxu0 %v167
    %3616 = vmatprep.subr.bf16.mxu0 0
    %3617 = vmatpush1.bf16.msra.mxu0 0
    %3618 = vmatprep.subr.bf16.mxu0 0
    %3619 = vmatpush1.bf16.msra.mxu0 0
    %3620 = vmatprep.subr.bf16.mxu0 0
    %3621 = vmatpush1.bf16.msra.mxu0 0
    %3622 = vmatprep.subr.bf16.mxu0 0
    %3623 = vmatpush1.bf16.msra.mxu0 0
    %3624 = vmatprep.subr.bf16.mxu0 0
    %3625 = vmatpush1.bf16.msra.mxu0 0
    %3626 = vmatprep.subr.bf16.mxu0 0
    %3627 = vmatpush1.bf16.msra.mxu0 0
    %3628 = vmatprep.subr.bf16.mxu0 0
    %3629 = vmatpush1.bf16.msra.mxu0 0
    %3630 = vmatprep.subr.bf16.mxu0 0
    %3631 = vmatpush1.bf16.msra.mxu0 0
    %3632 = vmatprep.subr.bf16.mxu0 0
    %3633 = vmatpush1.bf16.msra.mxu0 0
    %3634 = vmatprep.subr.bf16.mxu0 0
    %3635 = vmatpush1.bf16.msra.mxu0 0
    %3636 = vmatprep.subr.bf16.mxu0 0
    %3637 = vmatpush1.bf16.msra.mxu0 0
    %3638 = vmatprep.subr.bf16.mxu0 0
    %3639 = vmatpush1.bf16.msra.mxu0 0
    %3640 = vmatprep.subr.bf16.mxu0 0
    %3641 = vmatpush1.bf16.msra.mxu0 0
    %3642 = vmatprep.subr.bf16.mxu0 0
    %3643 = vmatpush1.bf16.msra.mxu0 0
    %3644 = vmatprep.mubr.bf16.mxu0 0
    %3645 = vmatmul.mubr.bf16.gmra.mrb[0].mxu0 %v3610
    %v3646 = vpop.f32.mrb[0].mxu0
    %v3647 = vadd.f32 %v40, %v3646
    %v3648 = vpop.f32.mrb[0].mxu0
    %v3649 = vpop.f32.mrb[0].mxu0
    %v3650 = vpop.f32.mrb[0].mxu0
    %3651 = vdwg.mxu0
    %v3652 = vmax.f32 %v3647, 0.0
    %v3653 = vpack.c.bf16 %v3652, %v3652
    %3654 = vmatprep.subr.bf16.mxu0 0
    %3655 = vmatpush1.bf16.msra.mxu0 %v248
    %3656 = vmatprep.subr.bf16.mxu0 0
    %3657 = vmatpush1.bf16.msra.mxu0 %v249
    %3658 = vmatprep.subr.bf16.mxu0 0
    %3659 = vmatpush1.bf16.msra.mxu0 %v250
    %3660 = vmatprep.subr.bf16.mxu0 0
    %3661 = vmatpush1.bf16.msra.mxu0 %v251
    %3662 = vmatprep.subr.bf16.mxu0 0
    %3663 = vmatpush1.bf16.msra.mxu0 %v252
    %3664 = vmatprep.subr.bf16.mxu0 0
    %3665 = vmatpush1.bf16.msra.mxu0 %v253
    %3666 = vmatprep.subr.bf16.mxu0 0
    %3667 = vmatpush1.bf16.msra.mxu0 %v254
    %3668 = vmatprep.subr.bf16.mxu0 0
    %3669 = vmatpush1.bf16.msra.mxu0 %v255
    %3670 = vmatprep.subr.bf16.mxu0 0
    %3671 = vmatpush1.bf16.msra.mxu0 0
    %3672 = vmatprep.subr.bf16.mxu0 0
    %3673 = vmatpush1.bf16.msra.mxu0 0
    %3674 = vmatprep.subr.bf16.mxu0 0
    %3675 = vmatpush1.bf16.msra.mxu0 0
    %3676 = vmatprep.subr.bf16.mxu0 0
    %3677 = vmatpush1.bf16.msra.mxu0 0
    %3678 = vmatprep.subr.bf16.mxu0 0
    %3679 = vmatpush1.bf16.msra.mxu0 0
    %3680 = vmatprep.subr.bf16.mxu0 0
    %3681 = vmatpush1.bf16.msra.mxu0 0
    %3682 = vmatprep.subr.bf16.mxu0 0
    %3683 = vmatpush1.bf16.msra.mxu0 0
    %3684 = vmatprep.subr.bf16.mxu0 0
    %3685 = vmatpush1.bf16.msra.mxu0 0
    %3686 = vmatprep.mubr.bf16.mxu0 0
    %3687 = vmatmul.mubr.bf16.gmra.mrb[0].mxu0 %v3653
    %v3688 = vpop.f32.mrb[0].mxu0
    %v3689 = vadd.f32 %v57, %v3688
    %v3690 = vpop.f32.mrb[0].mxu0
    %v3691 = vpop.f32.mrb[0].mxu0
    %v3692 = vpop.f32.mrb[0].mxu0
    %3693 = vdwg.mxu0
    %v3694 = vtanh.pop %v3689
    %v3695 = vmul.f32 %v3694, %v3474
    %v3696 = vpack.c.bf16 %v3695, %v3695
    %3697 = vmatprep.subr.bf16.mxu0 0
    %3698 = vmatpush1.bf16.msra.mxu0 %v339
    %3699 = vmatprep.subr.bf16.mxu0 0
    %3700 = vmatpush1.bf16.msra.mxu0 %v340
    %3701 = vmatprep.subr.bf16.mxu0 0
    %3702 = vmatpush1.bf16.msra.mxu0 %v341
    %3703 = vmatprep.subr.bf16.mxu0 0
    %3704 = vmatpush1.bf16.msra.mxu0 %v342
    %3705 = vmatprep.subr.bf16.mxu0 0
    %3706 = vmatpush1.bf16.msra.mxu0 %v343
    %3707 = vmatprep.subr.bf16.mxu0 0
    %3708 = vmatpush1.bf16.msra.mxu0 %v344
    %3709 = vmatprep.subr.bf16.mxu0 0
    %3710 = vmatpush1.bf16.msra.mxu0 %v345
    %3711 = vmatprep.subr.bf16.mxu0 0
    %3712 = vmatpush1.bf16.msra.mxu0 %v346
    %3713 = vmatprep.subr.bf16.mxu0 0
    %3714 = vmatpush1.bf16.msra.mxu0 0
    %3715 = vmatprep.subr.bf16.mxu0 0
    %3716 = vmatpush1.bf16.msra.mxu0 0
    %3717 = vmatprep.subr.bf16.mxu0 0
    %3718 = vmatpush1.bf16.msra.mxu0 0
    %3719 = vmatprep.subr.bf16.mxu0 0
    %3720 = vmatpush1.bf16.msra.mxu0 0
    %3721 = vmatprep.subr.bf16.mxu0 0
    %3722 = vmatpush1.bf16.msra.mxu0 0
    %3723 = vmatprep.subr.bf16.mxu0 0
    %3724 = vmatpush1.bf16.msra.mxu0 0
    %3725 = vmatprep.subr.bf16.mxu0 0
    %3726 = vmatpush1.bf16.msra.mxu0 0
    %3727 = vmatprep.subr.bf16.mxu0 0
    %3728 = vmatpush1.bf16.msra.mxu0 0
    %3729 = vmatprep.mubr.bf16.mxu0 0
    %3730 = vmatmul.mubr.bf16.gmra.mrb[0].mxu0 %v3696
    %v3731 = vpop.f32.mrb[0].mxu0
    %v3732 = vadd.f32 0.0, %v3731
    %v3733 = vpop.f32.mrb[0].mxu0
    %v3734 = vpop.f32.mrb[0].mxu0
    %v3735 = vpop.f32.mrb[0].mxu0
    %3736 = vdwg.mxu0
    %v3737 = vmul.f32 %v3601, %v526
    %v3738 = vsub.f32 %v3732, %v3737
    %v3739 = vadd.f32 %v3471, %v3738
    %v3740 = vpack.c.bf16 %v3739, %v3739
    %v3742 = vsel %vm170, %v3740, 0
    %3744 = vmatprep.subr.bf16.mxu0 0
    %3745 = vmatpush1.bf16.msra.mxu0 %v166
    %3746 = vmatprep.subr.bf16.mxu0 0
    %3747 = vmatpush1.bf16.msra.mxu0 %v167
    %3748 = vmatprep.subr.bf16.mxu0 0
    %3749 = vmatpush1.bf16.msra.mxu0 0
    %3750 = vmatprep.subr.bf16.mxu0 0
    %3751 = vmatpush1.bf16.msra.mxu0 0
    %3752 = vmatprep.subr.bf16.mxu0 0
    %3753 = vmatpush1.bf16.msra.mxu0 0
    %3754 = vmatprep.subr.bf16.mxu0 0
    %3755 = vmatpush1.bf16.msra.mxu0 0
    %3756 = vmatprep.subr.bf16.mxu0 0
    %3757 = vmatpush1.bf16.msra.mxu0 0
    %3758 = vmatprep.subr.bf16.mxu0 0
    %3759 = vmatpush1.bf16.msra.mxu0 0
    %3760 = vmatprep.subr.bf16.mxu0 0
    %3761 = vmatpush1.bf16.msra.mxu0 0
    %3762 = vmatprep.subr.bf16.mxu0 0
    %3763 = vmatpush1.bf16.msra.mxu0 0
    %3764 = vmatprep.subr.bf16.mxu0 0
    %3765 = vmatpush1.bf16.msra.mxu0 0
    %3766 = vmatprep.subr.bf16.mxu0 0
    %3767 = vmatpush1.bf16.msra.mxu0 0
    %3768 = vmatprep.subr.bf16.mxu0 0
    %3769 = vmatpush1.bf16.msra.mxu0 0
    %3770 = vmatprep.subr.bf16.mxu0 0
    %3771 = vmatpush1.bf16.msra.mxu0 0
    %3772 = vmatprep.subr.bf16.mxu0 0
    %3773 = vmatpush1.bf16.msra.mxu0 0
    %3774 = vmatprep.subr.bf16.mxu0 0
    %3775 = vmatpush1.bf16.msra.mxu0 0
    %3776 = vmatprep.mubr.bf16.mxu0 0
    %3777 = vmatmul.mubr.bf16.gmra.mrb[0].mxu0 %v3742
    %v3778 = vpop.f32.mrb[0].mxu0
    %v3779 = vadd.f32 %v40, %v3778
    %v3780 = vpop.f32.mrb[0].mxu0
    %v3781 = vpop.f32.mrb[0].mxu0
    %v3782 = vpop.f32.mrb[0].mxu0
    %3783 = vdwg.mxu0
    %v3784 = vmax.f32 %v3779, 0.0
    %v3785 = vpack.c.bf16 %v3784, %v3784
    %3786 = vmatprep.subr.bf16.mxu0 0
    %3787 = vmatpush1.bf16.msra.mxu0 %v248
    %3788 = vmatprep.subr.bf16.mxu0 0
    %3789 = vmatpush1.bf16.msra.mxu0 %v249
    %3790 = vmatprep.subr.bf16.mxu0 0
    %3791 = vmatpush1.bf16.msra.mxu0 %v250
    %3792 = vmatprep.subr.bf16.mxu0 0
    %3793 = vmatpush1.bf16.msra.mxu0 %v251
    %3794 = vmatprep.subr.bf16.mxu0 0
    %3795 = vmatpush1.bf16.msra.mxu0 %v252
    %3796 = vmatprep.subr.bf16.mxu0 0
    %3797 = vmatpush1.bf16.msra.mxu0 %v253
    %3798 = vmatprep.subr.bf16.mxu0 0
    %3799 = vmatpush1.bf16.msra.mxu0 %v254
    %3800 = vmatprep.subr.bf16.mxu0 0
    %3801 = vmatpush1.bf16.msra.mxu0 %v255
    %3802 = vmatprep.subr.bf16.mxu0 0
    %3803 = vmatpush1.bf16.msra.mxu0 0
    %3804 = vmatprep.subr.bf16.mxu0 0
    %3805 = vmatpush1.bf16.msra.mxu0 0
    %3806 = vmatprep.subr.bf16.mxu0 0
    %3807 = vmatpush1.bf16.msra.mxu0 0
    %3808 = vmatprep.subr.bf16.mxu0 0
    %3809 = vmatpush1.bf16.msra.mxu0 0
    %3810 = vmatprep.subr.bf16.mxu0 0
    %3811 = vmatpush1.bf16.msra.mxu0 0
    %3812 = vmatprep.subr.bf16.mxu0 0
    %3813 = vmatpush1.bf16.msra.mxu0 0
    %3814 = vmatprep.subr.bf16.mxu0 0
    %3815 = vmatpush1.bf16.msra.mxu0 0
    %3816 = vmatprep.subr.bf16.mxu0 0
    %3817 = vmatpush1.bf16.msra.mxu0 0
    %3818 = vmatprep.mubr.bf16.mxu0 0
    %3819 = vmatmul.mubr.bf16.gmra.mrb[0].mxu0 %v3785
    %v3820 = vpop.f32.mrb[0].mxu0
    %v3821 = vadd.f32 %v57, %v3820
    %v3822 = vpop.f32.mrb[0].mxu0
    %v3823 = vpop.f32.mrb[0].mxu0
    %v3824 = vpop.f32.mrb[0].mxu0
    %3825 = vdwg.mxu0
    %v3826 = vtanh.pop %v3821
    %v3827 = vmul.f32 %v3826, %v3475
    %v3828 = vpack.c.bf16 %v3827, %v3827
    %3829 = vmatprep.subr.bf16.mxu0 0
    %3830 = vmatpush1.bf16.msra.mxu0 %v339
    %3831 = vmatprep.subr.bf16.mxu0 0
    %3832 = vmatpush1.bf16.msra.mxu0 %v340
    %3833 = vmatprep.subr.bf16.mxu0 0
    %3834 = vmatpush1.bf16.msra.mxu0 %v341
    %3835 = vmatprep.subr.bf16.mxu0 0
    %3836 = vmatpush1.bf16.msra.mxu0 %v342
    %3837 = vmatprep.subr.bf16.mxu0 0
    %3838 = vmatpush1.bf16.msra.mxu0 %v343
    %3839 = vmatprep.subr.bf16.mxu0 0
    %3840 = vmatpush1.bf16.msra.mxu0 %v344
    %3841 = vmatprep.subr.bf16.mxu0 0
    %3842 = vmatpush1.bf16.msra.mxu0 %v345
    %3843 = vmatprep.subr.bf16.mxu0 0
    %3844 = vmatpush1.bf16.msra.mxu0 %v346
    %3845 = vmatprep.subr.bf16.mxu0 0
    %3846 = vmatpush1.bf16.msra.mxu0 0
    %3847 = vmatprep.subr.bf16.mxu0 0
    %3848 = vmatpush1.bf16.msra.mxu0 0
    %3849 = vmatprep.subr.bf16.mxu0 0
    %3850 = vmatpush1.bf16.msra.mxu0 0
    %3851 = vmatprep.subr.bf16.mxu0 0
    %3852 = vmatpush1.bf16.msra.mxu0 0
    %3853 = vmatprep.subr.bf16.mxu0 0
    %3854 = vmatpush1.bf16.msra.mxu0 0
    %3855 = vmatprep.subr.bf16.mxu0 0
    %3856 = vmatpush1.bf16.msra.mxu0 0
    %3857 = vmatprep.subr.bf16.mxu0 0
    %3858 = vmatpush1.bf16.msra.mxu0 0
    %3859 = vmatprep.subr.bf16.mxu0 0
    %3860 = vmatpush1.bf16.msra.mxu0 0
    %3861 = vmatprep.mubr.bf16.mxu0 0
    %3862 = vmatmul.mubr.bf16.gmra.mrb[0].mxu0 %v3828
    %v3863 = vpop.f32.mrb[0].mxu0
    %v3864 = vadd.f32 0.0, %v3863
    %v3865 = vpop.f32.mrb[0].mxu0
    %v3866 = vpop.f32.mrb[0].mxu0
    %v3867 = vpop.f32.mrb[0].mxu0
    %3868 = vdwg.mxu0
    %v3869 = vsub.f32 %v3601, %v3732
    %v3870 = vadd.f32 %v3869, %v3864
    %v3871 = vadd.f32 %v3471, %v3870
    %v3872 = vpack.c.bf16 %v3871, %v3871
    %v3874 = vsel %vm170, %v3872, 0
    %3876 = vmatprep.subr.bf16.mxu0 0
    %3877 = vmatpush1.bf16.msra.mxu0 %v166
    %3878 = vmatprep.subr.bf16.mxu0 0
    %3879 = vmatpush1.bf16.msra.mxu0 %v167
    %3880 = vmatprep.subr.bf16.mxu0 0
    %3881 = vmatpush1.bf16.msra.mxu0 0
    %3882 = vmatprep.subr.bf16.mxu0 0
    %3883 = vmatpush1.bf16.msra.mxu0 0
    %3884 = vmatprep.subr.bf16.mxu0 0
    %3885 = vmatpush1.bf16.msra.mxu0 0
    %3886 = vmatprep.subr.bf16.mxu0 0
    %3887 = vmatpush1.bf16.msra.mxu0 0
    %3888 = vmatprep.subr.bf16.mxu0 0
    %3889 = vmatpush1.bf16.msra.mxu0 0
    %3890 = vmatprep.subr.bf16.mxu0 0
    %3891 = vmatpush1.bf16.msra.mxu0 0
    %3892 = vmatprep.subr.bf16.mxu0 0
    %3893 = vmatpush1.bf16.msra.mxu0 0
    %3894 = vmatprep.subr.bf16.mxu0 0
    %3895 = vmatpush1.bf16.msra.mxu0 0
    %3896 = vmatprep.subr.bf16.mxu0 0
    %3897 = vmatpush1.bf16.msra.mxu0 0
    %3898 = vmatprep.subr.bf16.mxu0 0
    %3899 = vmatpush1.bf16.msra.mxu0 0
    %3900 = vmatprep.subr.bf16.mxu0 0
    %3901 = vmatpush1.bf16.msra.mxu0 0
    %3902 = vmatprep.subr.bf16.mxu0 0
    %3903 = vmatpush1.bf16.msra.mxu0 0
    %3904 = vmatprep.subr.bf16.mxu0 0
    %3905 = vmatpush1.bf16.msra.mxu0 0
    %3906 = vmatprep.subr.bf16.mxu0 0
    %3907 = vmatpush1.bf16.msra.mxu0 0
    %3908 = vmatprep.mubr.bf16.mxu0 0
    %3909 = vmatmul.mubr.bf16.gmra.mrb[0].mxu0 %v3874
    %v3910 = vpop.f32.mrb[0].mxu0
    %v3911 = vadd.f32 %v40, %v3910
    %v3912 = vpop.f32.mrb[0].mxu0
    %v3913 = vpop.f32.mrb[0].mxu0
    %v3914 = vpop.f32.mrb[0].mxu0
    %3915 = vdwg.mxu0
    %v3916 = vmax.f32 %v3911, 0.0
    %v3917 = vpack.c.bf16 %v3916, %v3916
    %3918 = vmatprep.subr.bf16.mxu0 0
    %3919 = vmatpush1.bf16.msra.mxu0 %v248
    %3920 = vmatprep.subr.bf16.mxu0 0
    %3921 = vmatpush1.bf16.msra.mxu0 %v249
    %3922 = vmatprep.subr.bf16.mxu0 0
    %3923 = vmatpush1.bf16.msra.mxu0 %v250
    %3924 = vmatprep.subr.bf16.mxu0 0
    %3925 = vmatpush1.bf16.msra.mxu0 %v251
    %3926 = vmatprep.subr.bf16.mxu0 0
    %3927 = vmatpush1.bf16.msra.mxu0 %v252
    %3928 = vmatprep.subr.bf16.mxu0 0
    %3929 = vmatpush1.bf16.msra.mxu0 %v253
    %3930 = vmatprep.subr.bf16.mxu0 0
    %3931 = vmatpush1.bf16.msra.mxu0 %v254
    %3932 = vmatprep.subr.bf16.mxu0 0
    %3933 = vmatpush1.bf16.msra.mxu0 %v255
    %3934 = vmatprep.subr.bf16.mxu0 0
    %3935 = vmatpush1.bf16.msra.mxu0 0
    %3936 = vmatprep.subr.bf16.mxu0 0
    %3937 = vmatpush1.bf16.msra.mxu0 0
    %3938 = vmatprep.subr.bf16.mxu0 0
    %3939 = vmatpush1.bf16.msra.mxu0 0
    %3940 = vmatprep.subr.bf16.mxu0 0
    %3941 = vmatpush1.bf16.msra.mxu0 0
    %3942 = vmatprep.subr.bf16.mxu0 0
    %3943 = vmatpush1.bf16.msra.mxu0 0
    %3944 = vmatprep.subr.bf16.mxu0 0
    %3945 = vmatpush1.bf16.msra.mxu0 0
    %3946 = vmatprep.subr.bf16.mxu0 0
    %3947 = vmatpush1.bf16.msra.mxu0 0
    %3948 = vmatprep.subr.bf16.mxu0 0
    %3949 = vmatpush1.bf16.msra.mxu0 0
    %3950 = vmatprep.mubr.bf16.mxu0 0
    %3951 = vmatmul.mubr.bf16.gmra.mrb[0].mxu0 %v3917
    %v3952 = vpop.f32.mrb[0].mxu0
    %v3953 = vadd.f32 %v57, %v3952
    %v3954 = vpop.f32.mrb[0].mxu0
    %v3955 = vpop.f32.mrb[0].mxu0
    %v3956 = vpop.f32.mrb[0].mxu0
    %3957 = vdwg.mxu0
    %v3958 = vtanh.pop %v3953
    %v3959 = vmul.f32 %v3958, %v3476
    %v3960 = vpack.c.bf16 %v3959, %v3959
    %3961 = vmatprep.subr.bf16.mxu0 0
    %3962 = vmatpush1.bf16.msra.mxu0 %v339
    %3963 = vmatprep.subr.bf16.mxu0 0
    %3964 = vmatpush1.bf16.msra.mxu0 %v340
    %3965 = vmatprep.subr.bf16.mxu0 0
    %3966 = vmatpush1.bf16.msra.mxu0 %v341
    %3967 = vmatprep.subr.bf16.mxu0 0
    %3968 = vmatpush1.bf16.msra.mxu0 %v342
    %3969 = vmatprep.subr.bf16.mxu0 0
    %3970 = vmatpush1.bf16.msra.mxu0 %v343
    %3971 = vmatprep.subr.bf16.mxu0 0
    %3972 = vmatpush1.bf16.msra.mxu0 %v344
    %3973 = vmatprep.subr.bf16.mxu0 0
    %3974 = vmatpush1.bf16.msra.mxu0 %v345
    %3975 = vmatprep.subr.bf16.mxu0 0
    %3976 = vmatpush1.bf16.msra.mxu0 %v346
    %3977 = vmatprep.subr.bf16.mxu0 0
    %3978 = vmatpush1.bf16.msra.mxu0 0
    %3979 = vmatprep.subr.bf16.mxu0 0
    %3980 = vmatpush1.bf16.msra.mxu0 0
    %3981 = vmatprep.subr.bf16.mxu0 0
    %3982 = vmatpush1.bf16.msra.mxu0 0
    %3983 = vmatprep.subr.bf16.mxu0 0
    %3984 = vmatpush1.bf16.msra.mxu0 0
    %3985 = vmatprep.subr.bf16.mxu0 0
    %3986 = vmatpush1.bf16.msra.mxu0 0
    %3987 = vmatprep.subr.bf16.mxu0 0
    %3988 = vmatpush1.bf16.msra.mxu0 0
    %3989 = vmatprep.subr.bf16.mxu0 0
    %3990 = vmatpush1.bf16.msra.mxu0 0
    %3991 = vmatprep.subr.bf16.mxu0 0
    %3992 = vmatpush1.bf16.msra.mxu0 0
    %3993 = vmatprep.mubr.bf16.mxu0 0
    %3994 = vmatmul.mubr.bf16.gmra.mrb[0].mxu0 %v3960
    %v3995 = vpop.f32.mrb[0].mxu0
    %v3996 = vadd.f32 0.0, %v3995
    %v3997 = vpop.f32.mrb[0].mxu0
    %v3998 = vpop.f32.mrb[0].mxu0
    %v3999 = vpop.f32.mrb[0].mxu0
    %4000 = vdwg.mxu0
    %v4001 = vadd.f32 %v3732, %v3864
    %v4002 = vmul.f32 %v4001, 3.0
    %v4003 = vadd.f32 %v3601, %v4002
    %v4004 = vadd.f32 %v4003, %v3996
    %v4005 = vmul.f32 %v4004, 0.125
    %v4006 = vadd.f32 %v3471, %v4005
    %4007 = vst.msk [vmem:[#allocation2] sm:$0xff] %vm170, %v4006
    // Predicated region
    $region38: #{neural_cde_forward.1} parent=1 // pred_check
      _
    $region39: #{neural_cde_forward.1} parent=1 // pred_check_branch
      %4009 = sbr.rel (0) target = $region41
    $region40: #{neural_cde_forward.1} parent=1 // pred_region
      %s4011 = ssub.s32 128, 128
      %4012 = vsyncadd [#allocation3], %s4011
      %s4014 = sshll.u32 [#allocation2], 4
      %s4015 = int_to_ptr.vmem [resolvable:$true] %s4014
      %4017 = dma.vmem_to_hbm [thread:$0]  %s4015, 128, %s9, [#allocation3]
    $region41: #{neural_cde_forward.1} parent=1 // pred_fallthru
      _
    // Predicated region
    $region42: #{neural_cde_forward.1} parent=1 // pred_check
      _
    $region43: #{neural_cde_forward.1} parent=1 // pred_check_branch
      %4019 = sbr.rel (0) target = $region45
    $region44: #{neural_cde_forward.1} parent=1 // pred_region
      %4020 = dma.done [#allocation3], 128
    $region45: #{neural_cde_forward.1} parent=1 // pred_fallthru
      _
    %4021 = vsyncpa [#allocation3], 1

</llo_original>
